<compile_context>
chip_gen: v7x
topology: tpu7x:2x2x1
jax: 0.10.0
libtpu: 0.0.40
codegen_flags: <defaults>
</compile_context>

<pallas_src>
import math
from functools import partial

import jax
import jax.numpy as jnp
from jax.experimental import pallas as pl
from jax.experimental.pallas import tpu as pltpu

DTYPE = jnp.bfloat16

CFG = dict(
    B=2, C=3, IMG=32, PATCH=8,     # 16 patches + CLS -> 17 tokens
    D=128, H=4,                    # hidden / heads (head dim 32)
    FF=512,                        # MLP hidden
    DEPTH=2,                       # transformer blocks
    HEAD_HID=256, HEAD_BOT=128, HEAD_OUT=256,   # DINO projection head
)


# ------------------------------ kernel helpers ------------------------------

def _ln_f32(x_f32, g_ref, b_ref, eps=1e-6):
    mean = jnp.mean(x_f32, axis=-1, keepdims=True)
    var = jnp.mean(jnp.square(x_f32 - mean), axis=-1, keepdims=True)
    y = (x_f32 - mean) * jax.lax.rsqrt(var + eps)
    return y * g_ref[...].astype(jnp.float32) + b_ref[...].astype(jnp.float32)


# ----------------------------- Pallas kernels -------------------------------

def _patch_embed_kernel(x_ref, w_ref, b_ref, o_ref):
    # bf16 x / w straight into the MXU, f32 accumulate.
    y = jnp.dot(x_ref[...], w_ref[...], preferred_element_type=jnp.float32)
    y = y + b_ref[...].astype(jnp.float32)
    o_ref[...] = y.astype(o_ref.dtype)


def _vit_block_kernel(x_ref, ln1_g, ln1_b, wqkv_ref, bqkv_ref, wo_ref, bo_ref,
                      ln2_g, ln2_b, w1_ref, b1_ref, w2_ref, b2_ref, o_ref,
                      *, num_heads, scale):
    """One full pre-LN ViT block for one batch element (grid axis = batch)."""
    x = x_ref[0].astype(jnp.float32)                       # (S, D) residual stream
    S, D = x.shape
    Dh = D // num_heads

    # ---- attention sub-block: LN -> fused QKV -> per-head softmax attn ----
    h = _ln_f32(x, ln1_g, ln1_b).astype(DTYPE)             # bf16 into MXU
    qkv = jnp.dot(h, wqkv_ref[...], preferred_element_type=jnp.float32)
    qkv = qkv + bqkv_ref[...].astype(jnp.float32)          # (S, 3D) f32
    q_all = qkv[:, :D]
    k_all = qkv[:, D:2 * D]
    v_all = qkv[:, 2 * D:]

    attn_proj = jnp.zeros((S, D), jnp.float32)
    for i in range(num_heads):                             # static unrolled loop
        qh = q_all[:, i * Dh:(i + 1) * Dh].astype(DTYPE)   # (S, Dh)
        kh = k_all[:, i * Dh:(i + 1) * Dh].astype(DTYPE)
        vh = v_all[:, i * Dh:(i + 1) * Dh].astype(DTYPE)
        # scores = qh @ kh^T (no mask in DINO -> no bias array, no DMA for it)
        s = jax.lax.dot_general(qh, kh, (((1,), (1,)), ((), ())),
                                preferred_element_type=jnp.float32) * scale
        s = s - jnp.max(s, axis=-1, keepdims=True)
        p = jnp.exp(s)
        denom = jnp.sum(p, axis=-1, keepdims=True)
        oh = jnp.dot(p.astype(DTYPE), vh, preferred_element_type=jnp.float32)
        oh = (oh * pl.reciprocal(denom, approx=True)).astype(DTYPE)
        # fold the output projection per head: concat(o_h) @ Wo == sum_h o_h @ Wo_h
        attn_proj = attn_proj + jnp.dot(
            oh, wo_ref[i * Dh:(i + 1) * Dh, :], preferred_element_type=jnp.float32)

    x = x + attn_proj + bo_ref[...].astype(jnp.float32)

    # ---- MLP sub-block: LN -> FC1 + GELU -> FC2 -> residual ----
    h = _ln_f32(x, ln2_g, ln2_b).astype(DTYPE)
    a = jnp.dot(h, w1_ref[...], preferred_element_type=jnp.float32)
    a = a + b1_ref[...].astype(jnp.float32)
    # TODO(synk): PyTorch nn.GELU() is the exact erf GELU; tanh approximation used here.
    a = jax.nn.gelu(a, approximate=True).astype(DTYPE)
    y = jnp.dot(a, w2_ref[...], preferred_element_type=jnp.float32)
    y = y + b2_ref[...].astype(jnp.float32)

    o_ref[0] = (x + y).astype(o_ref.dtype)


def _head_kernel(cls_ref, g_ref, b_ref, w1_ref, b1_ref, w2_ref, b2_ref,
                 w3_ref, b3_ref, wl_ref, o_ref):
    """Final backbone LayerNorm (CLS row only) + DINO projection head."""
    x = cls_ref[...].astype(jnp.float32)                   # (B, D)
    h = _ln_f32(x, g_ref, b_ref).astype(DTYPE)
    a = jnp.dot(h, w1_ref[...], preferred_element_type=jnp.float32)
    a = jax.nn.gelu(a + b1_ref[...].astype(jnp.float32), approximate=True).astype(DTYPE)
    a = jnp.dot(a, w2_ref[...], preferred_element_type=jnp.float32)
    a = jax.nn.gelu(a + b2_ref[...].astype(jnp.float32), approximate=True).astype(DTYPE)
    z = jnp.dot(a, w3_ref[...], preferred_element_type=jnp.float32)
    z = z + b3_ref[...].astype(jnp.float32)                # (B, BOT)
    # L2 normalize (DINO head) then weight-normalized last linear
    z = z * jax.lax.rsqrt(jnp.sum(jnp.square(z), axis=-1, keepdims=True) + 1e-12)
    o_ref[...] = jnp.dot(z.astype(DTYPE), wl_ref[...],
                         preferred_element_type=jnp.float32)


# ------------------------------ kernel wrappers ------------------------------

def patch_embed(patches, w, b):
    M = patches.shape[0]
    N = w.shape[1]
    return pl.pallas_call(
        _patch_embed_kernel,
        out_shape=jax.ShapeDtypeStruct((M, N), patches.dtype),
    )(patches, w, b)


def vit_block(x, p, num_heads):
    B, S, D = x.shape
    FF = p["fc1_w"].shape[1]
    scale = 1.0 / math.sqrt(D // num_heads)

    def rep2d(shape):
        # same weight block for every grid step (no re-DMA: index unchanged)
        return pl.BlockSpec(shape, lambda bidx: (0, 0))

    return pl.pallas_call(
        partial(_vit_block_kernel, num_heads=num_heads, scale=scale),
        out_shape=jax.ShapeDtypeStruct((B, S, D), x.dtype),
        grid=(B,),
        in_specs=[
            pl.BlockSpec((1, S, D), lambda bidx: (bidx, 0, 0)),
            rep2d((1, D)), rep2d((1, D)),
            rep2d((D, 3 * D)), rep2d((1, 3 * D)),
            rep2d((D, D)), rep2d((1, D)),
            rep2d((1, D)), rep2d((1, D)),
            rep2d((D, FF)), rep2d((1, FF)),
            rep2d((FF, D)), rep2d((1, D)),
        ],
        out_specs=pl.BlockSpec((1, S, D), lambda bidx: (bidx, 0, 0)),
        compiler_params=pltpu.CompilerParams(dimension_semantics=("parallel",)),
    )(x, p["ln1_g"], p["ln1_b"], p["wqkv"], p["bqkv"], p["wo"], p["bo"],
      p["ln2_g"], p["ln2_b"], p["fc1_w"], p["fc1_b"], p["fc2_w"], p["fc2_b"])


def dino_head(cls_tok, params):
    B = cls_tok.shape[0]
    OUT = params["head_wlast"].shape[1]
    return pl.pallas_call(
        _head_kernel,
        out_shape=jax.ShapeDtypeStruct((B, OUT), jnp.float32),
    )(cls_tok, params["norm_g"], params["norm_b"],
      params["head_w1"], params["head_b1"],
      params["head_w2"], params["head_b2"],
      params["head_w3"], params["head_b3"],
      params["head_wlast"])


# ------------------------------ parameter init -------------------------------

class KeyGen:
    def __init__(self, seed):
        self.key = jax.random.PRNGKey(seed)

    def __call__(self):
        self.key, k = jax.random.split(self.key)
        return k


def _init_linear(kg, din, dout):
    w = (jax.random.normal(kg(), (din, dout), jnp.float32) * 0.02).astype(DTYPE)
    b = jnp.zeros((1, dout), DTYPE)
    return w, b


def _init_ln(d):
    return jnp.ones((1, d), DTYPE), jnp.zeros((1, d), DTYPE)


def init_params(seed=0):
    c = CFG
    kg = KeyGen(seed)
    Np = (c["IMG"] // c["PATCH"]) ** 2
    D, FF = c["D"], c["FF"]
    p = {}
    # patch embedding (Conv2d k=s=PATCH realised as im2col + matmul)
    p["patch_w"], p["patch_b"] = _init_linear(kg, c["C"] * c["PATCH"] ** 2, D)
    p["cls"] = (jax.random.normal(kg(), (1, 1, D), jnp.float32) * 0.02).astype(DTYPE)
    p["pos"] = (jax.random.normal(kg(), (1, Np + 1, D), jnp.float32) * 0.02).astype(DTYPE)
    # transformer blocks
    blocks = []
    for _ in range(c["DEPTH"]):
        blk = {}
        blk["ln1_g"], blk["ln1_b"] = _init_ln(D)
        blk["wqkv"], blk["bqkv"] = _init_linear(kg, D, 3 * D)    # fused QKV
        blk["wo"], blk["bo"] = _init_linear(kg, D, D)
        blk["ln2_g"], blk["ln2_b"] = _init_ln(D)
        blk["fc1_w"], blk["fc1_b"] = _init_linear(kg, D, FF)
        blk["fc2_w"], blk["fc2_b"] = _init_linear(kg, FF, D)
        blocks.append(blk)
    p["blocks"] = blocks
    # final backbone LayerNorm
    p["norm_g"], p["norm_b"] = _init_ln(D)
    # DINO projection head
    p["head_w1"], p["head_b1"] = _init_linear(kg, D, c["HEAD_HID"])
    p["head_w2"], p["head_b2"] = _init_linear(kg, c["HEAD_HID"], c["HEAD_HID"])
    p["head_w3"], p["head_b3"] = _init_linear(kg, c["HEAD_HID"], c["HEAD_BOT"])
    # weight-normalized last layer (weight_g == 1): pre-normalize columns once
    v = jax.random.normal(kg(), (c["HEAD_BOT"], c["HEAD_OUT"]), jnp.float32) * 0.02
    p["head_wlast"] = (v / (jnp.linalg.norm(v, axis=0, keepdims=True) + 1e-12)).astype(DTYPE)
    return p


# ---------------------------------- forward ----------------------------------

def dino_projector_forward(params, pixel_values):
    c = CFG
    B = pixel_values.shape[0]
    P = c["PATCH"]
    Hp = c["IMG"] // P
    Np = Hp * Hp

    # im2col patch extraction (glue) -> Pallas matmul for the patch-embed conv
    x = pixel_values.astype(DTYPE)                                   # NCHW
    patches = x.reshape(B, c["C"], Hp, P, Hp, P).transpose(0, 2, 4, 1, 3, 5)
    patches = patches.reshape(B * Np, c["C"] * P * P)
    v = patch_embed(patches, params["patch_w"], params["patch_b"])
    v = v.reshape(B, Np, c["D"])

    # prepend CLS token, add positional embedding (tiny glue ops)
    cls = jnp.broadcast_to(params["cls"], (B, 1, c["D"]))
    v = jnp.concatenate([cls, v], axis=1) + params["pos"]            # (B, S, D)

    # transformer blocks: one fused Pallas kernel each
    for blk in params["blocks"]:
        v = vit_block(v, blk, c["H"])

    # CLS token -> final LN + projection head (fused into one kernel)
    cls_tok = v[:, 0, :]                                             # (B, D) glue slice
    feats = dino_head(cls_tok, params)                               # (B, HEAD_OUT) f32
    return feats


# ------------------------------------ main ------------------------------------

if __name__ == "__main__":
    c = CFG
    key = jax.random.PRNGKey(0)
    pixel_values = jax.random.normal(key, (c["B"], c["C"], c["IMG"], c["IMG"]),
                                     jnp.float32)

    params = init_params(0)
    forward = jax.jit(dino_projector_forward)
    feats = forward(params, pixel_values)
    jax.block_until_ready(feats)

    assert feats.shape == (c["B"], c["HEAD_OUT"])
    assert bool(jnp.all(jnp.isfinite(feats)))
    print("KERNEL_OK")
</pallas_src>

<mosaic_0001>
module attributes {stable_mosaic.version = 11 : i64} {
  func.func @_patch_embed_kernel(%arg0: memref<32x192xbf16, #tpu.memory_space<vmem>>, %arg1: memref<192x128xbf16, #tpu.memory_space<vmem>>, %arg2: memref<1x128xbf16, #tpu.memory_space<vmem>>, %arg3: memref<32x128xbf16, #tpu.memory_space<vmem>>) attributes {dimension_semantics = [], scalar_prefetch = 0 : i64, scratch_operands = 0 : i64, tpu.core_type = #tpu.core_type<tc>} {
    %c0 = arith.constant 0 : index
    %c0_0 = arith.constant 0 : index
    %0 = vector.load %arg0[%c0, %c0_0] : memref<32x192xbf16, #tpu.memory_space<vmem>>, vector<32x192xbf16>
    %c0_1 = arith.constant 0 : index
    %c0_2 = arith.constant 0 : index
    %1 = vector.load %arg1[%c0_1, %c0_2] : memref<192x128xbf16, #tpu.memory_space<vmem>>, vector<192x128xbf16>
    %cst = arith.constant dense<0.000000e+00> : vector<32x128xf32>
    %2 = tpu.matmul %0, %1, %cst {dimension_numbers = #tpu.dot_dimension_numbers<[1], [0], [0], [1], [0, 0, 1, 1], [], []>} : vector<32x192xbf16>, vector<192x128xbf16>, vector<32x128xf32> -> vector<32x128xf32>
    %c0_3 = arith.constant 0 : index
    %c0_4 = arith.constant 0 : index
    %3 = vector.load %arg2[%c0_3, %c0_4] : memref<1x128xbf16, #tpu.memory_space<vmem>>, vector<1x128xbf16>
    %4 = arith.extf %3 : vector<1x128xbf16> to vector<1x128xf32>
    %5 = vector.broadcast %4 : vector<1x128xf32> to vector<32x128xf32>
    %6 = arith.addf %2, %5 : vector<32x128xf32>
    %7 = arith.truncf %6 : vector<32x128xf32> to vector<32x128xbf16>
    %c0_5 = arith.constant 0 : index
    %c0_6 = arith.constant 0 : index
    %8 = vector.load %arg3[%c0_5, %c0_6] : memref<32x128xbf16, #tpu.memory_space<vmem>>, vector<32x128xbf16>
    tpu.vector_store %arg3[%c0_5, %c0_6], %7 {strides = array<i32>} : memref<32x128xbf16, #tpu.memory_space<vmem>>, vector<32x128xbf16>,
    return
  }
}

module attributes {stable_mosaic.version = 11 : i64} {
  func.func @_head_kernel(%arg0: memref<2x128xbf16, #tpu.memory_space<vmem>>, %arg1: memref<1x128xbf16, #tpu.memory_space<vmem>>, %arg2: memref<1x128xbf16, #tpu.memory_space<vmem>>, %arg3: memref<128x256xbf16, #tpu.memory_space<vmem>>, %arg4: memref<1x256xbf16, #tpu.memory_space<vmem>>, %arg5: memref<256x256xbf16, #tpu.memory_space<vmem>>, %arg6: memref<1x256xbf16, #tpu.memory_space<vmem>>, %arg7: memref<256x128xbf16, #tpu.memory_space<vmem>>, %arg8: memref<1x128xbf16, #tpu.memory_space<vmem>>, %arg9: memref<128x256xbf16, #tpu.memory_space<vmem>>, %arg10: memref<2x256xf32, #tpu.memory_space<vmem>>) attributes {dimension_semantics = [], scalar_prefetch = 0 : i64, scratch_operands = 0 : i64, tpu.core_type = #tpu.core_type<tc>} {
    %c0 = arith.constant 0 : index
    %c0_0 = arith.constant 0 : index
    %0 = vector.load %arg0[%c0, %c0_0] : memref<2x128xbf16, #tpu.memory_space<vmem>>, vector<2x128xbf16>
    %1 = arith.extf %0 : vector<2x128xbf16> to vector<2x128xf32>
    %cst = arith.constant dense<0.000000e+00> : vector<2xf32>
    %2 = vector.multi_reduction <add>, %1, %cst [1] : vector<2x128xf32> to vector<2xf32>
    %3 = vector.shape_cast %2 : vector<2xf32> to vector<2x1xf32>
    %cst_1 = arith.constant 1.280000e+02 : f32
    %4 = vector.broadcast %cst_1 : f32 to vector<2x1xf32>
    %5 = arith.divf %3, %4 : vector<2x1xf32>
    %6 = vector.broadcast %5 : vector<2x1xf32> to vector<2x128xf32>
    %7 = arith.subf %1, %6 : vector<2x128xf32>
    %8 = arith.mulf %7, %7 : vector<2x128xf32>
    %cst_2 = arith.constant dense<0.000000e+00> : vector<2xf32>
    %9 = vector.multi_reduction <add>, %8, %cst_2 [1] : vector<2x128xf32> to vector<2xf32>
    %10 = vector.shape_cast %9 : vector<2xf32> to vector<2x1xf32>
    %cst_3 = arith.constant 1.280000e+02 : f32
    %11 = vector.broadcast %cst_3 : f32 to vector<2x1xf32>
    %12 = arith.divf %10, %11 : vector<2x1xf32>
    %13 = vector.broadcast %5 : vector<2x1xf32> to vector<2x128xf32>
    %14 = arith.subf %1, %13 : vector<2x128xf32>
    %cst_4 = arith.constant 9.99999997E-7 : f32
    %15 = vector.broadcast %cst_4 : f32 to vector<2x1xf32>
    %16 = arith.addf %12, %15 : vector<2x1xf32>
    %17 = math.rsqrt %16 : vector<2x1xf32>
    %18 = vector.broadcast %17 : vector<2x1xf32> to vector<2x128xf32>
    %19 = arith.mulf %14, %18 : vector<2x128xf32>
    %c0_5 = arith.constant 0 : index
    %c0_6 = arith.constant 0 : index
    %20 = vector.load %arg1[%c0_5, %c0_6] : memref<1x128xbf16, #tpu.memory_space<vmem>>, vector<1x128xbf16>
    %21 = arith.extf %20 : vector<1x128xbf16> to vector<1x128xf32>
    %22 = vector.broadcast %21 : vector<1x128xf32> to vector<2x128xf32>
    %23 = arith.mulf %19, %22 : vector<2x128xf32>
    %c0_7 = arith.constant 0 : index
    %c0_8 = arith.constant 0 : index
    %24 = vector.load %arg2[%c0_7, %c0_8] : memref<1x128xbf16, #tpu.memory_space<vmem>>, vector<1x128xbf16>
    %25 = arith.extf %24 : vector<1x128xbf16> to vector<1x128xf32>
    %26 = vector.broadcast %25 : vector<1x128xf32> to vector<2x128xf32>
    %27 = arith.addf %23, %26 : vector<2x128xf32>
    %28 = arith.truncf %27 : vector<2x128xf32> to vector<2x128xbf16>
    %c0_9 = arith.constant 0 : index
    %c0_10 = arith.constant 0 : index
    %29 = vector.load %arg3[%c0_9, %c0_10] : memref<128x256xbf16, #tpu.memory_space<vmem>>, vector<128x256xbf16>
    %cst_11 = arith.constant dense<0.000000e+00> : vector<2x256xf32>
    %30 = tpu.matmul %28, %29, %cst_11 {dimension_numbers = #tpu.dot_dimension_numbers<[1], [0], [0], [1], [0, 0, 1, 1], [], []>} : vector<2x128xbf16>, vector<128x256xbf16>, vector<2x256xf32> -> vector<2x256xf32>
    %c0_12 = arith.constant 0 : index
    %c0_13 = arith.constant 0 : index
    %31 = vector.load %arg4[%c0_12, %c0_13] : memref<1x256xbf16, #tpu.memory_space<vmem>>, vector<1x256xbf16>
    %32 = arith.extf %31 : vector<1x256xbf16> to vector<1x256xf32>
    %33 = vector.broadcast %32 : vector<1x256xf32> to vector<2x256xf32>
    %34 = arith.addf %30, %33 : vector<2x256xf32>
    %35 = arith.mulf %34, %34 : vector<2x256xf32>
    %36 = arith.mulf %34, %35 : vector<2x256xf32>
    %cst_14 = arith.constant 4.471500e-02 : f32
    %37 = vector.broadcast %cst_14 : f32 to vector<2x256xf32>
    %38 = arith.mulf %37, %36 : vector<2x256xf32>
    %39 = arith.addf %34, %38 : vector<2x256xf32>
    %cst_15 = arith.constant 0.797884583 : f32
    %40 = vector.broadcast %cst_15 : f32 to vector<2x256xf32>
    %41 = arith.mulf %40, %39 : vector<2x256xf32>
    %42 = math.tanh %41 : vector<2x256xf32>
    %cst_16 = arith.constant 1.000000e+00 : f32
    %43 = vector.broadcast %cst_16 : f32 to vector<2x256xf32>
    %44 = arith.addf %43, %42 : vector<2x256xf32>
    %cst_17 = arith.constant 5.000000e-01 : f32
    %45 = vector.broadcast %cst_17 : f32 to vector<2x256xf32>
    %46 = arith.mulf %45, %44 : vector<2x256xf32>
    %47 = arith.mulf %34, %46 : vector<2x256xf32>
    %48 = arith.truncf %47 : vector<2x256xf32> to vector<2x256xbf16>
    %c0_18 = arith.constant 0 : index
    %c0_19 = arith.constant 0 : index
    %49 = vector.load %arg5[%c0_18, %c0_19] : memref<256x256xbf16, #tpu.memory_space<vmem>>, vector<256x256xbf16>
    %cst_20 = arith.constant dense<0.000000e+00> : vector<2x256xf32>
    %50 = tpu.matmul %48, %49, %cst_20 {dimension_numbers = #tpu.dot_dimension_numbers<[1], [0], [0], [1], [0, 0, 1, 1], [], []>} : vector<2x256xbf16>, vector<256x256xbf16>, vector<2x256xf32> -> vector<2x256xf32>
    %c0_21 = arith.constant 0 : index
    %c0_22 = arith.constant 0 : index
    %51 = vector.load %arg6[%c0_21, %c0_22] : memref<1x256xbf16, #tpu.memory_space<vmem>>, vector<1x256xbf16>
    %52 = arith.extf %51 : vector<1x256xbf16> to vector<1x256xf32>
    %53 = vector.broadcast %52 : vector<1x256xf32> to vector<2x256xf32>
    %54 = arith.addf %50, %53 : vector<2x256xf32>
    %55 = arith.mulf %54, %54 : vector<2x256xf32>
    %56 = arith.mulf %54, %55 : vector<2x256xf32>
    %cst_23 = arith.constant 4.471500e-02 : f32
    %57 = vector.broadcast %cst_23 : f32 to vector<2x256xf32>
    %58 = arith.mulf %57, %56 : vector<2x256xf32>
    %59 = arith.addf %54, %58 : vector<2x256xf32>
    %cst_24 = arith.constant 0.797884583 : f32
    %60 = vector.broadcast %cst_24 : f32 to vector<2x256xf32>
    %61 = arith.mulf %60, %59 : vector<2x256xf32>
    %62 = math.tanh %61 : vector<2x256xf32>
    %cst_25 = arith.constant 1.000000e+00 : f32
    %63 = vector.broadcast %cst_25 : f32 to vector<2x256xf32>
    %64 = arith.addf %63, %62 : vector<2x256xf32>
    %cst_26 = arith.constant 5.000000e-01 : f32
    %65 = vector.broadcast %cst_26 : f32 to vector<2x256xf32>
    %66 = arith.mulf %65, %64 : vector<2x256xf32>
    %67 = arith.mulf %54, %66 : vector<2x256xf32>
    %68 = arith.truncf %67 : vector<2x256xf32> to vector<2x256xbf16>
    %c0_27 = arith.constant 0 : index
    %c0_28 = arith.constant 0 : index
    %69 = vector.load %arg7[%c0_27, %c0_28] : memref<256x128xbf16, #tpu.memory_space<vmem>>, vector<256x128xbf16>
    %cst_29 = arith.constant dense<0.000000e+00> : vector<2x128xf32>
    %70 = tpu.matmul %68, %69, %cst_29 {dimension_numbers = #tpu.dot_dimension_numbers<[1], [0], [0], [1], [0, 0, 1, 1], [], []>} : vector<2x256xbf16>, vector<256x128xbf16>, vector<2x128xf32> -> vector<2x128xf32>
    %c0_30 = arith.constant 0 : index
    %c0_31 = arith.constant 0 : index
    %71 = vector.load %arg8[%c0_30, %c0_31] : memref<1x128xbf16, #tpu.memory_space<vmem>>, vector<1x128xbf16>
    %72 = arith.extf %71 : vector<1x128xbf16> to vector<1x128xf32>
    %73 = vector.broadcast %72 : vector<1x128xf32> to vector<2x128xf32>
    %74 = arith.addf %70, %73 : vector<2x128xf32>
    %75 = arith.mulf %74, %74 : vector<2x128xf32>
    %cst_32 = arith.constant dense<0.000000e+00> : vector<2xf32>
    %76 = vector.multi_reduction <add>, %75, %cst_32 [1] : vector<2x128xf32> to vector<2xf32>
    %77 = vector.shape_cast %76 : vector<2xf32> to vector<2x1xf32>
    %cst_33 = arith.constant 9.99999996E-13 : f32
    %78 = vector.broadcast %cst_33 : f32 to vector<2x1xf32>
    %79 = arith.addf %77, %78 : vector<2x1xf32>
    %80 = math.rsqrt %79 : vector<2x1xf32>
    %81 = vector.broadcast %80 : vector<2x1xf32> to vector<2x128xf32>
    %82 = arith.mulf %74, %81 : vector<2x128xf32>
    %83 = arith.truncf %82 : vector<2x128xf32> to vector<2x128xbf16>
    %c0_34 = arith.constant 0 : index
    %c0_35 = arith.constant 0 : index
    %84 = vector.load %arg9[%c0_34, %c0_35] : memref<128x256xbf16, #tpu.memory_space<vmem>>, vector<128x256xbf16>
    %cst_36 = arith.constant dense<0.000000e+00> : vector<2x256xf32>
    %85 = tpu.matmul %83, %84, %cst_36 {dimension_numbers = #tpu.dot_dimension_numbers<[1], [0], [0], [1], [0, 0, 1, 1], [], []>} : vector<2x128xbf16>, vector<128x256xbf16>, vector<2x256xf32> -> vector<2x256xf32>
    %c0_37 = arith.constant 0 : index
    %c0_38 = arith.constant 0 : index
    %86 = vector.load %arg10[%c0_37, %c0_38] : memref<2x256xf32, #tpu.memory_space<vmem>>, vector<2x256xf32>
    tpu.vector_store %arg10[%c0_37, %c0_38], %85 {strides = array<i32>} : memref<2x256xf32, #tpu.memory_space<vmem>>, vector<2x256xf32>,
    return
  }
}

module attributes {stable_mosaic.version = 11 : i64} {
  func.func @_vit_block_kernel(%arg0: i32, %arg1: memref<1x17x128xbf16, #tpu.memory_space<vmem>>, %arg2: memref<1x128xbf16, #tpu.memory_space<vmem>>, %arg3: memref<1x128xbf16, #tpu.memory_space<vmem>>, %arg4: memref<128x384xbf16, #tpu.memory_space<vmem>>, %arg5: memref<1x384xbf16, #tpu.memory_space<vmem>>, %arg6: memref<128x128xbf16, #tpu.memory_space<vmem>>, %arg7: memref<1x128xbf16, #tpu.memory_space<vmem>>, %arg8: memref<1x128xbf16, #tpu.memory_space<vmem>>, %arg9: memref<1x128xbf16, #tpu.memory_space<vmem>>, %arg10: memref<128x512xbf16, #tpu.memory_space<vmem>>, %arg11: memref<1x512xbf16, #tpu.memory_space<vmem>>, %arg12: memref<512x128xbf16, #tpu.memory_space<vmem>>, %arg13: memref<1x128xbf16, #tpu.memory_space<vmem>>, %arg14: memref<1x17x128xbf16, #tpu.memory_space<vmem>>) attributes {dimension_semantics = [#tpu.dimension_semantics<parallel>], iteration_bounds = array<i64: 2>, scalar_prefetch = 0 : i64, scratch_operands = 0 : i64, tpu.core_type = #tpu.core_type<tc>, window_params = [{transform_indices = @transform_0, window_bounds = array<i64: 1, 17, 128>}, {pipeline_mode = #tpu.pipeline_mode<synchronous>, transform_indices = @transform_1, window_bounds = array<i64: 1, 128>}, {pipeline_mode = #tpu.pipeline_mode<synchronous>, transform_indices = @transform_2, window_bounds = array<i64: 1, 128>}, {pipeline_mode = #tpu.pipeline_mode<synchronous>, transform_indices = @transform_3, window_bounds = array<i64: 128, 384>}, {pipeline_mode = #tpu.pipeline_mode<synchronous>, transform_indices = @transform_4, window_bounds = array<i64: 1, 384>}, {pipeline_mode = #tpu.pipeline_mode<synchronous>, transform_indices = @transform_5, window_bounds = array<i64: 128, 128>}, {pipeline_mode = #tpu.pipeline_mode<synchronous>, transform_indices = @transform_6, window_bounds = array<i64: 1, 128>}, {pipeline_mode = #tpu.pipeline_mode<synchronous>, transform_indices = @transform_7, window_bounds = array<i64: 1, 128>}, {pipeline_mode = #tpu.pipeline_mode<synchronous>, transform_indices = @transform_8, window_bounds = array<i64: 1, 128>}, {pipeline_mode = #tpu.pipeline_mode<synchronous>, transform_indices = @transform_9, window_bounds = array<i64: 128, 512>}, {pipeline_mode = #tpu.pipeline_mode<synchronous>, transform_indices = @transform_10, window_bounds = array<i64: 1, 512>}, {pipeline_mode = #tpu.pipeline_mode<synchronous>, transform_indices = @transform_11, window_bounds = array<i64: 512, 128>}, {pipeline_mode = #tpu.pipeline_mode<synchronous>, transform_indices = @transform_12, window_bounds = array<i64: 1, 128>}, {transform_indices = @transform_13, window_bounds = array<i64: 1, 17, 128>}]} {
    %c0 = arith.constant 0 : index
    %c0_0 = arith.constant 0 : index
    %c0_1 = arith.constant 0 : index
    %0 = vector.load %arg1[%c0, %c0_0, %c0_1] : memref<1x17x128xbf16, #tpu.memory_space<vmem>>, vector<1x17x128xbf16>
    %1 = vector.shape_cast %0 : vector<1x17x128xbf16> to vector<17x128xbf16>
    %2 = arith.extf %1 : vector<17x128xbf16> to vector<17x128xf32>
    %cst = arith.constant dense<0.000000e+00> : vector<17xf32>
    %3 = vector.multi_reduction <add>, %2, %cst [1] : vector<17x128xf32> to vector<17xf32>
    %4 = vector.shape_cast %3 : vector<17xf32> to vector<17x1xf32>
    %cst_2 = arith.constant 1.280000e+02 : f32
    %5 = vector.broadcast %cst_2 : f32 to vector<17x1xf32>
    %6 = arith.divf %4, %5 : vector<17x1xf32>
    %7 = vector.broadcast %6 : vector<17x1xf32> to vector<17x128xf32>
    %8 = arith.subf %2, %7 : vector<17x128xf32>
    %9 = arith.mulf %8, %8 : vector<17x128xf32>
    %cst_3 = arith.constant dense<0.000000e+00> : vector<17xf32>
    %10 = vector.multi_reduction <add>, %9, %cst_3 [1] : vector<17x128xf32> to vector<17xf32>
    %11 = vector.shape_cast %10 : vector<17xf32> to vector<17x1xf32>
    %cst_4 = arith.constant 1.280000e+02 : f32
    %12 = vector.broadcast %cst_4 : f32 to vector<17x1xf32>
    %13 = arith.divf %11, %12 : vector<17x1xf32>
    %14 = vector.broadcast %6 : vector<17x1xf32> to vector<17x128xf32>
    %15 = arith.subf %2, %14 : vector<17x128xf32>
    %cst_5 = arith.constant 9.99999997E-7 : f32
    %16 = vector.broadcast %cst_5 : f32 to vector<17x1xf32>
    %17 = arith.addf %13, %16 : vector<17x1xf32>
    %18 = math.rsqrt %17 : vector<17x1xf32>
    %19 = vector.broadcast %18 : vector<17x1xf32> to vector<17x128xf32>
    %20 = arith.mulf %15, %19 : vector<17x128xf32>
    %c0_6 = arith.constant 0 : index
    %c0_7 = arith.constant 0 : index
    %21 = vector.load %arg2[%c0_6, %c0_7] : memref<1x128xbf16, #tpu.memory_space<vmem>>, vector<1x128xbf16>
    %22 = arith.extf %21 : vector<1x128xbf16> to vector<1x128xf32>
    %23 = vector.broadcast %22 : vector<1x128xf32> to vector<17x128xf32>
    %24 = arith.mulf %20, %23 : vector<17x128xf32>
    %c0_8 = arith.constant 0 : index
    %c0_9 = arith.constant 0 : index
    %25 = vector.load %arg3[%c0_8, %c0_9] : memref<1x128xbf16, #tpu.memory_space<vmem>>, vector<1x128xbf16>
    %26 = arith.extf %25 : vector<1x128xbf16> to vector<1x128xf32>
    %27 = vector.broadcast %26 : vector<1x128xf32> to vector<17x128xf32>
    %28 = arith.addf %24, %27 : vector<17x128xf32>
    %29 = arith.truncf %28 : vector<17x128xf32> to vector<17x128xbf16>
    %c0_10 = arith.constant 0 : index
    %c0_11 = arith.constant 0 : index
    %30 = vector.load %arg4[%c0_10, %c0_11] : memref<128x384xbf16, #tpu.memory_space<vmem>>, vector<128x384xbf16>
    %cst_12 = arith.constant dense<0.000000e+00> : vector<17x384xf32>
    %31 = tpu.matmul %29, %30, %cst_12 {dimension_numbers = #tpu.dot_dimension_numbers<[1], [0], [0], [1], [0, 0, 1, 1], [], []>} : vector<17x128xbf16>, vector<128x384xbf16>, vector<17x384xf32> -> vector<17x384xf32>
    %c0_13 = arith.constant 0 : index
    %c0_14 = arith.constant 0 : index
    %32 = vector.load %arg5[%c0_13, %c0_14] : memref<1x384xbf16, #tpu.memory_space<vmem>>, vector<1x384xbf16>
    %33 = arith.extf %32 : vector<1x384xbf16> to vector<1x384xf32>
    %34 = vector.broadcast %33 : vector<1x384xf32> to vector<17x384xf32>
    %35 = arith.addf %31, %34 : vector<17x384xf32>
    %36 = vector.extract_strided_slice %35 {offsets = [0, 0], sizes = [17, 128], strides = [1, 1]} : vector<17x384xf32> to vector<17x128xf32>
    %37 = vector.extract_strided_slice %35 {offsets = [0, 128], sizes = [17, 128], strides = [1, 1]} : vector<17x384xf32> to vector<17x128xf32>
    %38 = vector.extract_strided_slice %35 {offsets = [0, 256], sizes = [17, 128], strides = [1, 1]} : vector<17x384xf32> to vector<17x128xf32>
    %cst_15 = arith.constant 0.000000e+00 : f32
    %39 = vector.broadcast %cst_15 : f32 to vector<17x128xf32>
    %40 = vector.extract_strided_slice %36 {offsets = [0, 0], sizes = [17, 32], strides = [1, 1]} : vector<17x128xf32> to vector<17x32xf32>
    %41 = arith.truncf %40 : vector<17x32xf32> to vector<17x32xbf16>
    %42 = vector.extract_strided_slice %37 {offsets = [0, 0], sizes = [17, 32], strides = [1, 1]} : vector<17x128xf32> to vector<17x32xf32>
    %43 = arith.truncf %42 : vector<17x32xf32> to vector<17x32xbf16>
    %44 = vector.extract_strided_slice %38 {offsets = [0, 0], sizes = [17, 32], strides = [1, 1]} : vector<17x128xf32> to vector<17x32xf32>
    %45 = arith.truncf %44 : vector<17x32xf32> to vector<17x32xbf16>
    %cst_16 = arith.constant dense<0.000000e+00> : vector<17x17xf32>
    %46 = tpu.matmul %41, %43, %cst_16 {dimension_numbers = #tpu.dot_dimension_numbers<[1], [1], [0], [0], [0, 0, 1, 0], [], []>} : vector<17x32xbf16>, vector<17x32xbf16>, vector<17x17xf32> -> vector<17x17xf32>
    %cst_17 = arith.constant 0.176776692 : f32
    %47 = vector.broadcast %cst_17 : f32 to vector<17x17xf32>
    %48 = arith.mulf %46, %47 : vector<17x17xf32>
    %cst_18 = arith.constant dense<0xFF800000> : vector<17xf32>
    %49 = vector.multi_reduction <maximumf>, %48, %cst_18 [1] : vector<17x17xf32> to vector<17xf32>
    %50 = vector.shape_cast %49 : vector<17xf32> to vector<17x1xf32>
    %51 = vector.broadcast %50 : vector<17x1xf32> to vector<17x17xf32>
    %52 = arith.subf %48, %51 : vector<17x17xf32>
    %53 = math.exp %52 : vector<17x17xf32>
    %cst_19 = arith.constant dense<0.000000e+00> : vector<17xf32>
    %54 = vector.multi_reduction <add>, %53, %cst_19 [1] : vector<17x17xf32> to vector<17xf32>
    %55 = vector.shape_cast %54 : vector<17xf32> to vector<17x1xf32>
    %56 = arith.truncf %53 : vector<17x17xf32> to vector<17x17xbf16>
    %cst_20 = arith.constant dense<0.000000e+00> : vector<17x32xf32>
    %57 = tpu.matmul %56, %45, %cst_20 {dimension_numbers = #tpu.dot_dimension_numbers<[1], [0], [0], [1], [0, 0, 1, 1], [], []>} : vector<17x17xbf16>, vector<17x32xbf16>, vector<17x32xf32> -> vector<17x32xf32>
    %58 = tpu.reciprocal %55 {approx = true} : vector<17x1xf32> -> vector<17x1xf32>
    %59 = vector.broadcast %58 : vector<17x1xf32> to vector<17x32xf32>
    %60 = arith.mulf %57, %59 : vector<17x32xf32>
    %61 = arith.truncf %60 : vector<17x32xf32> to vector<17x32xbf16>
    %c0_21 = arith.constant 0 : index
    %c0_22 = arith.constant 0 : index
    %62 = vector.load %arg6[%c0_21, %c0_22] : memref<128x128xbf16, #tpu.memory_space<vmem>>, vector<32x128xbf16>
    %cst_23 = arith.constant dense<0.000000e+00> : vector<17x128xf32>
    %63 = tpu.matmul %61, %62, %cst_23 {dimension_numbers = #tpu.dot_dimension_numbers<[1], [0], [0], [1], [0, 0, 1, 1], [], []>} : vector<17x32xbf16>, vector<32x128xbf16>, vector<17x128xf32> -> vector<17x128xf32>
    %64 = arith.addf %39, %63 : vector<17x128xf32>
    %65 = vector.extract_strided_slice %36 {offsets = [0, 32], sizes = [17, 32], strides = [1, 1]} : vector<17x128xf32> to vector<17x32xf32>
    %66 = arith.truncf %65 : vector<17x32xf32> to vector<17x32xbf16>
    %67 = vector.extract_strided_slice %37 {offsets = [0, 32], sizes = [17, 32], strides = [1, 1]} : vector<17x128xf32> to vector<17x32xf32>
    %68 = arith.truncf %67 : vector<17x32xf32> to vector<17x32xbf16>
    %69 = vector.extract_strided_slice %38 {offsets = [0, 32], sizes = [17, 32], strides = [1, 1]} : vector<17x128xf32> to vector<17x32xf32>
    %70 = arith.truncf %69 : vector<17x32xf32> to vector<17x32xbf16>
    %cst_24 = arith.constant dense<0.000000e+00> : vector<17x17xf32>
    %71 = tpu.matmul %66, %68, %cst_24 {dimension_numbers = #tpu.dot_dimension_numbers<[1], [1], [0], [0], [0, 0, 1, 0], [], []>} : vector<17x32xbf16>, vector<17x32xbf16>, vector<17x17xf32> -> vector<17x17xf32>
    %cst_25 = arith.constant 0.176776692 : f32
    %72 = vector.broadcast %cst_25 : f32 to vector<17x17xf32>
    %73 = arith.mulf %71, %72 : vector<17x17xf32>
    %cst_26 = arith.constant dense<0xFF800000> : vector<17xf32>
    %74 = vector.multi_reduction <maximumf>, %73, %cst_26 [1] : vector<17x17xf32> to vector<17xf32>
    %75 = vector.shape_cast %74 : vector<17xf32> to vector<17x1xf32>
    %76 = vector.broadcast %75 : vector<17x1xf32> to vector<17x17xf32>
    %77 = arith.subf %73, %76 : vector<17x17xf32>
    %78 = math.exp %77 : vector<17x17xf32>
    %cst_27 = arith.constant dense<0.000000e+00> : vector<17xf32>
    %79 = vector.multi_reduction <add>, %78, %cst_27 [1] : vector<17x17xf32> to vector<17xf32>
    %80 = vector.shape_cast %79 : vector<17xf32> to vector<17x1xf32>
    %81 = arith.truncf %78 : vector<17x17xf32> to vector<17x17xbf16>
    %cst_28 = arith.constant dense<0.000000e+00> : vector<17x32xf32>
    %82 = tpu.matmul %81, %70, %cst_28 {dimension_numbers = #tpu.dot_dimension_numbers<[1], [0], [0], [1], [0, 0, 1, 1], [], []>} : vector<17x17xbf16>, vector<17x32xbf16>, vector<17x32xf32> -> vector<17x32xf32>
    %83 = tpu.reciprocal %80 {approx = true} : vector<17x1xf32> -> vector<17x1xf32>
    %84 = vector.broadcast %83 : vector<17x1xf32> to vector<17x32xf32>
    %85 = arith.mulf %82, %84 : vector<17x32xf32>
    %86 = arith.truncf %85 : vector<17x32xf32> to vector<17x32xbf16>
    %c32 = arith.constant 32 : index
    %c0_29 = arith.constant 0 : index
    %87 = vector.load %arg6[%c32, %c0_29] : memref<128x128xbf16, #tpu.memory_space<vmem>>, vector<32x128xbf16>
    %cst_30 = arith.constant dense<0.000000e+00> : vector<17x128xf32>
    %88 = tpu.matmul %86, %87, %cst_30 {dimension_numbers = #tpu.dot_dimension_numbers<[1], [0], [0], [1], [0, 0, 1, 1], [], []>} : vector<17x32xbf16>, vector<32x128xbf16>, vector<17x128xf32> -> vector<17x128xf32>
    %89 = arith.addf %64, %88 : vector<17x128xf32>
    %90 = vector.extract_strided_slice %36 {offsets = [0, 64], sizes = [17, 32], strides = [1, 1]} : vector<17x128xf32> to vector<17x32xf32>
    %91 = arith.truncf %90 : vector<17x32xf32> to vector<17x32xbf16>
    %92 = vector.extract_strided_slice %37 {offsets = [0, 64], sizes = [17, 32], strides = [1, 1]} : vector<17x128xf32> to vector<17x32xf32>
    %93 = arith.truncf %92 : vector<17x32xf32> to vector<17x32xbf16>
    %94 = vector.extract_strided_slice %38 {offsets = [0, 64], sizes = [17, 32], strides = [1, 1]} : vector<17x128xf32> to vector<17x32xf32>
    %95 = arith.truncf %94 : vector<17x32xf32> to vector<17x32xbf16>
    %cst_31 = arith.constant dense<0.000000e+00> : vector<17x17xf32>
    %96 = tpu.matmul %91, %93, %cst_31 {dimension_numbers = #tpu.dot_dimension_numbers<[1], [1], [0], [0], [0, 0, 1, 0], [], []>} : vector<17x32xbf16>, vector<17x32xbf16>, vector<17x17xf32> -> vector<17x17xf32>
    %cst_32 = arith.constant 0.176776692 : f32
    %97 = vector.broadcast %cst_32 : f32 to vector<17x17xf32>
    %98 = arith.mulf %96, %97 : vector<17x17xf32>
    %cst_33 = arith.constant dense<0xFF800000> : vector<17xf32>
    %99 = vector.multi_reduction <maximumf>, %98, %cst_33 [1] : vector<17x17xf32> to vector<17xf32>
    %100 = vector.shape_cast %99 : vector<17xf32> to vector<17x1xf32>
    %101 = vector.broadcast %100 : vector<17x1xf32> to vector<17x17xf32>
    %102 = arith.subf %98, %101 : vector<17x17xf32>
    %103 = math.exp %102 : vector<17x17xf32>
    %cst_34 = arith.constant dense<0.000000e+00> : vector<17xf32>
    %104 = vector.multi_reduction <add>, %103, %cst_34 [1] : vector<17x17xf32> to vector<17xf32>
    %105 = vector.shape_cast %104 : vector<17xf32> to vector<17x1xf32>
    %106 = arith.truncf %103 : vector<17x17xf32> to vector<17x17xbf16>
    %cst_35 = arith.constant dense<0.000000e+00> : vector<17x32xf32>
    %107 = tpu.matmul %106, %95, %cst_35 {dimension_numbers = #tpu.dot_dimension_numbers<[1], [0], [0], [1], [0, 0, 1, 1], [], []>} : vector<17x17xbf16>, vector<17x32xbf16>, vector<17x32xf32> -> vector<17x32xf32>
    %108 = tpu.reciprocal %105 {approx = true} : vector<17x1xf32> -> vector<17x1xf32>
    %109 = vector.broadcast %108 : vector<17x1xf32> to vector<17x32xf32>
    %110 = arith.mulf %107, %109 : vector<17x32xf32>
    %111 = arith.truncf %110 : vector<17x32xf32> to vector<17x32xbf16>
    %c64 = arith.constant 64 : index
    %c0_36 = arith.constant 0 : index
    %112 = vector.load %arg6[%c64, %c0_36] : memref<128x128xbf16, #tpu.memory_space<vmem>>, vector<32x128xbf16>
    %cst_37 = arith.constant dense<0.000000e+00> : vector<17x128xf32>
    %113 = tpu.matmul %111, %112, %cst_37 {dimension_numbers = #tpu.dot_dimension_numbers<[1], [0], [0], [1], [0, 0, 1, 1], [], []>} : vector<17x32xbf16>, vector<32x128xbf16>, vector<17x128xf32> -> vector<17x128xf32>
    %114 = arith.addf %89, %113 : vector<17x128xf32>
    %115 = vector.extract_strided_slice %36 {offsets = [0, 96], sizes = [17, 32], strides = [1, 1]} : vector<17x128xf32> to vector<17x32xf32>
    %116 = arith.truncf %115 : vector<17x32xf32> to vector<17x32xbf16>
    %117 = vector.extract_strided_slice %37 {offsets = [0, 96], sizes = [17, 32], strides = [1, 1]} : vector<17x128xf32> to vector<17x32xf32>
    %118 = arith.truncf %117 : vector<17x32xf32> to vector<17x32xbf16>
    %119 = vector.extract_strided_slice %38 {offsets = [0, 96], sizes = [17, 32], strides = [1, 1]} : vector<17x128xf32> to vector<17x32xf32>
    %120 = arith.truncf %119 : vector<17x32xf32> to vector<17x32xbf16>
    %cst_38 = arith.constant dense<0.000000e+00> : vector<17x17xf32>
    %121 = tpu.matmul %116, %118, %cst_38 {dimension_numbers = #tpu.dot_dimension_numbers<[1], [1], [0], [0], [0, 0, 1, 0], [], []>} : vector<17x32xbf16>, vector<17x32xbf16>, vector<17x17xf32> -> vector<17x17xf32>
    %cst_39 = arith.constant 0.176776692 : f32
    %122 = vector.broadcast %cst_39 : f32 to vector<17x17xf32>
    %123 = arith.mulf %121, %122 : vector<17x17xf32>
    %cst_40 = arith.constant dense<0xFF800000> : vector<17xf32>
    %124 = vector.multi_reduction <maximumf>, %123, %cst_40 [1] : vector<17x17xf32> to vector<17xf32>
    %125 = vector.shape_cast %124 : vector<17xf32> to vector<17x1xf32>
    %126 = vector.broadcast %125 : vector<17x1xf32> to vector<17x17xf32>
    %127 = arith.subf %123, %126 : vector<17x17xf32>
    %128 = math.exp %127 : vector<17x17xf32>
    %cst_41 = arith.constant dense<0.000000e+00> : vector<17xf32>
    %129 = vector.multi_reduction <add>, %128, %cst_41 [1] : vector<17x17xf32> to vector<17xf32>
    %130 = vector.shape_cast %129 : vector<17xf32> to vector<17x1xf32>
    %131 = arith.truncf %128 : vector<17x17xf32> to vector<17x17xbf16>
    %cst_42 = arith.constant dense<0.000000e+00> : vector<17x32xf32>
    %132 = tpu.matmul %131, %120, %cst_42 {dimension_numbers = #tpu.dot_dimension_numbers<[1], [0], [0], [1], [0, 0, 1, 1], [], []>} : vector<17x17xbf16>, vector<17x32xbf16>, vector<17x32xf32> -> vector<17x32xf32>
    %133 = tpu.reciprocal %130 {approx = true} : vector<17x1xf32> -> vector<17x1xf32>
    %134 = vector.broadcast %133 : vector<17x1xf32> to vector<17x32xf32>
    %135 = arith.mulf %132, %134 : vector<17x32xf32>
    %136 = arith.truncf %135 : vector<17x32xf32> to vector<17x32xbf16>
    %c96 = arith.constant 96 : index
    %c0_43 = arith.constant 0 : index
    %137 = vector.load %arg6[%c96, %c0_43] : memref<128x128xbf16, #tpu.memory_space<vmem>>, vector<32x128xbf16>
    %cst_44 = arith.constant dense<0.000000e+00> : vector<17x128xf32>
    %138 = tpu.matmul %136, %137, %cst_44 {dimension_numbers = #tpu.dot_dimension_numbers<[1], [0], [0], [1], [0, 0, 1, 1], [], []>} : vector<17x32xbf16>, vector<32x128xbf16>, vector<17x128xf32> -> vector<17x128xf32>
    %139 = arith.addf %114, %138 : vector<17x128xf32>
    %140 = arith.addf %2, %139 : vector<17x128xf32>
    %c0_45 = arith.constant 0 : index
    %c0_46 = arith.constant 0 : index
    %141 = vector.load %arg7[%c0_45, %c0_46] : memref<1x128xbf16, #tpu.memory_space<vmem>>, vector<1x128xbf16>
    %142 = arith.extf %141 : vector<1x128xbf16> to vector<1x128xf32>
    %143 = vector.broadcast %142 : vector<1x128xf32> to vector<17x128xf32>
    %144 = arith.addf %140, %143 : vector<17x128xf32>
    %cst_47 = arith.constant dense<0.000000e+00> : vector<17xf32>
    %145 = vector.multi_reduction <add>, %144, %cst_47 [1] : vector<17x128xf32> to vector<17xf32>
    %146 = vector.shape_cast %145 : vector<17xf32> to vector<17x1xf32>
    %cst_48 = arith.constant 1.280000e+02 : f32
    %147 = vector.broadcast %cst_48 : f32 to vector<17x1xf32>
    %148 = arith.divf %146, %147 : vector<17x1xf32>
    %149 = vector.broadcast %148 : vector<17x1xf32> to vector<17x128xf32>
    %150 = arith.subf %144, %149 : vector<17x128xf32>
    %151 = arith.mulf %150, %150 : vector<17x128xf32>
    %cst_49 = arith.constant dense<0.000000e+00> : vector<17xf32>
    %152 = vector.multi_reduction <add>, %151, %cst_49 [1] : vector<17x128xf32> to vector<17xf32>
    %153 = vector.shape_cast %152 : vector<17xf32> to vector<17x1xf32>
    %cst_50 = arith.constant 1.280000e+02 : f32
    %154 = vector.broadcast %cst_50 : f32 to vector<17x1xf32>
    %155 = arith.divf %153, %154 : vector<17x1xf32>
    %156 = vector.broadcast %148 : vector<17x1xf32> to vector<17x128xf32>
    %157 = arith.subf %144, %156 : vector<17x128xf32>
    %cst_51 = arith.constant 9.99999997E-7 : f32
    %158 = vector.broadcast %cst_51 : f32 to vector<17x1xf32>
    %159 = arith.addf %155, %158 : vector<17x1xf32>
    %160 = math.rsqrt %159 : vector<17x1xf32>
    %161 = vector.broadcast %160 : vector<17x1xf32> to vector<17x128xf32>
    %162 = arith.mulf %157, %161 : vector<17x128xf32>
    %c0_52 = arith.constant 0 : index
    %c0_53 = arith.constant 0 : index
    %163 = vector.load %arg8[%c0_52, %c0_53] : memref<1x128xbf16, #tpu.memory_space<vmem>>, vector<1x128xbf16>
    %164 = arith.extf %163 : vector<1x128xbf16> to vector<1x128xf32>
    %165 = vector.broadcast %164 : vector<1x128xf32> to vector<17x128xf32>
    %166 = arith.mulf %162, %165 : vector<17x128xf32>
    %c0_54 = arith.constant 0 : index
    %c0_55 = arith.constant 0 : index
    %167 = vector.load %arg9[%c0_54, %c0_55] : memref<1x128xbf16, #tpu.memory_space<vmem>>, vector<1x128xbf16>
    %168 = arith.extf %167 : vector<1x128xbf16> to vector<1x128xf32>
    %169 = vector.broadcast %168 : vector<1x128xf32> to vector<17x128xf32>
    %170 = arith.addf %166, %169 : vector<17x128xf32>
    %171 = arith.truncf %170 : vector<17x128xf32> to vector<17x128xbf16>
    %c0_56 = arith.constant 0 : index
    %c0_57 = arith.constant 0 : index
    %172 = vector.load %arg10[%c0_56, %c0_57] : memref<128x512xbf16, #tpu.memory_space<vmem>>, vector<128x512xbf16>
    %cst_58 = arith.constant dense<0.000000e+00> : vector<17x512xf32>
    %173 = tpu.matmul %171, %172, %cst_58 {dimension_numbers = #tpu.dot_dimension_numbers<[1], [0], [0], [1], [0, 0, 1, 1], [], []>} : vector<17x128xbf16>, vector<128x512xbf16>, vector<17x512xf32> -> vector<17x512xf32>
    %c0_59 = arith.constant 0 : index
    %c0_60 = arith.constant 0 : index
    %174 = vector.load %arg11[%c0_59, %c0_60] : memref<1x512xbf16, #tpu.memory_space<vmem>>, vector<1x512xbf16>
    %175 = arith.extf %174 : vector<1x512xbf16> to vector<1x512xf32>
    %176 = vector.broadcast %175 : vector<1x512xf32> to vector<17x512xf32>
    %177 = arith.addf %173, %176 : vector<17x512xf32>
    %178 = arith.mulf %177, %177 : vector<17x512xf32>
    %179 = arith.mulf %177, %178 : vector<17x512xf32>
    %cst_61 = arith.constant 4.471500e-02 : f32
    %180 = vector.broadcast %cst_61 : f32 to vector<17x512xf32>
    %181 = arith.mulf %180, %179 : vector<17x512xf32>
    %182 = arith.addf %177, %181 : vector<17x512xf32>
    %cst_62 = arith.constant 0.797884583 : f32
    %183 = vector.broadcast %cst_62 : f32 to vector<17x512xf32>
    %184 = arith.mulf %183, %182 : vector<17x512xf32>
    %185 = math.tanh %184 : vector<17x512xf32>
    %cst_63 = arith.constant 1.000000e+00 : f32
    %186 = vector.broadcast %cst_63 : f32 to vector<17x512xf32>
    %187 = arith.addf %186, %185 : vector<17x512xf32>
    %cst_64 = arith.constant 5.000000e-01 : f32
    %188 = vector.broadcast %cst_64 : f32 to vector<17x512xf32>
    %189 = arith.mulf %188, %187 : vector<17x512xf32>
    %190 = arith.mulf %177, %189 : vector<17x512xf32>
    %191 = arith.truncf %190 : vector<17x512xf32> to vector<17x512xbf16>
    %c0_65 = arith.constant 0 : index
    %c0_66 = arith.constant 0 : index
    %192 = vector.load %arg12[%c0_65, %c0_66] : memref<512x128xbf16, #tpu.memory_space<vmem>>, vector<512x128xbf16>
    %cst_67 = arith.constant dense<0.000000e+00> : vector<17x128xf32>
    %193 = tpu.matmul %191, %192, %cst_67 {dimension_numbers = #tpu.dot_dimension_numbers<[1], [0], [0], [1], [0, 0, 1, 1], [], []>} : vector<17x512xbf16>, vector<512x128xbf16>, vector<17x128xf32> -> vector<17x128xf32>
    %c0_68 = arith.constant 0 : index
    %c0_69 = arith.constant 0 : index
    %194 = vector.load %arg13[%c0_68, %c0_69] : memref<1x128xbf16, #tpu.memory_space<vmem>>, vector<1x128xbf16>
    %195 = arith.extf %194 : vector<1x128xbf16> to vector<1x128xf32>
    %196 = vector.broadcast %195 : vector<1x128xf32> to vector<17x128xf32>
    %197 = arith.addf %193, %196 : vector<17x128xf32>
    %198 = arith.addf %144, %197 : vector<17x128xf32>
    %199 = arith.truncf %198 : vector<17x128xf32> to vector<17x128xbf16>
    %c0_70 = arith.constant 0 : index
    %c0_71 = arith.constant 0 : index
    %c0_72 = arith.constant 0 : index
    %200 = vector.load %arg14[%c0_70, %c0_71, %c0_72] : memref<1x17x128xbf16, #tpu.memory_space<vmem>>, vector<1x17x128xbf16>
    %201 = vector.shape_cast %200 : vector<1x17x128xbf16> to vector<17x128xbf16>
    %202 = vector.shape_cast %199 : vector<17x128xbf16> to vector<1x17x128xbf16>
    tpu.vector_store %arg14[%c0_70, %c0_71, %c0_72], %202 {strides = array<i32>} : memref<1x17x128xbf16, #tpu.memory_space<vmem>>, vector<1x17x128xbf16>,
    return
  }
  func.func @transform_0(%arg0: i32) -> (i32, i32, i32) {
    %c0_i32 = arith.constant 0 : i32
    %c0_i32_0 = arith.constant 0 : i32
    %c0_i32_1 = arith.constant 0 : i32
    return %arg0, %c0_i32, %c0_i32_0 : i32, i32, i32
  }
  func.func @transform_1(%arg0: i32) -> (i32, i32) {
    %c0_i32 = arith.constant 0 : i32
    %c0_i32_0 = arith.constant 0 : i32
    %c0_i32_1 = arith.constant 0 : i32
    return %c0_i32, %c0_i32_0 : i32, i32
  }
  func.func @transform_2(%arg0: i32) -> (i32, i32) {
    %c0_i32 = arith.constant 0 : i32
    %c0_i32_0 = arith.constant 0 : i32
    %c0_i32_1 = arith.constant 0 : i32
    return %c0_i32, %c0_i32_0 : i32, i32
  }
  func.func @transform_3(%arg0: i32) -> (i32, i32) {
    %c0_i32 = arith.constant 0 : i32
    %c0_i32_0 = arith.constant 0 : i32
    %c0_i32_1 = arith.constant 0 : i32
    return %c0_i32, %c0_i32_0 : i32, i32
  }
  func.func @transform_4(%arg0: i32) -> (i32, i32) {
    %c0_i32 = arith.constant 0 : i32
    %c0_i32_0 = arith.constant 0 : i32
    %c0_i32_1 = arith.constant 0 : i32
    return %c0_i32, %c0_i32_0 : i32, i32
  }
  func.func @transform_5(%arg0: i32) -> (i32, i32) {
    %c0_i32 = arith.constant 0 : i32
    %c0_i32_0 = arith.constant 0 : i32
    %c0_i32_1 = arith.constant 0 : i32
    return %c0_i32, %c0_i32_0 : i32, i32
  }
  func.func @transform_6(%arg0: i32) -> (i32, i32) {
    %c0_i32 = arith.constant 0 : i32
    %c0_i32_0 = arith.constant 0 : i32
    %c0_i32_1 = arith.constant 0 : i32
    return %c0_i32, %c0_i32_0 : i32, i32
  }
  func.func @transform_7(%arg0: i32) -> (i32, i32) {
    %c0_i32 = arith.constant 0 : i32
    %c0_i32_0 = arith.constant 0 : i32
    %c0_i32_1 = arith.constant 0 : i32
    return %c0_i32, %c0_i32_0 : i32, i32
  }
  func.func @transform_8(%arg0: i32) -> (i32, i32) {
    %c0_i32 = arith.constant 0 : i32
    %c0_i32_0 = arith.constant 0 : i32
    %c0_i32_1 = arith.constant 0 : i32
    return %c0_i32, %c0_i32_0 : i32, i32
  }
  func.func @transform_9(%arg0: i32) -> (i32, i32) {
    %c0_i32 = arith.constant 0 : i32
    %c0_i32_0 = arith.constant 0 : i32
    %c0_i32_1 = arith.constant 0 : i32
    return %c0_i32, %c0_i32_0 : i32, i32
  }
  func.func @transform_10(%arg0: i32) -> (i32, i32) {
    %c0_i32 = arith.constant 0 : i32
    %c0_i32_0 = arith.constant 0 : i32
    %c0_i32_1 = arith.constant 0 : i32
    return %c0_i32, %c0_i32_0 : i32, i32
  }
  func.func @transform_11(%arg0: i32) -> (i32, i32) {
    %c0_i32 = arith.constant 0 : i32
    %c0_i32_0 = arith.constant 0 : i32
    %c0_i32_1 = arith.constant 0 : i32
    return %c0_i32, %c0_i32_0 : i32, i32
  }
  func.func @transform_12(%arg0: i32) -> (i32, i32) {
    %c0_i32 = arith.constant 0 : i32
    %c0_i32_0 = arith.constant 0 : i32
    %c0_i32_1 = arith.constant 0 : i32
    return %c0_i32, %c0_i32_0 : i32, i32
  }
  func.func @transform_13(%arg0: i32) -> (i32, i32, i32) {
    %c0_i32 = arith.constant 0 : i32
    %c0_i32_0 = arith.constant 0 : i32
    %c0_i32_1 = arith.constant 0 : i32
    return %arg0, %c0_i32, %c0_i32_0 : i32, i32, i32
  }
}

</mosaic_0001>

<llo_original>
// kernel: dino_projector_forward.4
$region0: #{dino_projector_forward.4}
  #allocation0 [shape = 'u32[]', space=smem, size = 0x4, offset = 0x4, fixed_abs, tag = 'smem constant byte address 0x4 - core index']
  #allocation1 [shape = 'u32[144,128]{1,0:T(1,128)}', space=vmem, size = 0x12000, scoped, tag = 'internal scratch']
  %s0 = inlined_call_operand.vmem [shape: bf16[32,192], index: 0, kind: input, shape index: {}]
  %s1 = inlined_call_operand.vmem [shape: bf16[192,128], index: 1, kind: input, shape index: {}]
  %s2 = inlined_call_operand.vmem [shape: bf16[1,128], index: 2, kind: input, shape index: {}]
  %s3 = inlined_call_operand.vmem [shape: bf16[32,128], index: 3, kind: output, shape index: {}]
  %s4 = sld [smem:[#allocation0]]
  $region22: #{dino_projector_forward.4} parent=0
    _
  %s6 = ssub.s32 1, %s4
  %s7 = scalar_select 0, %s6, %s4
  // Predicated region
  $region2: #{dino_projector_forward.4} parent=0 // pred_check
    _
  $region3: #{dino_projector_forward.4} parent=0 // pred_check_branch
    %9 = sbr.rel (0) target = $region5
  $region4: #{dino_projector_forward.4} parent=0 // pred_region
    _
  $region5: #{dino_projector_forward.4} parent=0 // pred_fallthru
    _
  // Predicated region
  $region6: #{dino_projector_forward.4} parent=0 // pred_check
    _
  $region7: #{dino_projector_forward.4} parent=0 // pred_check_branch
    %11 = sbr.rel (0) target = $region9
  $region8: #{dino_projector_forward.4} parent=0 // pred_region
    _
  $region9: #{dino_projector_forward.4} parent=0 // pred_fallthru
    _
  // Predicated region
  $region10: #{dino_projector_forward.4} parent=0 // pred_check
    _
  $region11: #{dino_projector_forward.4} parent=0 // pred_check_branch
    %13 = sbr.rel (0) target = $region13
  $region12: #{dino_projector_forward.4} parent=0 // pred_region
    _
  $region13: #{dino_projector_forward.4} parent=0 // pred_fallthru
    _
  %v15 = vld [vmem:[%s0] sm:$0xff]
  %v16 = vld [vmem:[%s0 + $0x8] sm:$0xff]
  %v17 = vld [vmem:[%s0 + $0x10] sm:$0xff]
  %v18 = vld [vmem:[%s0 + $0x18] sm:$0xff]
  %v19 = vld [vmem:[%s1] sm:$0xf]
  %v20 = vld [vmem:[%s1 + $0x4] sm:$0xf]
  %v21 = vld [vmem:[%s1 + $0x8] sm:$0xf]
  %v22 = vld [vmem:[%s1 + $0xc] sm:$0xf]
  %v23 = vld [vmem:[%s1 + $0x10] sm:$0xf]
  %v24 = vld [vmem:[%s1 + $0x14] sm:$0xf]
  %v25 = vld [vmem:[%s1 + $0x18] sm:$0xf]
  %v26 = vld [vmem:[%s1 + $0x1c] sm:$0xf]
  %v27 = vld [vmem:[%s1 + $0x20] sm:$0xf]
  %v28 = vld [vmem:[%s1 + $0x24] sm:$0xf]
  %v29 = vld [vmem:[%s1 + $0x28] sm:$0xf]
  %v30 = vld [vmem:[%s1 + $0x2c] sm:$0xf]
  %v31 = vld [vmem:[%s1 + $0x30] sm:$0xf]
  %v32 = vld [vmem:[%s1 + $0x34] sm:$0xf]
  %v33 = vld [vmem:[%s1 + $0x38] sm:$0xf]
  %v34 = vld [vmem:[%s1 + $0x3c] sm:$0xf]
  %v35 = vld [vmem:[%s1 + $0x40] sm:$0xf]
  %v36 = vld [vmem:[%s1 + $0x44] sm:$0xf]
  %v37 = vld [vmem:[%s1 + $0x48] sm:$0xf]
  %v38 = vld [vmem:[%s1 + $0x4c] sm:$0xf]
  %v39 = vld [vmem:[%s1 + $0x50] sm:$0xf]
  %v40 = vld [vmem:[%s1 + $0x54] sm:$0xf]
  %v41 = vld [vmem:[%s1 + $0x58] sm:$0xf]
  %v42 = vld [vmem:[%s1 + $0x5c] sm:$0xf]
  %v43 = vld [vmem:[%s2] sm:$0x1]
  %v44 = vunpack.c.l.bf16 %v43
  %v45 = vlaneseq
  %v46 = vshrl.u32 %v45, 7
  %v47 = vsub.s32 0, %v46
  %v48 = vrot.slane %v44, %v47
  %v53 = vunpack.c.l.b16 %v15
  %v54 = vunpack.c.h.b16 %v15
  %v55 = vunpack.c.l.b16 %v16
  %v56 = vunpack.c.h.b16 %v16
  %v57 = vunpack.c.l.b16 %v17
  %v58 = vunpack.c.h.b16 %v17
  %v59 = vunpack.c.l.b16 %v18
  %v60 = vunpack.c.h.b16 %v18
  %v61 = vpack.c.b16 %v55, %v53
  %v62 = vpack.c.b16 %v56, %v54
  %v63 = vpack.c.b16 %v59, %v57
  %v64 = vpack.c.b16 %v60, %v58
  %v91 = vunpack.c.l.b16 %v19
  %v92 = vunpack.c.l.b16 %v20
  %v93 = vunpack.c.l.b16 %v21
  %v94 = vunpack.c.l.b16 %v22
  %v95 = vunpack.c.l.b16 %v23
  %v96 = vunpack.c.l.b16 %v24
  %v97 = vunpack.c.l.b16 %v25
  %v98 = vunpack.c.l.b16 %v26
  %v99 = vunpack.c.l.b16 %v27
  %v100 = vunpack.c.l.b16 %v28
  %v101 = vunpack.c.l.b16 %v29
  %v102 = vunpack.c.l.b16 %v30
  %v103 = vunpack.c.l.b16 %v31
  %v104 = vunpack.c.l.b16 %v32
  %v105 = vunpack.c.l.b16 %v33
  %v106 = vunpack.c.l.b16 %v34
  %v107 = vunpack.c.l.b16 %v35
  %v108 = vunpack.c.l.b16 %v36
  %v109 = vunpack.c.l.b16 %v37
  %v110 = vunpack.c.l.b16 %v38
  %v111 = vunpack.c.l.b16 %v39
  %v112 = vunpack.c.l.b16 %v40
  %v113 = vunpack.c.l.b16 %v41
  %v114 = vunpack.c.l.b16 %v42
  %v115 = vpack.c.b16 %v92, %v91
  %v116 = vpack.c.b16 %v94, %v93
  %v117 = vpack.c.b16 %v96, %v95
  %v118 = vpack.c.b16 %v98, %v97
  %v119 = vpack.c.b16 %v100, %v99
  %v120 = vpack.c.b16 %v102, %v101
  %v121 = vpack.c.b16 %v104, %v103
  %v122 = vpack.c.b16 %v106, %v105
  %v123 = vpack.c.b16 %v108, %v107
  %v124 = vpack.c.b16 %v110, %v109
  %v125 = vpack.c.b16 %v112, %v111
  %v126 = vpack.c.b16 %v114, %v113
  %vm139 = vcmask 523264
  %v141 = vsel %vm139, %v62, 0
  %v144 = vsel %vm139, %v64, 0
  %146 = vmatprep.subr.bf16.mxu0 0
  %147 = vmatpush1.bf16.msra.mxu0 %v115
  %148 = vmatprep.subr.bf16.mxu0 0
  %149 = vmatpush1.bf16.msra.mxu0 %v116
  %150 = vmatprep.subr.bf16.mxu0 0
  %151 = vmatpush1.bf16.msra.mxu0 %v117
  %152 = vmatprep.subr.bf16.mxu0 0
  %153 = vmatpush1.bf16.msra.mxu0 %v118
  %154 = vmatprep.subr.bf16.mxu0 0
  %155 = vmatpush1.bf16.msra.mxu0 %v119
  %156 = vmatprep.subr.bf16.mxu0 0
  %157 = vmatpush1.bf16.msra.mxu0 %v120
  %158 = vmatprep.subr.bf16.mxu0 0
  %159 = vmatpush1.bf16.msra.mxu0 %v121
  %160 = vmatprep.subr.bf16.mxu0 0
  %161 = vmatpush1.bf16.msra.mxu0 %v122
  %162 = vmatprep.subr.bf16.mxu0 0
  %163 = vmatpush1.bf16.msra.mxu0 %v123
  %164 = vmatprep.subr.bf16.mxu0 0
  %165 = vmatpush1.bf16.msra.mxu0 %v124
  %166 = vmatprep.subr.bf16.mxu0 0
  %167 = vmatpush1.bf16.msra.mxu0 %v125
  %168 = vmatprep.subr.bf16.mxu0 0
  %169 = vmatpush1.bf16.msra.mxu0 %v126
  %170 = vmatprep.subr.bf16.mxu0 0
  %171 = vmatpush1.bf16.msra.mxu0 0
  %172 = vmatprep.subr.bf16.mxu0 0
  %173 = vmatpush1.bf16.msra.mxu0 0
  %174 = vmatprep.subr.bf16.mxu0 0
  %175 = vmatpush1.bf16.msra.mxu0 0
  %176 = vmatprep.subr.bf16.mxu0 0
  %177 = vmatpush1.bf16.msra.mxu0 0
  %178 = vmatprep.mubr.bf16.mxu0 %v141
  %179 = vmatmul.mubr.bf16.gmra.mrb[0].mxu0 %v61
  %v180 = vpop.f32.mrb[0].mxu0
  %v181 = vadd.f32 %v48, %v180
  %v182 = vpop.f32.mrb[0].mxu0
  %v183 = vpop.f32.mrb[0].mxu0
  %v184 = vadd.f32 %v48, %v183
  %v185 = vpop.f32.mrb[0].mxu0
  %186 = vmatprep.mubr.bf16.mxu0 %v144
  %187 = vmatmul.mubr.bf16.gmra.mrb[0].mxu0 %v63
  %v188 = vpop.f32.mrb[0].mxu0
  %v189 = vadd.f32 %v48, %v188
  %v190 = vpop.f32.mrb[0].mxu0
  %v191 = vpop.f32.mrb[0].mxu0
  %v192 = vadd.f32 %v48, %v191
  %v193 = vpop.f32.mrb[0].mxu0
  %194 = vdwg.mxu0
  %v195 = vpack.c.bf16 %v184, %v181
  %v196 = vpack.c.bf16 %v192, %v189
  %v199 = vunpack.c.l.b16 %v195
  %v200 = vunpack.c.h.b16 %v195
  %v201 = vunpack.c.l.b16 %v196
  %v202 = vunpack.c.h.b16 %v196
  %v203 = vpack.c.b16 %v199, %v199
  %v204 = vpack.c.b16 %v200, %v200
  %v205 = vpack.c.b16 %v201, %v201
  %v206 = vpack.c.b16 %v202, %v202
  %211 = vst [vmem:[%s3] sm:$0xf] %v203
  %212 = vst [vmem:[%s3 + $0x4] sm:$0xf] %v204
  %213 = vst [vmem:[%s3 + $0x8] sm:$0xf] %v205
  %214 = vst [vmem:[%s3 + $0xc] sm:$0xf] %v206
  // Predicated region
  $region14: #{dino_projector_forward.4} parent=0 // pred_check
    _
  $region15: #{dino_projector_forward.4} parent=0 // pred_check_branch
    %216 = sbr.rel (0) target = $region17
  $region16: #{dino_projector_forward.4} parent=0 // pred_region
    _
  $region17: #{dino_projector_forward.4} parent=0 // pred_fallthru
    _
  // Predicated region
  $region18: #{dino_projector_forward.4} parent=0 // pred_check
    _
  $region19: #{dino_projector_forward.4} parent=0 // pred_check_branch
    %218 = sbr.rel (0) target = $region21
  $region20: #{dino_projector_forward.4} parent=0 // pred_region
    _
  $region21: #{dino_projector_forward.4} parent=0 // pred_fallthru
    _

// kernel: dino_projector_forward.7
$region0: #{dino_projector_forward.7}
  #allocation0 [shape = 'u32[]', space=smem, size = 0x4, offset = 0x4, fixed_abs, tag = 'smem constant byte address 0x4 - core index']
  #allocation1 [shape = 'u32[144,128]{1,0:T(1,128)}', space=vmem, size = 0x12000, scoped, tag = 'internal scratch']
  %s0 = inlined_call_operand.vmem [shape: bf16[2,128], index: 0, kind: input, shape index: {}]
  %s1 = inlined_call_operand.vmem [shape: bf16[1,128], index: 1, kind: input, shape index: {}]
  %s2 = inlined_call_operand.vmem [shape: bf16[1,128], index: 2, kind: input, shape index: {}]
  %s3 = inlined_call_operand.vmem [shape: bf16[128,256], index: 3, kind: input, shape index: {}]
  %s4 = inlined_call_operand.vmem [shape: bf16[1,256], index: 4, kind: input, shape index: {}]
  %s5 = inlined_call_operand.vmem [shape: bf16[256,256], index: 5, kind: input, shape index: {}]
  %s6 = inlined_call_operand.vmem [shape: bf16[1,256], index: 6, kind: input, shape index: {}]
  %s7 = inlined_call_operand.vmem [shape: bf16[256,128], index: 7, kind: input, shape index: {}]
  %s8 = inlined_call_operand.vmem [shape: bf16[1,128], index: 8, kind: input, shape index: {}]
  %s9 = inlined_call_operand.vmem [shape: bf16[128,256], index: 9, kind: input, shape index: {}]
  %s10 = inlined_call_operand.hbm [shape: f32[2,256], index: 10, kind: output, shape index: {}]
  %s11 = sld [smem:[#allocation0]]
  $region50: #{dino_projector_forward.7} parent=0
    _
  %s13 = ssub.s32 1, %s11
  %s14 = scalar_select 0, %s13, %s11
  $region1: #{dino_projector_forward.7} parent=0
    #allocation2 [shape = 'u8[2048]{0}', space=vmem, size = 0x800, scoped, tag = 'output window, operand 0, single buffered']
    #allocation3 [shape = 's32[1]{0}', space=sflag, size = 0x4, scoped, tag = 'scoped memory for dino_projector_forward.7']
    %15 = vsyncpa [#allocation3], 0
    // Predicated region
    $region2: #{dino_projector_forward.7} parent=1 // pred_check
      _
    $region3: #{dino_projector_forward.7} parent=1 // pred_check_branch
      %17 = sbr.rel (0) target = $region5
    $region4: #{dino_projector_forward.7} parent=1 // pred_region
      _
    $region5: #{dino_projector_forward.7} parent=1 // pred_fallthru
      _
    // Predicated region
    $region6: #{dino_projector_forward.7} parent=1 // pred_check
      _
    $region7: #{dino_projector_forward.7} parent=1 // pred_check_branch
      %19 = sbr.rel (0) target = $region9
    $region8: #{dino_projector_forward.7} parent=1 // pred_region
      _
    $region9: #{dino_projector_forward.7} parent=1 // pred_fallthru
      _
    // Predicated region
    $region10: #{dino_projector_forward.7} parent=1 // pred_check
      _
    $region11: #{dino_projector_forward.7} parent=1 // pred_check_branch
      %21 = sbr.rel (0) target = $region13
    $region12: #{dino_projector_forward.7} parent=1 // pred_region
      _
    $region13: #{dino_projector_forward.7} parent=1 // pred_fallthru
      _
    // Predicated region
    $region14: #{dino_projector_forward.7} parent=1 // pred_check
      _
    $region15: #{dino_projector_forward.7} parent=1 // pred_check_branch
      %23 = sbr.rel (0) target = $region17
    $region16: #{dino_projector_forward.7} parent=1 // pred_region
      _
    $region17: #{dino_projector_forward.7} parent=1 // pred_fallthru
      _
    // Predicated region
    $region18: #{dino_projector_forward.7} parent=1 // pred_check
      _
    $region19: #{dino_projector_forward.7} parent=1 // pred_check_branch
      %25 = sbr.rel (0) target = $region21
    $region20: #{dino_projector_forward.7} parent=1 // pred_region
      _
    $region21: #{dino_projector_forward.7} parent=1 // pred_fallthru
      _
    // Predicated region
    $region22: #{dino_projector_forward.7} parent=1 // pred_check
      _
    $region23: #{dino_projector_forward.7} parent=1 // pred_check_branch
      %27 = sbr.rel (0) target = $region25
    $region24: #{dino_projector_forward.7} parent=1 // pred_region
      _
    $region25: #{dino_projector_forward.7} parent=1 // pred_fallthru
      _
    // Predicated region
    $region26: #{dino_projector_forward.7} parent=1 // pred_check
      _
    $region27: #{dino_projector_forward.7} parent=1 // pred_check_branch
      %29 = sbr.rel (0) target = $region29
    $region28: #{dino_projector_forward.7} parent=1 // pred_region
      _
    $region29: #{dino_projector_forward.7} parent=1 // pred_fallthru
      _
    // Predicated region
    $region30: #{dino_projector_forward.7} parent=1 // pred_check
      _
    $region31: #{dino_projector_forward.7} parent=1 // pred_check_branch
      %31 = sbr.rel (0) target = $region33
    $region32: #{dino_projector_forward.7} parent=1 // pred_region
      _
    $region33: #{dino_projector_forward.7} parent=1 // pred_fallthru
      _
    // Predicated region
    $region34: #{dino_projector_forward.7} parent=1 // pred_check
      _
    $region35: #{dino_projector_forward.7} parent=1 // pred_check_branch
      %33 = sbr.rel (0) target = $region37
    $region36: #{dino_projector_forward.7} parent=1 // pred_region
      _
    $region37: #{dino_projector_forward.7} parent=1 // pred_fallthru
      _
    // Predicated region
    $region38: #{dino_projector_forward.7} parent=1 // pred_check
      _
    $region39: #{dino_projector_forward.7} parent=1 // pred_check_branch
      %35 = sbr.rel (0) target = $region41
    $region40: #{dino_projector_forward.7} parent=1 // pred_region
      _
    $region41: #{dino_projector_forward.7} parent=1 // pred_fallthru
      _
    %v37 = vld [vmem:[%s0] sm:$0x1]
    %v38 = vunpack.c.l.bf16 %v37
    %vm39 = vcmask 1041408
    %v40 = vsel %vm39, %v38, 0.0
    %41 = vadd.xlane.f32.xlu0 %v40
    %v42 = vpop.xlane.xlu0 %41
    %v43 = vrcp.pop 128.0
    %v44 = vmul.f32 %v42, %v43
    %v45 = vsub.f32 %v38, %v44
    %v46 = vmul.f32 %v45, %v45
    %v47 = vsel %vm39, %v46, 0.0
    %48 = vadd.xlane.f32.xlu0 %v47
    %v49 = vpop.xlane.xlu0 %48
    %v50 = vmul.f32 %v49, %v43
    %v51 = vadd.f32 %v50, 1e-06
    %v52 = vrsqrt.pop %v51
    %v53 = vmul.f32 %v45, %v52
    %v54 = vld [vmem:[%s1] sm:$0x1]
    %v55 = vunpack.c.l.bf16 %v54
    %v56 = vlaneseq
    %v57 = vshrl.u32 %v56, 7
    %v58 = vsub.s32 0, %v57
    %v59 = vrot.slane %v55, %v58
    %v60 = vmul.f32 %v53, %v59
    %v61 = vld [vmem:[%s2] sm:$0x1]
    %v62 = vunpack.c.l.bf16 %v61
    %v63 = vlaneseq
    %v64 = vshrl.u32 %v63, 7
    %v65 = vsub.s32 0, %v64
    %v66 = vrot.slane %v62, %v65
    %v67 = vadd.f32 %v60, %v66
    %v68 = vpack.c.bf16 %v67, %v67
    %v69 = vld [vmem:[%s3] sm:$0xff]
    %v70 = vld [vmem:[%s3 + $0x8] sm:$0xff]
    %v71 = vld [vmem:[%s3 + $0x10] sm:$0xff]
    %v72 = vld [vmem:[%s3 + $0x18] sm:$0xff]
    %v73 = vld [vmem:[%s3 + $0x20] sm:$0xff]
    %v74 = vld [vmem:[%s3 + $0x28] sm:$0xff]
    %v75 = vld [vmem:[%s3 + $0x30] sm:$0xff]
    %v76 = vld [vmem:[%s3 + $0x38] sm:$0xff]
    %v77 = vld [vmem:[%s3 + $0x40] sm:$0xff]
    %v78 = vld [vmem:[%s3 + $0x48] sm:$0xff]
    %v79 = vld [vmem:[%s3 + $0x50] sm:$0xff]
    %v80 = vld [vmem:[%s3 + $0x58] sm:$0xff]
    %v81 = vld [vmem:[%s3 + $0x60] sm:$0xff]
    %v82 = vld [vmem:[%s3 + $0x68] sm:$0xff]
    %v83 = vld [vmem:[%s3 + $0x70] sm:$0xff]
    %v84 = vld [vmem:[%s3 + $0x78] sm:$0xff]
    %v85 = vld [vmem:[%s4] sm:$0x3]
    %v86 = vunpack.c.l.bf16 %v85
    %v88 = vlaneseq
    %v89 = vshrl.u32 %v88, 7
    %v90 = vsub.s32 0, %v89
    %v91 = vrot.slane %v86, %v90
    %v92 = vlaneseq
    %v93 = vshrl.u32 %v92, 7
    %v94 = vsub.s32 2, %v93
    %v95 = vrot.slane %v86, %v94
    %v98 = vlaneseq
    %v99 = vshrl.u32 %v98, 7
    %v100 = vsub.s32 0, %v99
    %v101 = vrot.slane %v91, %v100
    %v102 = vlaneseq
    %v103 = vshrl.u32 %v102, 7
    %v104 = vsub.s32 0, %v103
    %v105 = vrot.slane %v95, %v104
    %v122 = vunpack.c.l.b16 %v69
    %v123 = vunpack.c.h.b16 %v69
    %v124 = vunpack.c.l.b16 %v70
    %v125 = vunpack.c.h.b16 %v70
    %v126 = vunpack.c.l.b16 %v71
    %v127 = vunpack.c.h.b16 %v71
    %v128 = vunpack.c.l.b16 %v72
    %v129 = vunpack.c.h.b16 %v72
    %v130 = vunpack.c.l.b16 %v73
    %v131 = vunpack.c.h.b16 %v73
    %v132 = vunpack.c.l.b16 %v74
    %v133 = vunpack.c.h.b16 %v74
    %v134 = vunpack.c.l.b16 %v75
    %v135 = vunpack.c.h.b16 %v75
    %v136 = vunpack.c.l.b16 %v76
    %v137 = vunpack.c.h.b16 %v76
    %v138 = vunpack.c.l.b16 %v77
    %v139 = vunpack.c.h.b16 %v77
    %v140 = vunpack.c.l.b16 %v78
    %v141 = vunpack.c.h.b16 %v78
    %v142 = vunpack.c.l.b16 %v79
    %v143 = vunpack.c.h.b16 %v79
    %v144 = vunpack.c.l.b16 %v80
    %v145 = vunpack.c.h.b16 %v80
    %v146 = vunpack.c.l.b16 %v81
    %v147 = vunpack.c.h.b16 %v81
    %v148 = vunpack.c.l.b16 %v82
    %v149 = vunpack.c.h.b16 %v82
    %v150 = vunpack.c.l.b16 %v83
    %v151 = vunpack.c.h.b16 %v83
    %v152 = vunpack.c.l.b16 %v84
    %v153 = vunpack.c.h.b16 %v84
    %v154 = vpack.c.b16 %v124, %v122
    %v155 = vpack.c.b16 %v125, %v123
    %v156 = vpack.c.b16 %v128, %v126
    %v157 = vpack.c.b16 %v129, %v127
    %v158 = vpack.c.b16 %v132, %v130
    %v159 = vpack.c.b16 %v133, %v131
    %v160 = vpack.c.b16 %v136, %v134
    %v161 = vpack.c.b16 %v137, %v135
    %v162 = vpack.c.b16 %v140, %v138
    %v163 = vpack.c.b16 %v141, %v139
    %v164 = vpack.c.b16 %v144, %v142
    %v165 = vpack.c.b16 %v145, %v143
    %v166 = vpack.c.b16 %v148, %v146
    %v167 = vpack.c.b16 %v149, %v147
    %v168 = vpack.c.b16 %v152, %v150
    %v169 = vpack.c.b16 %v153, %v151
    %186 = vmatprep.subr.bf16.mxu0 %v155
    %187 = vmatpush1.bf16.msra.mxu0 %v154
    %188 = vmatprep.subr.bf16.mxu0 %v157
    %189 = vmatpush1.bf16.msra.mxu0 %v156
    %190 = vmatprep.subr.bf16.mxu0 %v159
    %191 = vmatpush1.bf16.msra.mxu0 %v158
    %192 = vmatprep.subr.bf16.mxu0 %v161
    %193 = vmatpush1.bf16.msra.mxu0 %v160
    %194 = vmatprep.subr.bf16.mxu0 %v163
    %195 = vmatpush1.bf16.msra.mxu0 %v162
    %196 = vmatprep.subr.bf16.mxu0 %v165
    %197 = vmatpush1.bf16.msra.mxu0 %v164
    %198 = vmatprep.subr.bf16.mxu0 %v167
    %199 = vmatpush1.bf16.msra.mxu0 %v166
    %200 = vmatprep.subr.bf16.mxu0 %v169
    %201 = vmatpush1.bf16.msra.mxu0 %v168
    %202 = vmatprep.subr.bf16.mxu0 0
    %203 = vmatpush1.bf16.msra.mxu0 0
    %204 = vmatprep.subr.bf16.mxu0 0
    %205 = vmatpush1.bf16.msra.mxu0 0
    %206 = vmatprep.subr.bf16.mxu0 0
    %207 = vmatpush1.bf16.msra.mxu0 0
    %208 = vmatprep.subr.bf16.mxu0 0
    %209 = vmatpush1.bf16.msra.mxu0 0
    %210 = vmatprep.subr.bf16.mxu0 0
    %211 = vmatpush1.bf16.msra.mxu0 0
    %212 = vmatprep.subr.bf16.mxu0 0
    %213 = vmatpush1.bf16.msra.mxu0 0
    %214 = vmatprep.subr.bf16.mxu0 0
    %215 = vmatpush1.bf16.msra.mxu0 0
    %216 = vmatprep.subr.bf16.mxu0 0
    %217 = vmatpush1.bf16.msra.mxu0 0
    %218 = vmatprep.mubr.bf16.mxu0 0
    %219 = vmatmul.mubr.bf16.gmra.mrb[0].mxu0 %v68
    %v220 = vpop.f32.mrb[0].mxu0
    %v221 = vadd.f32 %v101, %v220
    %v222 = vpop.f32.mrb[0].mxu0
    %v223 = vadd.f32 %v105, %v222
    %v224 = vpop.f32.mrb[0].mxu0
    %v225 = vpop.f32.mrb[0].mxu0
    %226 = vdwg.mxu0
    %v227 = vmul.f32 %v221, %v221
    %v228 = vmul.f32 %v223, %v223
    %v229 = vmul.f32 %v221, %v227
    %v230 = vmul.f32 %v223, %v228
    %v231 = vmul.f32 %v229, 0.044715
    %v232 = vmul.f32 %v230, 0.044715
    %v233 = vadd.f32 %v221, %v231
    %v234 = vadd.f32 %v223, %v232
    %v235 = vmul.f32 %v233, 0.7978846
    %v236 = vmul.f32 %v234, 0.7978846
    %v237 = vtanh.pop %v235
    %v238 = vtanh.pop %v236
    %v239 = vadd.f32 %v237, 1.0
    %v240 = vadd.f32 %v238, 1.0
    %v241 = vmul.f32 %v239, 0.5
    %v242 = vmul.f32 %v240, 0.5
    %v243 = vmul.f32 %v221, %v241
    %v244 = vmul.f32 %v223, %v242
    %v245 = vpack.c.bf16 %v243, %v243
    %v246 = vpack.c.bf16 %v244, %v244
    %v247 = vld [vmem:[%s5] sm:$0xff]
    %v248 = vld [vmem:[%s5 + $0x8] sm:$0xff]
    %v249 = vld [vmem:[%s5 + $0x10] sm:$0xff]
    %v250 = vld [vmem:[%s5 + $0x18] sm:$0xff]
    %v251 = vld [vmem:[%s5 + $0x20] sm:$0xff]
    %v252 = vld [vmem:[%s5 + $0x28] sm:$0xff]
    %v253 = vld [vmem:[%s5 + $0x30] sm:$0xff]
    %v254 = vld [vmem:[%s5 + $0x38] sm:$0xff]
    %v255 = vld [vmem:[%s5 + $0x40] sm:$0xff]
    %v256 = vld [vmem:[%s5 + $0x48] sm:$0xff]
    %v257 = vld [vmem:[%s5 + $0x50] sm:$0xff]
    %v258 = vld [vmem:[%s5 + $0x58] sm:$0xff]
    %v259 = vld [vmem:[%s5 + $0x60] sm:$0xff]
    %v260 = vld [vmem:[%s5 + $0x68] sm:$0xff]
    %v261 = vld [vmem:[%s5 + $0x70] sm:$0xff]
    %v262 = vld [vmem:[%s5 + $0x78] sm:$0xff]
    %v263 = vld [vmem:[%s5 + $0x80] sm:$0xff]
    %v264 = vld [vmem:[%s5 + $0x88] sm:$0xff]
    %v265 = vld [vmem:[%s5 + $0x90] sm:$0xff]
    %v266 = vld [vmem:[%s5 + $0x98] sm:$0xff]
    %v267 = vld [vmem:[%s5 + $0xa0] sm:$0xff]
    %v268 = vld [vmem:[%s5 + $0xa8] sm:$0xff]
    %v269 = vld [vmem:[%s5 + $0xb0] sm:$0xff]
    %v270 = vld [vmem:[%s5 + $0xb8] sm:$0xff]
    %v271 = vld [vmem:[%s5 + $0xc0] sm:$0xff]
    %v272 = vld [vmem:[%s5 + $0xc8] sm:$0xff]
    %v273 = vld [vmem:[%s5 + $0xd0] sm:$0xff]
    %v274 = vld [vmem:[%s5 + $0xd8] sm:$0xff]
    %v275 = vld [vmem:[%s5 + $0xe0] sm:$0xff]
    %v276 = vld [vmem:[%s5 + $0xe8] sm:$0xff]
    %v277 = vld [vmem:[%s5 + $0xf0] sm:$0xff]
    %v278 = vld [vmem:[%s5 + $0xf8] sm:$0xff]
    %v279 = vld [vmem:[%s6] sm:$0x3]
    %v280 = vunpack.c.l.bf16 %v279
    %v282 = vlaneseq
    %v283 = vshrl.u32 %v282, 7
    %v284 = vsub.s32 0, %v283
    %v285 = vrot.slane %v280, %v284
    %v286 = vlaneseq
    %v287 = vshrl.u32 %v286, 7
    %v288 = vsub.s32 2, %v287
    %v289 = vrot.slane %v280, %v288
    %v292 = vlaneseq
    %v293 = vshrl.u32 %v292, 7
    %v294 = vsub.s32 0, %v293
    %v295 = vrot.slane %v285, %v294
    %v296 = vlaneseq
    %v297 = vshrl.u32 %v296, 7
    %v298 = vsub.s32 0, %v297
    %v299 = vrot.slane %v289, %v298
    %v332 = vunpack.c.l.b16 %v247
    %v333 = vunpack.c.h.b16 %v247
    %v334 = vunpack.c.l.b16 %v248
    %v335 = vunpack.c.h.b16 %v248
    %v336 = vunpack.c.l.b16 %v249
    %v337 = vunpack.c.h.b16 %v249
    %v338 = vunpack.c.l.b16 %v250
    %v339 = vunpack.c.h.b16 %v250
    %v340 = vunpack.c.l.b16 %v251
    %v341 = vunpack.c.h.b16 %v251
    %v342 = vunpack.c.l.b16 %v252
    %v343 = vunpack.c.h.b16 %v252
    %v344 = vunpack.c.l.b16 %v253
    %v345 = vunpack.c.h.b16 %v253
    %v346 = vunpack.c.l.b16 %v254
    %v347 = vunpack.c.h.b16 %v254
    %v348 = vunpack.c.l.b16 %v255
    %v349 = vunpack.c.h.b16 %v255
    %v350 = vunpack.c.l.b16 %v256
    %v351 = vunpack.c.h.b16 %v256
    %v352 = vunpack.c.l.b16 %v257
    %v353 = vunpack.c.h.b16 %v257
    %v354 = vunpack.c.l.b16 %v258
    %v355 = vunpack.c.h.b16 %v258
    %v356 = vunpack.c.l.b16 %v259
    %v357 = vunpack.c.h.b16 %v259
    %v358 = vunpack.c.l.b16 %v260
    %v359 = vunpack.c.h.b16 %v260
    %v360 = vunpack.c.l.b16 %v261
    %v361 = vunpack.c.h.b16 %v261
    %v362 = vunpack.c.l.b16 %v262
    %v363 = vunpack.c.h.b16 %v262
    %v364 = vunpack.c.l.b16 %v263
    %v365 = vunpack.c.h.b16 %v263
    %v366 = vunpack.c.l.b16 %v264
    %v367 = vunpack.c.h.b16 %v264
    %v368 = vunpack.c.l.b16 %v265
    %v369 = vunpack.c.h.b16 %v265
    %v370 = vunpack.c.l.b16 %v266
    %v371 = vunpack.c.h.b16 %v266
    %v372 = vunpack.c.l.b16 %v267
    %v373 = vunpack.c.h.b16 %v267
    %v374 = vunpack.c.l.b16 %v268
    %v375 = vunpack.c.h.b16 %v268
    %v376 = vunpack.c.l.b16 %v269
    %v377 = vunpack.c.h.b16 %v269
    %v378 = vunpack.c.l.b16 %v270
    %v379 = vunpack.c.h.b16 %v270
    %v380 = vunpack.c.l.b16 %v271
    %v381 = vunpack.c.h.b16 %v271
    %v382 = vunpack.c.l.b16 %v272
    %v383 = vunpack.c.h.b16 %v272
    %v384 = vunpack.c.l.b16 %v273
    %v385 = vunpack.c.h.b16 %v273
    %v386 = vunpack.c.l.b16 %v274
    %v387 = vunpack.c.h.b16 %v274
    %v388 = vunpack.c.l.b16 %v275
    %v389 = vunpack.c.h.b16 %v275
    %v390 = vunpack.c.l.b16 %v276
    %v391 = vunpack.c.h.b16 %v276
    %v392 = vunpack.c.l.b16 %v277
    %v393 = vunpack.c.h.b16 %v277
    %v394 = vunpack.c.l.b16 %v278
    %v395 = vunpack.c.h.b16 %v278
    %v396 = vpack.c.b16 %v334, %v332
    %v397 = vpack.c.b16 %v335, %v333
    %v398 = vpack.c.b16 %v338, %v336
    %v399 = vpack.c.b16 %v339, %v337
    %v400 = vpack.c.b16 %v342, %v340
    %v401 = vpack.c.b16 %v343, %v341
    %v402 = vpack.c.b16 %v346, %v344
    %v403 = vpack.c.b16 %v347, %v345
    %v404 = vpack.c.b16 %v350, %v348
    %v405 = vpack.c.b16 %v351, %v349
    %v406 = vpack.c.b16 %v354, %v352
    %v407 = vpack.c.b16 %v355, %v353
    %v408 = vpack.c.b16 %v358, %v356
    %v409 = vpack.c.b16 %v359, %v357
    %v410 = vpack.c.b16 %v362, %v360
    %v411 = vpack.c.b16 %v363, %v361
    %v412 = vpack.c.b16 %v366, %v364
    %v413 = vpack.c.b16 %v367, %v365
    %v414 = vpack.c.b16 %v370, %v368
    %v415 = vpack.c.b16 %v371, %v369
    %v416 = vpack.c.b16 %v374, %v372
    %v417 = vpack.c.b16 %v375, %v373
    %v418 = vpack.c.b16 %v378, %v376
    %v419 = vpack.c.b16 %v379, %v377
    %v420 = vpack.c.b16 %v382, %v380
    %v421 = vpack.c.b16 %v383, %v381
    %v422 = vpack.c.b16 %v386, %v384
    %v423 = vpack.c.b16 %v387, %v385
    %v424 = vpack.c.b16 %v390, %v388
    %v425 = vpack.c.b16 %v391, %v389
    %v426 = vpack.c.b16 %v394, %v392
    %v427 = vpack.c.b16 %v395, %v393
    %460 = vmatprep.subr.bf16.mxu0 %v397
    %461 = vmatpush1.bf16.msra.mxu0 %v396
    %462 = vmatprep.subr.bf16.mxu0 %v399
    %463 = vmatpush1.bf16.msra.mxu0 %v398
    %464 = vmatprep.subr.bf16.mxu0 %v401
    %465 = vmatpush1.bf16.msra.mxu0 %v400
    %466 = vmatprep.subr.bf16.mxu0 %v403
    %467 = vmatpush1.bf16.msra.mxu0 %v402
    %468 = vmatprep.subr.bf16.mxu0 %v405
    %469 = vmatpush1.bf16.msra.mxu0 %v404
    %470 = vmatprep.subr.bf16.mxu0 %v407
    %471 = vmatpush1.bf16.msra.mxu0 %v406
    %472 = vmatprep.subr.bf16.mxu0 %v409
    %473 = vmatpush1.bf16.msra.mxu0 %v408
    %474 = vmatprep.subr.bf16.mxu0 %v411
    %475 = vmatpush1.bf16.msra.mxu0 %v410
    %476 = vmatprep.subr.bf16.mxu0 %v413
    %477 = vmatpush1.bf16.msra.mxu0 %v412
    %478 = vmatprep.subr.bf16.mxu0 %v415
    %479 = vmatpush1.bf16.msra.mxu0 %v414
    %480 = vmatprep.subr.bf16.mxu0 %v417
    %481 = vmatpush1.bf16.msra.mxu0 %v416
    %482 = vmatprep.subr.bf16.mxu0 %v419
    %483 = vmatpush1.bf16.msra.mxu0 %v418
    %484 = vmatprep.subr.bf16.mxu0 %v421
    %485 = vmatpush1.bf16.msra.mxu0 %v420
    %486 = vmatprep.subr.bf16.mxu0 %v423
    %487 = vmatpush1.bf16.msra.mxu0 %v422
    %488 = vmatprep.subr.bf16.mxu0 %v425
    %489 = vmatpush1.bf16.msra.mxu0 %v424
    %490 = vmatprep.subr.bf16.mxu0 %v427
    %491 = vmatpush1.bf16.msra.mxu0 %v426
    %492 = vmatprep.mubr.bf16.mxu0 %v246
    %493 = vmatmul.mubr.bf16.gmra.mrb[0].mxu0 %v245
    %v494 = vpop.f32.mrb[0].mxu0
    %v495 = vadd.f32 %v295, %v494
    %v496 = vpop.f32.mrb[0].mxu0
    %v497 = vadd.f32 %v299, %v496
    %v498 = vpop.f32.mrb[0].mxu0
    %v499 = vpop.f32.mrb[0].mxu0
    %500 = vdwg.mxu0
    %v501 = vmul.f32 %v495, %v495
    %v502 = vmul.f32 %v497, %v497
    %v503 = vmul.f32 %v495, %v501
    %v504 = vmul.f32 %v497, %v502
    %v505 = vmul.f32 %v503, 0.044715
    %v506 = vmul.f32 %v504, 0.044715
    %v507 = vadd.f32 %v495, %v505
    %v508 = vadd.f32 %v497, %v506
    %v509 = vmul.f32 %v507, 0.7978846
    %v510 = vmul.f32 %v508, 0.7978846
    %v511 = vtanh.pop %v509
    %v512 = vtanh.pop %v510
    %v513 = vadd.f32 %v511, 1.0
    %v514 = vadd.f32 %v512, 1.0
    %v515 = vmul.f32 %v513, 0.5
    %v516 = vmul.f32 %v514, 0.5
    %v517 = vmul.f32 %v495, %v515
    %v518 = vmul.f32 %v497, %v516
    %v519 = vpack.c.bf16 %v517, %v517
    %v520 = vpack.c.bf16 %v518, %v518
    %v521 = vld [vmem:[%s7] sm:$0xf]
    %v522 = vld [vmem:[%s7 + $0x4] sm:$0xf]
    %v523 = vld [vmem:[%s7 + $0x8] sm:$0xf]
    %v524 = vld [vmem:[%s7 + $0xc] sm:$0xf]
    %v525 = vld [vmem:[%s7 + $0x10] sm:$0xf]
    %v526 = vld [vmem:[%s7 + $0x14] sm:$0xf]
    %v527 = vld [vmem:[%s7 + $0x18] sm:$0xf]
    %v528 = vld [vmem:[%s7 + $0x1c] sm:$0xf]
    %v529 = vld [vmem:[%s7 + $0x20] sm:$0xf]
    %v530 = vld [vmem:[%s7 + $0x24] sm:$0xf]
    %v531 = vld [vmem:[%s7 + $0x28] sm:$0xf]
    %v532 = vld [vmem:[%s7 + $0x2c] sm:$0xf]
    %v533 = vld [vmem:[%s7 + $0x30] sm:$0xf]
    %v534 = vld [vmem:[%s7 + $0x34] sm:$0xf]
    %v535 = vld [vmem:[%s7 + $0x38] sm:$0xf]
    %v536 = vld [vmem:[%s7 + $0x3c] sm:$0xf]
    %v537 = vld [vmem:[%s7 + $0x40] sm:$0xf]
    %v538 = vld [vmem:[%s7 + $0x44] sm:$0xf]
    %v539 = vld [vmem:[%s7 + $0x48] sm:$0xf]
    %v540 = vld [vmem:[%s7 + $0x4c] sm:$0xf]
    %v541 = vld [vmem:[%s7 + $0x50] sm:$0xf]
    %v542 = vld [vmem:[%s7 + $0x54] sm:$0xf]
    %v543 = vld [vmem:[%s7 + $0x58] sm:$0xf]
    %v544 = vld [vmem:[%s7 + $0x5c] sm:$0xf]
    %v545 = vld [vmem:[%s7 + $0x60] sm:$0xf]
    %v546 = vld [vmem:[%s7 + $0x64] sm:$0xf]
    %v547 = vld [vmem:[%s7 + $0x68] sm:$0xf]
    %v548 = vld [vmem:[%s7 + $0x6c] sm:$0xf]
    %v549 = vld [vmem:[%s7 + $0x70] sm:$0xf]
    %v550 = vld [vmem:[%s7 + $0x74] sm:$0xf]
    %v551 = vld [vmem:[%s7 + $0x78] sm:$0xf]
    %v552 = vld [vmem:[%s7 + $0x7c] sm:$0xf]
    %v553 = vld [vmem:[%s8] sm:$0x1]
    %v554 = vunpack.c.l.bf16 %v553
    %v555 = vlaneseq
    %v556 = vshrl.u32 %v555, 7
    %v557 = vsub.s32 0, %v556
    %v558 = vrot.slane %v554, %v557
    %v591 = vunpack.c.l.b16 %v521
    %v592 = vunpack.c.l.b16 %v522
    %v593 = vunpack.c.l.b16 %v523
    %v594 = vunpack.c.l.b16 %v524
    %v595 = vunpack.c.l.b16 %v525
    %v596 = vunpack.c.l.b16 %v526
    %v597 = vunpack.c.l.b16 %v527
    %v598 = vunpack.c.l.b16 %v528
    %v599 = vunpack.c.l.b16 %v529
    %v600 = vunpack.c.l.b16 %v530
    %v601 = vunpack.c.l.b16 %v531
    %v602 = vunpack.c.l.b16 %v532
    %v603 = vunpack.c.l.b16 %v533
    %v604 = vunpack.c.l.b16 %v534
    %v605 = vunpack.c.l.b16 %v535
    %v606 = vunpack.c.l.b16 %v536
    %v607 = vunpack.c.l.b16 %v537
    %v608 = vunpack.c.l.b16 %v538
    %v609 = vunpack.c.l.b16 %v539
    %v610 = vunpack.c.l.b16 %v540
    %v611 = vunpack.c.l.b16 %v541
    %v612 = vunpack.c.l.b16 %v542
    %v613 = vunpack.c.l.b16 %v543
    %v614 = vunpack.c.l.b16 %v544
    %v615 = vunpack.c.l.b16 %v545
    %v616 = vunpack.c.l.b16 %v546
    %v617 = vunpack.c.l.b16 %v547
    %v618 = vunpack.c.l.b16 %v548
    %v619 = vunpack.c.l.b16 %v549
    %v620 = vunpack.c.l.b16 %v550
    %v621 = vunpack.c.l.b16 %v551
    %v622 = vunpack.c.l.b16 %v552
    %v623 = vpack.c.b16 %v592, %v591
    %v624 = vpack.c.b16 %v594, %v593
    %v625 = vpack.c.b16 %v596, %v595
    %v626 = vpack.c.b16 %v598, %v597
    %v627 = vpack.c.b16 %v600, %v599
    %v628 = vpack.c.b16 %v602, %v601
    %v629 = vpack.c.b16 %v604, %v603
    %v630 = vpack.c.b16 %v606, %v605
    %v631 = vpack.c.b16 %v608, %v607
    %v632 = vpack.c.b16 %v610, %v609
    %v633 = vpack.c.b16 %v612, %v611
    %v634 = vpack.c.b16 %v614, %v613
    %v635 = vpack.c.b16 %v616, %v615
    %v636 = vpack.c.b16 %v618, %v617
    %v637 = vpack.c.b16 %v620, %v619
    %v638 = vpack.c.b16 %v622, %v621
    %655 = vmatprep.subr.bf16.mxu0 0
    %656 = vmatpush1.bf16.msra.mxu0 %v623
    %657 = vmatprep.subr.bf16.mxu0 0
    %658 = vmatpush1.bf16.msra.mxu0 %v624
    %659 = vmatprep.subr.bf16.mxu0 0
    %660 = vmatpush1.bf16.msra.mxu0 %v625
    %661 = vmatprep.subr.bf16.mxu0 0
    %662 = vmatpush1.bf16.msra.mxu0 %v626
    %663 = vmatprep.subr.bf16.mxu0 0
    %664 = vmatpush1.bf16.msra.mxu0 %v627
    %665 = vmatprep.subr.bf16.mxu0 0
    %666 = vmatpush1.bf16.msra.mxu0 %v628
    %667 = vmatprep.subr.bf16.mxu0 0
    %668 = vmatpush1.bf16.msra.mxu0 %v629
    %669 = vmatprep.subr.bf16.mxu0 0
    %670 = vmatpush1.bf16.msra.mxu0 %v630
    %671 = vmatprep.subr.bf16.mxu0 0
    %672 = vmatpush1.bf16.msra.mxu0 %v631
    %673 = vmatprep.subr.bf16.mxu0 0
    %674 = vmatpush1.bf16.msra.mxu0 %v632
    %675 = vmatprep.subr.bf16.mxu0 0
    %676 = vmatpush1.bf16.msra.mxu0 %v633
    %677 = vmatprep.subr.bf16.mxu0 0
    %678 = vmatpush1.bf16.msra.mxu0 %v634
    %679 = vmatprep.subr.bf16.mxu0 0
    %680 = vmatpush1.bf16.msra.mxu0 %v635
    %681 = vmatprep.subr.bf16.mxu0 0
    %682 = vmatpush1.bf16.msra.mxu0 %v636
    %683 = vmatprep.subr.bf16.mxu0 0
    %684 = vmatpush1.bf16.msra.mxu0 %v637
    %685 = vmatprep.subr.bf16.mxu0 0
    %686 = vmatpush1.bf16.msra.mxu0 %v638
    %687 = vmatprep.mubr.bf16.mxu0 %v520
    %688 = vmatmul.mubr.bf16.gmra.mrb[0].mxu0 %v519
    %v689 = vpop.f32.mrb[0].mxu0
    %v690 = vadd.f32 %v558, %v689
    %v691 = vpop.f32.mrb[0].mxu0
    %v692 = vpop.f32.mrb[0].mxu0
    %v693 = vpop.f32.mrb[0].mxu0
    %694 = vdwg.mxu0
    %v695 = vmul.f32 %v690, %v690
    %v696 = vsel %vm39, %v695, 0.0
    %697 = vadd.xlane.f32.xlu0 %v696
    %v698 = vpop.xlane.xlu0 %697
    %v699 = vadd.f32 %v698, 1e-12
    %v700 = vrsqrt.pop %v699
    %v701 = vmul.f32 %v690, %v700
    %v702 = vpack.c.bf16 %v701, %v701
    %v703 = vld [vmem:[%s9] sm:$0xff]
    %v704 = vld [vmem:[%s9 + $0x8] sm:$0xff]
    %v705 = vld [vmem:[%s9 + $0x10] sm:$0xff]
    %v706 = vld [vmem:[%s9 + $0x18] sm:$0xff]
    %v707 = vld [vmem:[%s9 + $0x20] sm:$0xff]
    %v708 = vld [vmem:[%s9 + $0x28] sm:$0xff]
    %v709 = vld [vmem:[%s9 + $0x30] sm:$0xff]
    %v710 = vld [vmem:[%s9 + $0x38] sm:$0xff]
    %v711 = vld [vmem:[%s9 + $0x40] sm:$0xff]
    %v712 = vld [vmem:[%s9 + $0x48] sm:$0xff]
    %v713 = vld [vmem:[%s9 + $0x50] sm:$0xff]
    %v714 = vld [vmem:[%s9 + $0x58] sm:$0xff]
    %v715 = vld [vmem:[%s9 + $0x60] sm:$0xff]
    %v716 = vld [vmem:[%s9 + $0x68] sm:$0xff]
    %v717 = vld [vmem:[%s9 + $0x70] sm:$0xff]
    %v718 = vld [vmem:[%s9 + $0x78] sm:$0xff]
    %v735 = vunpack.c.l.b16 %v703
    %v736 = vunpack.c.h.b16 %v703
    %v737 = vunpack.c.l.b16 %v704
    %v738 = vunpack.c.h.b16 %v704
    %v739 = vunpack.c.l.b16 %v705
    %v740 = vunpack.c.h.b16 %v705
    %v741 = vunpack.c.l.b16 %v706
    %v742 = vunpack.c.h.b16 %v706
    %v743 = vunpack.c.l.b16 %v707
    %v744 = vunpack.c.h.b16 %v707
    %v745 = vunpack.c.l.b16 %v708
    %v746 = vunpack.c.h.b16 %v708
    %v747 = vunpack.c.l.b16 %v709
    %v748 = vunpack.c.h.b16 %v709
    %v749 = vunpack.c.l.b16 %v710
    %v750 = vunpack.c.h.b16 %v710
    %v751 = vunpack.c.l.b16 %v711
    %v752 = vunpack.c.h.b16 %v711
    %v753 = vunpack.c.l.b16 %v712
    %v754 = vunpack.c.h.b16 %v712
    %v755 = vunpack.c.l.b16 %v713
    %v756 = vunpack.c.h.b16 %v713
    %v757 = vunpack.c.l.b16 %v714
    %v758 = vunpack.c.h.b16 %v714
    %v759 = vunpack.c.l.b16 %v715
    %v760 = vunpack.c.h.b16 %v715
    %v761 = vunpack.c.l.b16 %v716
    %v762 = vunpack.c.h.b16 %v716
    %v763 = vunpack.c.l.b16 %v717
    %v764 = vunpack.c.h.b16 %v717
    %v765 = vunpack.c.l.b16 %v718
    %v766 = vunpack.c.h.b16 %v718
    %v767 = vpack.c.b16 %v737, %v735
    %v768 = vpack.c.b16 %v738, %v736
    %v769 = vpack.c.b16 %v741, %v739
    %v770 = vpack.c.b16 %v742, %v740
    %v771 = vpack.c.b16 %v745, %v743
    %v772 = vpack.c.b16 %v746, %v744
    %v773 = vpack.c.b16 %v749, %v747
    %v774 = vpack.c.b16 %v750, %v748
    %v775 = vpack.c.b16 %v753, %v751
    %v776 = vpack.c.b16 %v754, %v752
    %v777 = vpack.c.b16 %v757, %v755
    %v778 = vpack.c.b16 %v758, %v756
    %v779 = vpack.c.b16 %v761, %v759
    %v780 = vpack.c.b16 %v762, %v760
    %v781 = vpack.c.b16 %v765, %v763
    %v782 = vpack.c.b16 %v766, %v764
    %799 = vmatprep.subr.bf16.mxu0 %v768
    %800 = vmatpush1.bf16.msra.mxu0 %v767
    %801 = vmatprep.subr.bf16.mxu0 %v770
    %802 = vmatpush1.bf16.msra.mxu0 %v769
    %803 = vmatprep.subr.bf16.mxu0 %v772
    %804 = vmatpush1.bf16.msra.mxu0 %v771
    %805 = vmatprep.subr.bf16.mxu0 %v774
    %806 = vmatpush1.bf16.msra.mxu0 %v773
    %807 = vmatprep.subr.bf16.mxu0 %v776
    %808 = vmatpush1.bf16.msra.mxu0 %v775
    %809 = vmatprep.subr.bf16.mxu0 %v778
    %810 = vmatpush1.bf16.msra.mxu0 %v777
    %811 = vmatprep.subr.bf16.mxu0 %v780
    %812 = vmatpush1.bf16.msra.mxu0 %v779
    %813 = vmatprep.subr.bf16.mxu0 %v782
    %814 = vmatpush1.bf16.msra.mxu0 %v781
    %815 = vmatprep.subr.bf16.mxu0 0
    %816 = vmatpush1.bf16.msra.mxu0 0
    %817 = vmatprep.subr.bf16.mxu0 0
    %818 = vmatpush1.bf16.msra.mxu0 0
    %819 = vmatprep.subr.bf16.mxu0 0
    %820 = vmatpush1.bf16.msra.mxu0 0
    %821 = vmatprep.subr.bf16.mxu0 0
    %822 = vmatpush1.bf16.msra.mxu0 0
    %823 = vmatprep.subr.bf16.mxu0 0
    %824 = vmatpush1.bf16.msra.mxu0 0
    %825 = vmatprep.subr.bf16.mxu0 0
    %826 = vmatpush1.bf16.msra.mxu0 0
    %827 = vmatprep.subr.bf16.mxu0 0
    %828 = vmatpush1.bf16.msra.mxu0 0
    %829 = vmatprep.subr.bf16.mxu0 0
    %830 = vmatpush1.bf16.msra.mxu0 0
    %831 = vmatprep.mubr.bf16.mxu0 0
    %832 = vmatmul.mubr.bf16.gmra.mrb[0].mxu0 %v702
    %v833 = vpop.f32.mrb[0].mxu0
    %v834 = vadd.f32 0.0, %v833
    %v835 = vpop.f32.mrb[0].mxu0
    %v836 = vadd.f32 0.0, %v835
    %v837 = vpop.f32.mrb[0].mxu0
    %v838 = vpop.f32.mrb[0].mxu0
    %839 = vdwg.mxu0
    %v842 = vcombine.low %v834, %v836
    %v844 = vunpack.c.l.s4 1983009808
    %v845 = vunpack.c.0.s8 %v844
    %v846 = vlaneseq
    %v847 = vshrl.u32 %v846, 7
    %v848 = vsub.s32 %v845, %v847
    %v849 = vrot.slane %v842, %v848
    %851 = vst [vmem:[#allocation2] sm:$0xf] %v849
    // Predicated region
    $region42: #{dino_projector_forward.7} parent=1 // pred_check
      _
    $region43: #{dino_projector_forward.7} parent=1 // pred_check_branch
      %853 = sbr.rel (0) target = $region45
    $region44: #{dino_projector_forward.7} parent=1 // pred_region
      %s855 = ssub.s32 64, 64
      %856 = vsyncadd [#allocation3], %s855
      %s858 = sshll.u32 [#allocation2], 4
      %s859 = int_to_ptr.vmem [resolvable:$true] %s858
      %861 = dma.vmem_to_hbm [thread:$0]  %s859, 64, %s10, [#allocation3]
    $region45: #{dino_projector_forward.7} parent=1 // pred_fallthru
      _
    // Predicated region
    $region46: #{dino_projector_forward.7} parent=1 // pred_check
      _
    $region47: #{dino_projector_forward.7} parent=1 // pred_check_branch
      %863 = sbr.rel (0) target = $region49
    $region48: #{dino_projector_forward.7} parent=1 // pred_region
      %864 = dma.done [#allocation3], 64
    $region49: #{dino_projector_forward.7} parent=1 // pred_fallthru
      _
    %865 = vsyncpa [#allocation3], 1

// kernel: dino_projector_forward.5
$region0: #{dino_projector_forward.5}
  #allocation0 [shape = 'u32[]', space=smem, size = 0x4, offset = 0x4, fixed_abs, tag = 'smem constant byte address 0x4 - core index']
  #allocation1 [shape = 'u32[144,128]{1,0:T(1,128)}', space=vmem, size = 0x12000, scoped, tag = 'internal scratch']
  %s0 = inlined_call_operand.vmem [shape: bf16[2,17,128], index: 0, kind: input, shape index: {}]
  %s1 = inlined_call_operand.vmem [shape: bf16[1,128], index: 1, kind: input, shape index: {}]
  %s2 = inlined_call_operand.vmem [shape: bf16[1,128], index: 2, kind: input, shape index: {}]
  %s3 = inlined_call_operand.vmem [shape: bf16[128,384], index: 3, kind: input, shape index: {}]
  %s4 = inlined_call_operand.vmem [shape: bf16[1,384], index: 4, kind: input, shape index: {}]
  %s5 = inlined_call_operand.vmem [shape: bf16[128,128], index: 5, kind: input, shape index: {}]
  %s6 = inlined_call_operand.vmem [shape: bf16[1,128], index: 6, kind: input, shape index: {}]
  %s7 = inlined_call_operand.vmem [shape: bf16[1,128], index: 7, kind: input, shape index: {}]
  %s8 = inlined_call_operand.vmem [shape: bf16[1,128], index: 8, kind: input, shape index: {}]
  %s9 = inlined_call_operand.vmem [shape: bf16[128,512], index: 9, kind: input, shape index: {}]
  %s10 = inlined_call_operand.vmem [shape: bf16[1,512], index: 10, kind: input, shape index: {}]
  %s11 = inlined_call_operand.vmem [shape: bf16[512,128], index: 11, kind: input, shape index: {}]
  %s12 = inlined_call_operand.vmem [shape: bf16[1,128], index: 12, kind: input, shape index: {}]
  %s13 = inlined_call_operand.vmem [shape: bf16[2,17,128], index: 13, kind: output, shape index: {}]
  %s14 = sld [smem:[#allocation0]]
  $region85: #{dino_projector_forward.5} parent=0
    _
  %s16 = ssub.s32 1, %s14
  %s17 = scalar_select 0, %s16, %s14
  loop: start=0, step=1, limit=4
  $region2: #{dino_projector_forward.5} parent=0 // loop_pre_header
    _
  $region3: #{dino_projector_forward.5} parent=0 // loop_header
    %s19 = sphi 0, %s23
    %p20 = scmp.ge.s32.totalorder %s19, 4
    %s29 = sphi 0, %s31
    %s32 = sphi 0, %s29
    %s33 = sphi 0, %s32
    %s49 = sphi 0, %s33
    %s53 = sphi 0, %s53
    %s55 = sphi 0, %s53
    %s56 = sphi 0, %s55
    %s70 = sphi 0, %s56
    %s74 = sphi 0, %s74
    %s76 = sphi 0, %s74
    %s77 = sphi 0, %s76
    %s91 = sphi 0, %s77
    %s95 = sphi 0, %s95
    %s97 = sphi 0, %s95
    %s98 = sphi 0, %s97
    %s112 = sphi 0, %s98
    %s116 = sphi 0, %s116
    %s118 = sphi 0, %s116
    %s119 = sphi 0, %s118
    %s133 = sphi 0, %s119
    %s137 = sphi 0, %s137
    %s139 = sphi 0, %s137
    %s140 = sphi 0, %s139
    %s154 = sphi 0, %s140
    %s158 = sphi 0, %s158
    %s160 = sphi 0, %s158
    %s161 = sphi 0, %s160
    %s175 = sphi 0, %s161
    %s179 = sphi 0, %s179
    %s181 = sphi 0, %s179
    %s182 = sphi 0, %s181
    %s196 = sphi 0, %s182
    %s200 = sphi 0, %s200
    %s202 = sphi 0, %s200
    %s203 = sphi 0, %s202
    %s217 = sphi 0, %s203
    %s221 = sphi 0, %s221
    %s223 = sphi 0, %s221
    %s224 = sphi 0, %s223
    %s238 = sphi 0, %s224
    %s242 = sphi 0, %s242
    %s244 = sphi 0, %s242
    %s245 = sphi 0, %s244
    %s259 = sphi 0, %s245
    %s263 = sphi 0, %s263
    %s265 = sphi 0, %s263
    %s266 = sphi 0, %s265
    %s280 = sphi 0, %s266
    %s284 = sphi 0, %s284
    %s286 = sphi 0, %s284
    %s287 = sphi 0, %s286
    %s301 = sphi 0, %s287
    %s307 = sphi 0, %s309
    %s310 = sphi 0, %s307
    %s311 = sphi 0, %s310
    %s327 = sphi 0, %s311
  $region4: #{dino_projector_forward.5} parent=0 // loop_header_branch
    %22 = sbr.rel (%p20) target = $region8
  $region5: #{dino_projector_forward.5} parent=0 // loop_body
    %s24 = ssub.s32 %s19, 1
    %s25 = ssub.s32 %s19, 2
    %s26 = sadd.s32 %s19, 1
    %s27 = ssub.s32 %s19, %s26
    %p28 = scmp.eq.s32.totalorder %s27, 0
    %s30 = sadd.s32 %s29, 1
    %s31 = scalar_select %p28, %s29, %s30
    %p34 = pneg %p28
    %p35 = scmp.eq.s32.totalorder %s19, 1
    %p36 = por %p34, %p35
    %p37 = scmp.ne.s32.totalorder %s29, %s32
    %p38 = scmp.eq.s32.totalorder %s19, 0
    %p39 = por %p37, %p38
    %p40 = scmp.ne.s32.totalorder %s29, %s32
    %p41 = scmp.eq.s32.totalorder %s24, 1
    %p42 = por %p40, %p41
    %p43 = scmp.ne.s32.totalorder %s32, %s33
    %p44 = scmp.eq.s32.totalorder %s24, 0
    %p45 = por %p43, %p44
    %p46 = scmp.ne.s32.totalorder %s32, %s33
    %p47 = scmp.eq.s32.totalorder %s25, 1
    %p48 = por %p46, %p47
    %p50 = scmp.ne.s32.totalorder %s33, %s49
    %p51 = scmp.eq.s32.totalorder %s25, 0
    %p52 = por %p50, %p51
    %s54 = sadd.s32 %s53, 1
    %p57 = scmp.eq.s32.totalorder %s19, 1
    %p58 = scmp.ne.s32.totalorder %s53, %s55
    %p59 = scmp.eq.s32.totalorder %s19, 0
    %p60 = por %p58, %p59
    %p61 = scmp.ne.s32.totalorder %s53, %s55
    %p62 = scmp.eq.s32.totalorder %s24, 1
    %p63 = por %p61, %p62
    %p64 = scmp.ne.s32.totalorder %s55, %s56
    %p65 = scmp.eq.s32.totalorder %s24, 0
    %p66 = por %p64, %p65
    %p67 = scmp.ne.s32.totalorder %s55, %s56
    %p68 = scmp.eq.s32.totalorder %s25, 1
    %p69 = por %p67, %p68
    %p71 = scmp.ne.s32.totalorder %s56, %s70
    %p72 = scmp.eq.s32.totalorder %s25, 0
    %p73 = por %p71, %p72
    %s75 = sadd.s32 %s74, 1
    %p78 = scmp.eq.s32.totalorder %s19, 1
    %p79 = scmp.ne.s32.totalorder %s74, %s76
    %p80 = scmp.eq.s32.totalorder %s19, 0
    %p81 = por %p79, %p80
    %p82 = scmp.ne.s32.totalorder %s74, %s76
    %p83 = scmp.eq.s32.totalorder %s24, 1
    %p84 = por %p82, %p83
    %p85 = scmp.ne.s32.totalorder %s76, %s77
    %p86 = scmp.eq.s32.totalorder %s24, 0
    %p87 = por %p85, %p86
    %p88 = scmp.ne.s32.totalorder %s76, %s77
    %p89 = scmp.eq.s32.totalorder %s25, 1
    %p90 = por %p88, %p89
    %p92 = scmp.ne.s32.totalorder %s77, %s91
    %p93 = scmp.eq.s32.totalorder %s25, 0
    %p94 = por %p92, %p93
    %s96 = sadd.s32 %s95, 1
    %p99 = scmp.eq.s32.totalorder %s19, 1
    %p100 = scmp.ne.s32.totalorder %s95, %s97
    %p101 = scmp.eq.s32.totalorder %s19, 0
    %p102 = por %p100, %p101
    %p103 = scmp.ne.s32.totalorder %s95, %s97
    %p104 = scmp.eq.s32.totalorder %s24, 1
    %p105 = por %p103, %p104
    %p106 = scmp.ne.s32.totalorder %s97, %s98
    %p107 = scmp.eq.s32.totalorder %s24, 0
    %p108 = por %p106, %p107
    %p109 = scmp.ne.s32.totalorder %s97, %s98
    %p110 = scmp.eq.s32.totalorder %s25, 1
    %p111 = por %p109, %p110
    %p113 = scmp.ne.s32.totalorder %s98, %s112
    %p114 = scmp.eq.s32.totalorder %s25, 0
    %p115 = por %p113, %p114
    %s117 = sadd.s32 %s116, 1
    %p120 = scmp.eq.s32.totalorder %s19, 1
    %p121 = scmp.ne.s32.totalorder %s116, %s118
    %p122 = scmp.eq.s32.totalorder %s19, 0
    %p123 = por %p121, %p122
    %p124 = scmp.ne.s32.totalorder %s116, %s118
    %p125 = scmp.eq.s32.totalorder %s24, 1
    %p126 = por %p124, %p125
    %p127 = scmp.ne.s32.totalorder %s118, %s119
    %p128 = scmp.eq.s32.totalorder %s24, 0
    %p129 = por %p127, %p128
    %p130 = scmp.ne.s32.totalorder %s118, %s119
    %p131 = scmp.eq.s32.totalorder %s25, 1
    %p132 = por %p130, %p131
    %p134 = scmp.ne.s32.totalorder %s119, %s133
    %p135 = scmp.eq.s32.totalorder %s25, 0
    %p136 = por %p134, %p135
    %s138 = sadd.s32 %s137, 1
    %p141 = scmp.eq.s32.totalorder %s19, 1
    %p142 = scmp.ne.s32.totalorder %s137, %s139
    %p143 = scmp.eq.s32.totalorder %s19, 0
    %p144 = por %p142, %p143
    %p145 = scmp.ne.s32.totalorder %s137, %s139
    %p146 = scmp.eq.s32.totalorder %s24, 1
    %p147 = por %p145, %p146
    %p148 = scmp.ne.s32.totalorder %s139, %s140
    %p149 = scmp.eq.s32.totalorder %s24, 0
    %p150 = por %p148, %p149
    %p151 = scmp.ne.s32.totalorder %s139, %s140
    %p152 = scmp.eq.s32.totalorder %s25, 1
    %p153 = por %p151, %p152
    %p155 = scmp.ne.s32.totalorder %s140, %s154
    %p156 = scmp.eq.s32.totalorder %s25, 0
    %p157 = por %p155, %p156
    %s159 = sadd.s32 %s158, 1
    %p162 = scmp.eq.s32.totalorder %s19, 1
    %p163 = scmp.ne.s32.totalorder %s158, %s160
    %p164 = scmp.eq.s32.totalorder %s19, 0
    %p165 = por %p163, %p164
    %p166 = scmp.ne.s32.totalorder %s158, %s160
    %p167 = scmp.eq.s32.totalorder %s24, 1
    %p168 = por %p166, %p167
    %p169 = scmp.ne.s32.totalorder %s160, %s161
    %p170 = scmp.eq.s32.totalorder %s24, 0
    %p171 = por %p169, %p170
    %p172 = scmp.ne.s32.totalorder %s160, %s161
    %p173 = scmp.eq.s32.totalorder %s25, 1
    %p174 = por %p172, %p173
    %p176 = scmp.ne.s32.totalorder %s161, %s175
    %p177 = scmp.eq.s32.totalorder %s25, 0
    %p178 = por %p176, %p177
    %s180 = sadd.s32 %s179, 1
    %p183 = scmp.eq.s32.totalorder %s19, 1
    %p184 = scmp.ne.s32.totalorder %s179, %s181
    %p185 = scmp.eq.s32.totalorder %s19, 0
    %p186 = por %p184, %p185
    %p187 = scmp.ne.s32.totalorder %s179, %s181
    %p188 = scmp.eq.s32.totalorder %s24, 1
    %p189 = por %p187, %p188
    %p190 = scmp.ne.s32.totalorder %s181, %s182
    %p191 = scmp.eq.s32.totalorder %s24, 0
    %p192 = por %p190, %p191
    %p193 = scmp.ne.s32.totalorder %s181, %s182
    %p194 = scmp.eq.s32.totalorder %s25, 1
    %p195 = por %p193, %p194
    %p197 = scmp.ne.s32.totalorder %s182, %s196
    %p198 = scmp.eq.s32.totalorder %s25, 0
    %p199 = por %p197, %p198
    %s201 = sadd.s32 %s200, 1
    %p204 = scmp.eq.s32.totalorder %s19, 1
    %p205 = scmp.ne.s32.totalorder %s200, %s202
    %p206 = scmp.eq.s32.totalorder %s19, 0
    %p207 = por %p205, %p206
    %p208 = scmp.ne.s32.totalorder %s200, %s202
    %p209 = scmp.eq.s32.totalorder %s24, 1
    %p210 = por %p208, %p209
    %p211 = scmp.ne.s32.totalorder %s202, %s203
    %p212 = scmp.eq.s32.totalorder %s24, 0
    %p213 = por %p211, %p212
    %p214 = scmp.ne.s32.totalorder %s202, %s203
    %p215 = scmp.eq.s32.totalorder %s25, 1
    %p216 = por %p214, %p215
    %p218 = scmp.ne.s32.totalorder %s203, %s217
    %p219 = scmp.eq.s32.totalorder %s25, 0
    %p220 = por %p218, %p219
    %s222 = sadd.s32 %s221, 1
    %p225 = scmp.eq.s32.totalorder %s19, 1
    %p226 = scmp.ne.s32.totalorder %s221, %s223
    %p227 = scmp.eq.s32.totalorder %s19, 0
    %p228 = por %p226, %p227
    %p229 = scmp.ne.s32.totalorder %s221, %s223
    %p230 = scmp.eq.s32.totalorder %s24, 1
    %p231 = por %p229, %p230
    %p232 = scmp.ne.s32.totalorder %s223, %s224
    %p233 = scmp.eq.s32.totalorder %s24, 0
    %p234 = por %p232, %p233
    %p235 = scmp.ne.s32.totalorder %s223, %s224
    %p236 = scmp.eq.s32.totalorder %s25, 1
    %p237 = por %p235, %p236
    %p239 = scmp.ne.s32.totalorder %s224, %s238
    %p240 = scmp.eq.s32.totalorder %s25, 0
    %p241 = por %p239, %p240
    %s243 = sadd.s32 %s242, 1
    %p246 = scmp.eq.s32.totalorder %s19, 1
    %p247 = scmp.ne.s32.totalorder %s242, %s244
    %p248 = scmp.eq.s32.totalorder %s19, 0
    %p249 = por %p247, %p248
    %p250 = scmp.ne.s32.totalorder %s242, %s244
    %p251 = scmp.eq.s32.totalorder %s24, 1
    %p252 = por %p250, %p251
    %p253 = scmp.ne.s32.totalorder %s244, %s245
    %p254 = scmp.eq.s32.totalorder %s24, 0
    %p255 = por %p253, %p254
    %p256 = scmp.ne.s32.totalorder %s244, %s245
    %p257 = scmp.eq.s32.totalorder %s25, 1
    %p258 = por %p256, %p257
    %p260 = scmp.ne.s32.totalorder %s245, %s259
    %p261 = scmp.eq.s32.totalorder %s25, 0
    %p262 = por %p260, %p261
    %s264 = sadd.s32 %s263, 1
    %p267 = scmp.eq.s32.totalorder %s19, 1
    %p268 = scmp.ne.s32.totalorder %s263, %s265
    %p269 = scmp.eq.s32.totalorder %s19, 0
    %p270 = por %p268, %p269
    %p271 = scmp.ne.s32.totalorder %s263, %s265
    %p272 = scmp.eq.s32.totalorder %s24, 1
    %p273 = por %p271, %p272
    %p274 = scmp.ne.s32.totalorder %s265, %s266
    %p275 = scmp.eq.s32.totalorder %s24, 0
    %p276 = por %p274, %p275
    %p277 = scmp.ne.s32.totalorder %s265, %s266
    %p278 = scmp.eq.s32.totalorder %s25, 1
    %p279 = por %p277, %p278
    %p281 = scmp.ne.s32.totalorder %s266, %s280
    %p282 = scmp.eq.s32.totalorder %s25, 0
    %p283 = por %p281, %p282
    %s285 = sadd.s32 %s284, 1
    %p288 = scmp.eq.s32.totalorder %s19, 1
    %p289 = scmp.ne.s32.totalorder %s284, %s286
    %p290 = scmp.eq.s32.totalorder %s19, 0
    %p291 = por %p289, %p290
    %p292 = scmp.ne.s32.totalorder %s284, %s286
    %p293 = scmp.eq.s32.totalorder %s24, 1
    %p294 = por %p292, %p293
    %p295 = scmp.ne.s32.totalorder %s286, %s287
    %p296 = scmp.eq.s32.totalorder %s24, 0
    %p297 = por %p295, %p296
    %p298 = scmp.ne.s32.totalorder %s286, %s287
    %p299 = scmp.eq.s32.totalorder %s25, 1
    %p300 = por %p298, %p299
    %p302 = scmp.ne.s32.totalorder %s287, %s301
    %p303 = scmp.eq.s32.totalorder %s25, 0
    %p304 = por %p302, %p303
    %s305 = ssub.s32 %s19, %s26
    %p306 = scmp.eq.s32.totalorder %s305, 0
    %s308 = sadd.s32 %s307, 1
    %s309 = scalar_select %p306, %s307, %s308
    %p312 = pneg %p306
    %p313 = scmp.eq.s32.totalorder %s19, 1
    %p314 = por %p312, %p313
    %p315 = scmp.ne.s32.totalorder %s307, %s310
    %p316 = scmp.eq.s32.totalorder %s19, 0
    %p317 = por %p315, %p316
    %p318 = scmp.ne.s32.totalorder %s307, %s310
    %p319 = scmp.eq.s32.totalorder %s24, 1
    %p320 = por %p318, %p319
    %p321 = scmp.ne.s32.totalorder %s310, %s311
    %p322 = scmp.eq.s32.totalorder %s24, 0
    %p323 = por %p321, %p322
    %p324 = scmp.ne.s32.totalorder %s310, %s311
    %p325 = scmp.eq.s32.totalorder %s25, 1
    %p326 = por %p324, %p325
    %p328 = scmp.ne.s32.totalorder %s311, %s327
    %p329 = scmp.eq.s32.totalorder %s25, 0
    %p330 = por %p328, %p329
    %p331 = scmp.le.s32.totalorder 1, %s19
    %p332 = scmp.lt.s32.totalorder %s19, 3
    %p333 = pnand %p331, %p332
    %p334 = pneg %p333
    // Predicated region
    $region9: #{dino_projector_forward.5} parent=5 // pred_check
      _
    $region10: #{dino_projector_forward.5} parent=5 // pred_check_branch
      %336 = sbr.rel (%p333) target = $region12
    $region11: #{dino_projector_forward.5} parent=5 // pred_region
      %s337 = ssub.s32 %s19, 1
      // Predicated region
      $region13: #{dino_projector_forward.5} parent=11 // pred_check
        %p338 = pneg %p66
      $region14: #{dino_projector_forward.5} parent=11 // pred_check_branch
        %340 = sbr.rel (%p338) target = $region16
      $region15: #{dino_projector_forward.5} parent=11 // pred_region
        _
      $region16: #{dino_projector_forward.5} parent=11 // pred_fallthru
        _
      // Predicated region
      $region17: #{dino_projector_forward.5} parent=11 // pred_check
        %p341 = pneg %p87
      $region18: #{dino_projector_forward.5} parent=11 // pred_check_branch
        %343 = sbr.rel (%p341) target = $region20
      $region19: #{dino_projector_forward.5} parent=11 // pred_region
        _
      $region20: #{dino_projector_forward.5} parent=11 // pred_fallthru
        _
      // Predicated region
      $region21: #{dino_projector_forward.5} parent=11 // pred_check
        %p344 = pneg %p108
      $region22: #{dino_projector_forward.5} parent=11 // pred_check_branch
        %346 = sbr.rel (%p344) target = $region24
      $region23: #{dino_projector_forward.5} parent=11 // pred_region
        _
      $region24: #{dino_projector_forward.5} parent=11 // pred_fallthru
        _
      // Predicated region
      $region25: #{dino_projector_forward.5} parent=11 // pred_check
        %p347 = pneg %p129
      $region26: #{dino_projector_forward.5} parent=11 // pred_check_branch
        %349 = sbr.rel (%p347) target = $region28
      $region27: #{dino_projector_forward.5} parent=11 // pred_region
        _
      $region28: #{dino_projector_forward.5} parent=11 // pred_fallthru
        _
      // Predicated region
      $region29: #{dino_projector_forward.5} parent=11 // pred_check
        %p350 = pneg %p150
      $region30: #{dino_projector_forward.5} parent=11 // pred_check_branch
        %352 = sbr.rel (%p350) target = $region32
      $region31: #{dino_projector_forward.5} parent=11 // pred_region
        _
      $region32: #{dino_projector_forward.5} parent=11 // pred_fallthru
        _
      // Predicated region
      $region33: #{dino_projector_forward.5} parent=11 // pred_check
        %p353 = pneg %p171
      $region34: #{dino_projector_forward.5} parent=11 // pred_check_branch
        %355 = sbr.rel (%p353) target = $region36
      $region35: #{dino_projector_forward.5} parent=11 // pred_region
        _
      $region36: #{dino_projector_forward.5} parent=11 // pred_fallthru
        _
      // Predicated region
      $region37: #{dino_projector_forward.5} parent=11 // pred_check
        %p356 = pneg %p192
      $region38: #{dino_projector_forward.5} parent=11 // pred_check_branch
        %358 = sbr.rel (%p356) target = $region40
      $region39: #{dino_projector_forward.5} parent=11 // pred_region
        _
      $region40: #{dino_projector_forward.5} parent=11 // pred_fallthru
        _
      // Predicated region
      $region41: #{dino_projector_forward.5} parent=11 // pred_check
        %p359 = pneg %p213
      $region42: #{dino_projector_forward.5} parent=11 // pred_check_branch
        %361 = sbr.rel (%p359) target = $region44
      $region43: #{dino_projector_forward.5} parent=11 // pred_region
        _
      $region44: #{dino_projector_forward.5} parent=11 // pred_fallthru
        _
      // Predicated region
      $region45: #{dino_projector_forward.5} parent=11 // pred_check
        %p362 = pneg %p234
      $region46: #{dino_projector_forward.5} parent=11 // pred_check_branch
        %364 = sbr.rel (%p362) target = $region48
      $region47: #{dino_projector_forward.5} parent=11 // pred_region
        _
      $region48: #{dino_projector_forward.5} parent=11 // pred_fallthru
        _
      // Predicated region
      $region49: #{dino_projector_forward.5} parent=11 // pred_check
        %p365 = pneg %p255
      $region50: #{dino_projector_forward.5} parent=11 // pred_check_branch
        %367 = sbr.rel (%p365) target = $region52
      $region51: #{dino_projector_forward.5} parent=11 // pred_region
        _
      $region52: #{dino_projector_forward.5} parent=11 // pred_fallthru
        _
      // Predicated region
      $region53: #{dino_projector_forward.5} parent=11 // pred_check
        %p368 = pneg %p276
      $region54: #{dino_projector_forward.5} parent=11 // pred_check_branch
        %370 = sbr.rel (%p368) target = $region56
      $region55: #{dino_projector_forward.5} parent=11 // pred_region
        _
      $region56: #{dino_projector_forward.5} parent=11 // pred_fallthru
        _
      // Predicated region
      $region57: #{dino_projector_forward.5} parent=11 // pred_check
        %p371 = pneg %p297
      $region58: #{dino_projector_forward.5} parent=11 // pred_check_branch
        %373 = sbr.rel (%p371) target = $region60
      $region59: #{dino_projector_forward.5} parent=11 // pred_region
        _
      $region60: #{dino_projector_forward.5} parent=11 // pred_fallthru
        _
    $region12: #{dino_projector_forward.5} parent=5 // pred_fallthru
      _
    %p374 = scmp.lt.s32.totalorder %s19, 2
    // Predicated region
    $region61: #{dino_projector_forward.5} parent=5 // pred_check
      %p375 = pneg %p374
    $region62: #{dino_projector_forward.5} parent=5 // pred_check_branch
      %377 = sbr.rel (%p375) target = $region64
    $region63: #{dino_projector_forward.5} parent=5 // pred_region
      // Predicated region
      $region65: #{dino_projector_forward.5} parent=63 // pred_check
        %p378 = pneg %p39
      $region66: #{dino_projector_forward.5} parent=63 // pred_check_branch
        %380 = sbr.rel (%p378) target = $region68
      $region67: #{dino_projector_forward.5} parent=63 // pred_region
        %p381 = scmp.lt.s32.totalorder %s19, 1
        %s382 = scalar_select %p381, %s19, 1
        %s383 = smul.addr %s382, 3
        %s384 = smul.addr %s383, 4
        %s385 = scalar_lea.vmem %s0, %s384
      $region68: #{dino_projector_forward.5} parent=63 // pred_fallthru
        _
    $region64: #{dino_projector_forward.5} parent=5 // pred_fallthru
      _
    %p386 = scmp.le.s32.totalorder 1, %s19
    %p387 = scmp.lt.s32.totalorder %s19, 3
    %p388 = pnand %p386, %p387
    %p389 = pneg %p388
    // Predicated region
    $region69: #{dino_projector_forward.5} parent=5 // pred_check
      _
    $region70: #{dino_projector_forward.5} parent=5 // pred_check_branch
      %391 = sbr.rel (%p388) target = $region72
    $region71: #{dino_projector_forward.5} parent=5 // pred_region
      %s392 = ssub.s32 %s19, 1
      %p393 = scmp.lt.s32.totalorder %s24, 1
      %s394 = scalar_select %p393, %s24, 1
      %s395 = smul.addr %s394, 3
      %s396 = smul.addr %s395, 4
      %s397 = scalar_lea.vmem %s0, %s396
      %p398 = pneg %p45
      %p399 = pneg %p42
      %p400 = pneg %p66
      %p401 = pneg %p63
      %p402 = pneg %p87
      %p403 = pneg %p84
      %p404 = pneg %p108
      %p405 = pneg %p105
      %p406 = pneg %p129
      %p407 = pneg %p126
      %p408 = pneg %p150
      %p409 = pneg %p147
      %p410 = pneg %p171
      %p411 = pneg %p168
      %p412 = pneg %p192
      %p413 = pneg %p189
      %p414 = pneg %p213
      %p415 = pneg %p210
      %p416 = pneg %p234
      %p417 = pneg %p231
      %p418 = pneg %p255
      %p419 = pneg %p252
      %p420 = pneg %p276
      %p421 = pneg %p273
      %p422 = pneg %p297
      %p423 = pneg %p294
      %p424 = pneg %p323
      %p425 = pneg %p320
      %p426 = scmp.lt.s32.totalorder %s24, 1
      %s427 = scalar_select %p426, %s24, 1
      %s428 = smul.addr %s427, 3
      %s429 = smul.addr %s428, 4
      %s430 = scalar_lea.vmem %s13, %s429
      %p431 = scmp.lt.s32.totalorder %s24, 1
      %s432 = scalar_select %p431, %s24, 1
      %s433 = smul.addr %s432, 3
      %s434 = smul.addr %s433, 4
      %s435 = scalar_lea.vmem %s0, %s434
      %p436 = scmp.lt.s32.totalorder %s24, 1
      %s437 = scalar_select %p436, %s24, 1
      %s438 = smul.addr %s437, 3
      %s439 = smul.addr %s438, 4
      %s440 = scalar_lea.vmem %s13, %s439
      %v442 = vld [vmem:[%s435] sm:$0xf]
      %v443 = vld [vmem:[%s435 + $0x4] sm:$0xf]
      %v444 = vld [vmem:[%s435 + $0x8] sm:$0x1]
      %v445 = vunpack.c.l.bf16 %v442
      %v446 = vunpack.c.l.bf16 %v443
      %v447 = vunpack.c.l.bf16 %v444
      %448 = vadd.xlane.f32.xlu0 %v445
      %v449 = vpop.xlane.xlu0 %448
      %450 = vadd.xlane.f32.xlu0 %v446
      %v451 = vpop.xlane.xlu0 %450
      %vm452 = vcmask 1040384
      %v453 = vsel %vm452, %v447, 0.0
      %454 = vadd.xlane.f32.xlu0 %v453
      %v455 = vpop.xlane.xlu0 %454
      %v456 = vrcp.pop 128.0
      %v457 = vmul.f32 %v449, %v456
      %v458 = vmul.f32 %v451, %v456
      %v459 = vmul.f32 %v455, %v456
      %v460 = vsub.f32 %v445, %v457
      %v461 = vsub.f32 %v446, %v458
      %v462 = vsub.f32 %v447, %v459
      %v463 = vmul.f32 %v460, %v460
      %v464 = vmul.f32 %v461, %v461
      %v465 = vmul.f32 %v462, %v462
      %466 = vadd.xlane.f32.xlu0 %v463
      %v467 = vpop.xlane.xlu0 %466
      %468 = vadd.xlane.f32.xlu0 %v464
      %v469 = vpop.xlane.xlu0 %468
      %v470 = vsel %vm452, %v465, 0.0
      %471 = vadd.xlane.f32.xlu0 %v470
      %v472 = vpop.xlane.xlu0 %471
      %v473 = vmul.f32 %v467, %v456
      %v474 = vmul.f32 %v469, %v456
      %v475 = vmul.f32 %v472, %v456
      %v476 = vadd.f32 %v473, 1e-06
      %v477 = vadd.f32 %v474, 1e-06
      %v478 = vadd.f32 %v475, 1e-06
      %v479 = vrsqrt.pop %v476
      %v480 = vrsqrt.pop %v477
      %v481 = vrsqrt.pop %v478
      %v482 = vmul.f32 %v460, %v479
      %v483 = vmul.f32 %v461, %v480
      %v484 = vmul.f32 %v462, %v481
      %v485 = vld [vmem:[%s1] sm:$0x1]
      %v486 = vunpack.c.l.bf16 %v485
      %v487 = vlaneseq
      %v488 = vshrl.u32 %v487, 7
      %v489 = vsub.s32 0, %v488
      %v490 = vrot.slane %v486, %v489
      %v491 = vmul.f32 %v482, %v490
      %v492 = vmul.f32 %v483, %v490
      %v493 = vmul.f32 %v484, %v490
      %v494 = vld [vmem:[%s2] sm:$0x1]
      %v495 = vunpack.c.l.bf16 %v494
      %v496 = vlaneseq
      %v497 = vshrl.u32 %v496, 7
      %v498 = vsub.s32 0, %v497
      %v499 = vrot.slane %v495, %v498
      %v500 = vadd.f32 %v491, %v499
      %v501 = vadd.f32 %v492, %v499
      %v502 = vadd.f32 %v493, %v499
      %v503 = vpack.c.bf16 %v501, %v500
      %v504 = vpack.c.bf16 %v502, %v502
      %v505 = vld [vmem:[%s3] sm:$0xff]
      %v506 = vld [vmem:[%s3 + $0x8] sm:$0xf]
      %v507 = vld [vmem:[%s3 + $0xc] sm:$0xff]
      %v508 = vld [vmem:[%s3 + $0x14] sm:$0xf]
      %v509 = vld [vmem:[%s3 + $0x18] sm:$0xff]
      %v510 = vld [vmem:[%s3 + $0x20] sm:$0xf]
      %v511 = vld [vmem:[%s3 + $0x24] sm:$0xff]
      %v512 = vld [vmem:[%s3 + $0x2c] sm:$0xf]
      %v513 = vld [vmem:[%s3 + $0x30] sm:$0xff]
      %v514 = vld [vmem:[%s3 + $0x38] sm:$0xf]
      %v515 = vld [vmem:[%s3 + $0x3c] sm:$0xff]
      %v516 = vld [vmem:[%s3 + $0x44] sm:$0xf]
      %v517 = vld [vmem:[%s3 + $0x48] sm:$0xff]
      %v518 = vld [vmem:[%s3 + $0x50] sm:$0xf]
      %v519 = vld [vmem:[%s3 + $0x54] sm:$0xff]
      %v520 = vld [vmem:[%s3 + $0x5c] sm:$0xf]
      %v521 = vld [vmem:[%s3 + $0x60] sm:$0xff]
      %v522 = vld [vmem:[%s3 + $0x68] sm:$0xf]
      %v523 = vld [vmem:[%s3 + $0x6c] sm:$0xff]
      %v524 = vld [vmem:[%s3 + $0x74] sm:$0xf]
      %v525 = vld [vmem:[%s3 + $0x78] sm:$0xff]
      %v526 = vld [vmem:[%s3 + $0x80] sm:$0xf]
      %v527 = vld [vmem:[%s3 + $0x84] sm:$0xff]
      %v528 = vld [vmem:[%s3 + $0x8c] sm:$0xf]
      %v529 = vld [vmem:[%s3 + $0x90] sm:$0xff]
      %v530 = vld [vmem:[%s3 + $0x98] sm:$0xf]
      %v531 = vld [vmem:[%s3 + $0x9c] sm:$0xff]
      %v532 = vld [vmem:[%s3 + $0xa4] sm:$0xf]
      %v533 = vld [vmem:[%s3 + $0xa8] sm:$0xff]
      %v534 = vld [vmem:[%s3 + $0xb0] sm:$0xf]
      %v535 = vld [vmem:[%s3 + $0xb4] sm:$0xff]
      %v536 = vld [vmem:[%s3 + $0xbc] sm:$0xf]
      %v537 = vld [vmem:[%s4] sm:$0x7]
      %v538 = vunpack.c.l.bf16 %v537
      %v540 = vlaneseq
      %v541 = vshrl.u32 %v540, 7
      %v542 = vsub.s32 0, %v541
      %v543 = vrot.slane %v538, %v542
      %v544 = vlaneseq
      %v545 = vshrl.u32 %v544, 7
      %v546 = vsub.s32 2, %v545
      %v547 = vrot.slane %v538, %v546
      %v548 = vlaneseq
      %v549 = vshrl.u32 %v548, 7
      %v550 = vsub.s32 4, %v549
      %v551 = vrot.slane %v538, %v550
      %v555 = vlaneseq
      %v556 = vshrl.u32 %v555, 7
      %v557 = vsub.s32 0, %v556
      %v558 = vrot.slane %v543, %v557
      %v559 = vlaneseq
      %v560 = vshrl.u32 %v559, 7
      %v561 = vsub.s32 0, %v560
      %v562 = vrot.slane %v547, %v561
      %v563 = vlaneseq
      %v564 = vshrl.u32 %v563, 7
      %v565 = vsub.s32 0, %v564
      %v566 = vrot.slane %v551, %v565
      %v599 = vunpack.c.l.b16 %v505
      %v600 = vunpack.c.h.b16 %v505
      %v601 = vunpack.c.l.b16 %v506
      %v602 = vunpack.c.l.b16 %v507
      %v603 = vunpack.c.h.b16 %v507
      %v604 = vunpack.c.l.b16 %v508
      %v605 = vunpack.c.l.b16 %v509
      %v606 = vunpack.c.h.b16 %v509
      %v607 = vunpack.c.l.b16 %v510
      %v608 = vunpack.c.l.b16 %v511
      %v609 = vunpack.c.h.b16 %v511
      %v610 = vunpack.c.l.b16 %v512
      %v611 = vunpack.c.l.b16 %v513
      %v612 = vunpack.c.h.b16 %v513
      %v613 = vunpack.c.l.b16 %v514
      %v614 = vunpack.c.l.b16 %v515
      %v615 = vunpack.c.h.b16 %v515
      %v616 = vunpack.c.l.b16 %v516
      %v617 = vunpack.c.l.b16 %v517
      %v618 = vunpack.c.h.b16 %v517
      %v619 = vunpack.c.l.b16 %v518
      %v620 = vunpack.c.l.b16 %v519
      %v621 = vunpack.c.h.b16 %v519
      %v622 = vunpack.c.l.b16 %v520
      %v623 = vunpack.c.l.b16 %v521
      %v624 = vunpack.c.h.b16 %v521
      %v625 = vunpack.c.l.b16 %v522
      %v626 = vunpack.c.l.b16 %v523
      %v627 = vunpack.c.h.b16 %v523
      %v628 = vunpack.c.l.b16 %v524
      %v629 = vunpack.c.l.b16 %v525
      %v630 = vunpack.c.h.b16 %v525
      %v631 = vunpack.c.l.b16 %v526
      %v632 = vunpack.c.l.b16 %v527
      %v633 = vunpack.c.h.b16 %v527
      %v634 = vunpack.c.l.b16 %v528
      %v635 = vunpack.c.l.b16 %v529
      %v636 = vunpack.c.h.b16 %v529
      %v637 = vunpack.c.l.b16 %v530
      %v638 = vunpack.c.l.b16 %v531
      %v639 = vunpack.c.h.b16 %v531
      %v640 = vunpack.c.l.b16 %v532
      %v641 = vunpack.c.l.b16 %v533
      %v642 = vunpack.c.h.b16 %v533
      %v643 = vunpack.c.l.b16 %v534
      %v644 = vunpack.c.l.b16 %v535
      %v645 = vunpack.c.h.b16 %v535
      %v646 = vunpack.c.l.b16 %v536
      %v647 = vpack.c.b16 %v602, %v599
      %v648 = vpack.c.b16 %v603, %v600
      %v649 = vpack.c.b16 %v604, %v601
      %v650 = vpack.c.b16 %v608, %v605
      %v651 = vpack.c.b16 %v609, %v606
      %v652 = vpack.c.b16 %v610, %v607
      %v653 = vpack.c.b16 %v614, %v611
      %v654 = vpack.c.b16 %v615, %v612
      %v655 = vpack.c.b16 %v616, %v613
      %v656 = vpack.c.b16 %v620, %v617
      %v657 = vpack.c.b16 %v621, %v618
      %v658 = vpack.c.b16 %v622, %v619
      %v659 = vpack.c.b16 %v626, %v623
      %v660 = vpack.c.b16 %v627, %v624
      %v661 = vpack.c.b16 %v628, %v625
      %v662 = vpack.c.b16 %v632, %v629
      %v663 = vpack.c.b16 %v633, %v630
      %v664 = vpack.c.b16 %v634, %v631
      %v665 = vpack.c.b16 %v638, %v635
      %v666 = vpack.c.b16 %v639, %v636
      %v667 = vpack.c.b16 %v640, %v637
      %v668 = vpack.c.b16 %v644, %v641
      %v669 = vpack.c.b16 %v645, %v642
      %v670 = vpack.c.b16 %v646, %v643
      %695 = vmatprep.subr.bf16.mxu0 %v648
      %696 = vmatpush1.bf16.msra.mxu0 %v647
      %697 = vmatprep.subr.bf16.mxu0 %v651
      %698 = vmatpush1.bf16.msra.mxu0 %v650
      %699 = vmatprep.subr.bf16.mxu0 %v654
      %700 = vmatpush1.bf16.msra.mxu0 %v653
      %701 = vmatprep.subr.bf16.mxu0 %v657
      %702 = vmatpush1.bf16.msra.mxu0 %v656
      %703 = vmatprep.subr.bf16.mxu0 %v660
      %704 = vmatpush1.bf16.msra.mxu0 %v659
      %705 = vmatprep.subr.bf16.mxu0 %v663
      %706 = vmatpush1.bf16.msra.mxu0 %v662
      %707 = vmatprep.subr.bf16.mxu0 %v666
      %708 = vmatpush1.bf16.msra.mxu0 %v665
      %709 = vmatprep.subr.bf16.mxu0 %v669
      %710 = vmatpush1.bf16.msra.mxu0 %v668
      %711 = vmatprep.subr.bf16.mxu0 0
      %712 = vmatpush1.bf16.msra.mxu0 0
      %713 = vmatprep.subr.bf16.mxu0 0
      %714 = vmatpush1.bf16.msra.mxu0 0
      %715 = vmatprep.subr.bf16.mxu0 0
      %716 = vmatpush1.bf16.msra.mxu0 0
      %717 = vmatprep.subr.bf16.mxu0 0
      %718 = vmatpush1.bf16.msra.mxu0 0
      %719 = vmatprep.subr.bf16.mxu0 0
      %720 = vmatpush1.bf16.msra.mxu0 0
      %721 = vmatprep.subr.bf16.mxu0 0
      %722 = vmatpush1.bf16.msra.mxu0 0
      %723 = vmatprep.subr.bf16.mxu0 0
      %724 = vmatpush1.bf16.msra.mxu0 0
      %725 = vmatprep.subr.bf16.mxu0 0
      %726 = vmatpush1.bf16.msra.mxu0 0
      %727 = vmatprep.mubr.bf16.mxu0 0
      %728 = vmatmul.mubr.bf16.gmra.mrb[0].mxu0 %v503
      %v729 = vpop.f32.mrb[0].mxu0
      %v730 = vadd.f32 %v558, %v729
      %v731 = vpop.f32.mrb[0].mxu0
      %v732 = vadd.f32 %v562, %v731
      %v733 = vpop.f32.mrb[0].mxu0
      %v734 = vadd.f32 %v558, %v733
      %v735 = vpop.f32.mrb[0].mxu0
      %v736 = vadd.f32 %v562, %v735
      %737 = vmatprep.mubr.bf16.mxu0 0
      %738 = vmatmul.mubr.bf16.gmra.mrb[0].mxu0 %v504
      %v739 = vpop.f32.mrb[0].mxu0
      %v740 = vadd.f32 %v558, %v739
      %v741 = vpop.f32.mrb[0].mxu0
      %v742 = vadd.f32 %v562, %v741
      %v743 = vpop.f32.mrb[0].mxu0
      %v744 = vpop.f32.mrb[0].mxu0
      %745 = vdwg.mxu0
      %746 = vmatprep.subr.bf16.mxu0 0
      %747 = vmatpush1.bf16.msra.mxu0 %v649
      %748 = vmatprep.subr.bf16.mxu0 0
      %749 = vmatpush1.bf16.msra.mxu0 %v652
      %750 = vmatprep.subr.bf16.mxu0 0
      %751 = vmatpush1.bf16.msra.mxu0 %v655
      %752 = vmatprep.subr.bf16.mxu0 0
      %753 = vmatpush1.bf16.msra.mxu0 %v658
      %754 = vmatprep.subr.bf16.mxu0 0
      %755 = vmatpush1.bf16.msra.mxu0 %v661
      %756 = vmatprep.subr.bf16.mxu0 0
      %757 = vmatpush1.bf16.msra.mxu0 %v664
      %758 = vmatprep.subr.bf16.mxu0 0
      %759 = vmatpush1.bf16.msra.mxu0 %v667
      %760 = vmatprep.subr.bf16.mxu0 0
      %761 = vmatpush1.bf16.msra.mxu0 %v670
      %762 = vmatprep.subr.bf16.mxu0 0
      %763 = vmatpush1.bf16.msra.mxu0 0
      %764 = vmatprep.subr.bf16.mxu0 0
      %765 = vmatpush1.bf16.msra.mxu0 0
      %766 = vmatprep.subr.bf16.mxu0 0
      %767 = vmatpush1.bf16.msra.mxu0 0
      %768 = vmatprep.subr.bf16.mxu0 0
      %769 = vmatpush1.bf16.msra.mxu0 0
      %770 = vmatprep.subr.bf16.mxu0 0
      %771 = vmatpush1.bf16.msra.mxu0 0
      %772 = vmatprep.subr.bf16.mxu0 0
      %773 = vmatpush1.bf16.msra.mxu0 0
      %774 = vmatprep.subr.bf16.mxu0 0
      %775 = vmatpush1.bf16.msra.mxu0 0
      %776 = vmatprep.subr.bf16.mxu0 0
      %777 = vmatpush1.bf16.msra.mxu0 0
      %778 = vmatprep.mubr.bf16.mxu0 0
      %779 = vmatmul.mubr.bf16.gmra.mrb[0].mxu0 %v503
      %v780 = vpop.f32.mrb[0].mxu0
      %v781 = vadd.f32 %v566, %v780
      %v782 = vpop.f32.mrb[0].mxu0
      %v783 = vpop.f32.mrb[0].mxu0
      %v784 = vadd.f32 %v566, %v783
      %v785 = vpop.f32.mrb[0].mxu0
      %786 = vmatprep.mubr.bf16.mxu0 0
      %787 = vmatmul.mubr.bf16.gmra.mrb[0].mxu0 %v504
      %v788 = vpop.f32.mrb[0].mxu0
      %v789 = vadd.f32 %v566, %v788
      %v790 = vpop.f32.mrb[0].mxu0
      %v791 = vpop.f32.mrb[0].mxu0
      %v792 = vpop.f32.mrb[0].mxu0
      %793 = vdwg.mxu0
      %v794 = vpack.c.bf16 %v734, %v730
      %v795 = vpack.c.bf16 %v740, %v740
      %v796 = vpack.c.bf16 %v736, %v732
      %v797 = vpack.c.bf16 %v742, %v742
      %v798 = vpack.c.bf16 %v784, %v781
      %v799 = vpack.c.bf16 %v789, %v789
      %vm800 = vcmask 261120
      %v802 = vsel %vm800, %v794, 0
      %v805 = vsel %vm800, %v795, 0
      %v808 = vsel %vm800, %v796, 0
      %v811 = vsel %vm800, %v797, 0
      %813 = vmatprep.subr.bf16.mxu0 0
      %814 = vmatpush1.bf16.xpose.msra.mxu0 %v808
      %815 = vmatprep.subr.bf16.mxu0 0
      %816 = vmatpush1.bf16.xpose.msra.mxu0 %v811
      %817 = vmatprep.subr.bf16.mxu0 0
      %818 = vmatpush1.bf16.xpose.msra.mxu0 0
      %819 = vmatprep.subr.bf16.mxu0 0
      %820 = vmatpush1.bf16.xpose.msra.mxu0 0
      %821 = vmatprep.subr.bf16.mxu0 0
      %822 = vmatpush1.bf16.xpose.msra.mxu0 0
      %823 = vmatprep.subr.bf16.mxu0 0
      %824 = vmatpush1.bf16.xpose.msra.mxu0 0
      %825 = vmatprep.subr.bf16.mxu0 0
      %826 = vmatpush1.bf16.xpose.msra.mxu0 0
      %827 = vmatprep.subr.bf16.mxu0 0
      %828 = vmatpush1.bf16.xpose.msra.mxu0 0
      %829 = vmatprep.subr.bf16.mxu0 0
      %830 = vmatpush1.bf16.xpose.msra.mxu0 0
      %831 = vmatprep.subr.bf16.mxu0 0
      %832 = vmatpush1.bf16.xpose.msra.mxu0 0
      %833 = vmatprep.subr.bf16.mxu0 0
      %834 = vmatpush1.bf16.xpose.msra.mxu0 0
      %835 = vmatprep.subr.bf16.mxu0 0
      %836 = vmatpush1.bf16.xpose.msra.mxu0 0
      %837 = vmatprep.subr.bf16.mxu0 0
      %838 = vmatpush1.bf16.xpose.msra.mxu0 0
      %839 = vmatprep.subr.bf16.mxu0 0
      %840 = vmatpush1.bf16.xpose.msra.mxu0 0
      %841 = vmatprep.subr.bf16.mxu0 0
      %842 = vmatpush1.bf16.xpose.msra.mxu0 0
      %843 = vmatprep.subr.bf16.mxu0 0
      %844 = vmatpush1.bf16.xpose.msra.mxu0 0
      %845 = vmatprep.mubr.bf16.mxu0 0
      %846 = vmatmul.mubr.bf16.gmra.mrb[0].mxu0 %v802
      %v847 = vpop.f32.mrb[0].mxu0
      %v848 = vadd.f32 0.0, %v847
      %v849 = vpop.f32.mrb[0].mxu0
      %v850 = vpop.f32.mrb[0].mxu0
      %v851 = vadd.f32 0.0, %v850
      %v852 = vpop.f32.mrb[0].mxu0
      %853 = vmatprep.mubr.bf16.mxu0 0
      %854 = vmatmul.mubr.bf16.gmra.mrb[0].mxu0 %v805
      %v855 = vpop.f32.mrb[0].mxu0
      %v856 = vadd.f32 0.0, %v855
      %v857 = vpop.f32.mrb[0].mxu0
      %v858 = vpop.f32.mrb[0].mxu0
      %v859 = vpop.f32.mrb[0].mxu0
      %860 = vdwg.mxu0
      %v861 = vmul.f32 %v848, 0.17677669
      %v862 = vmul.f32 %v851, 0.17677669
      %v863 = vmul.f32 %v856, 0.17677669
      %vm864 = vcmask 138240
      %v865 = vsel %vm864, %v861, -inf
      %866 = vmax.xlane.f32.xlu0 %v865
      %v867 = vpop.xlane.xlu0 %866
      %v868 = vsel %vm864, %v862, -inf
      %869 = vmax.xlane.f32.xlu0 %v868
      %v870 = vpop.xlane.xlu0 %869
      %vm871 = vcmask 131072
      %v872 = vsel %vm871, %v863, -inf
      %873 = vmax.xlane.f32.xlu0 %v872
      %v874 = vpop.xlane.xlu0 %873
      %v875 = vsub.f32 %v861, %v867
      %v876 = vsub.f32 %v862, %v870
      %v877 = vsub.f32 %v863, %v874
      %v878 = vmul.f32 %v875, 1.442695
      %v879 = vpow.pop %v878
      %v880 = vmul.f32 %v876, 1.442695
      %v881 = vpow.pop %v880
      %v882 = vmul.f32 %v877, 1.442695
      %v883 = vpow.pop %v882
      %v884 = vsel %vm864, %v879, 0.0
      %885 = vadd.xlane.f32.xlu0 %v884
      %v886 = vpop.xlane.xlu0 %885
      %v887 = vsel %vm864, %v881, 0.0
      %888 = vadd.xlane.f32.xlu0 %v887
      %v889 = vpop.xlane.xlu0 %888
      %v890 = vsel %vm871, %v883, 0.0
      %891 = vadd.xlane.f32.xlu0 %v890
      %v892 = vpop.xlane.xlu0 %891
      %v893 = vpack.c.bf16 %v881, %v879
      %v894 = vpack.c.bf16 %v883, %v883
      %v896 = vsel %vm864, %v893, 0
      %v899 = vsel %vm864, %v894, 0
      %v901 = vsel 0, 4294967295, 65535
      %v902 = vsel %vm452, %v901, 0
      %v904 = vand.u32 %v799, %v902
      %906 = vmatprep.subr.bf16.mxu0 0
      %907 = vmatpush1.bf16.msra.mxu0 %v798
      %908 = vmatprep.subr.bf16.mxu0 0
      %909 = vmatpush1.bf16.msra.mxu0 %v904
      %910 = vmatprep.subr.bf16.mxu0 0
      %911 = vmatpush1.bf16.msra.mxu0 0
      %912 = vmatprep.subr.bf16.mxu0 0
      %913 = vmatpush1.bf16.msra.mxu0 0
      %914 = vmatprep.subr.bf16.mxu0 0
      %915 = vmatpush1.bf16.msra.mxu0 0
      %916 = vmatprep.subr.bf16.mxu0 0
      %917 = vmatpush1.bf16.msra.mxu0 0
      %918 = vmatprep.subr.bf16.mxu0 0
      %919 = vmatpush1.bf16.msra.mxu0 0
      %920 = vmatprep.subr.bf16.mxu0 0
      %921 = vmatpush1.bf16.msra.mxu0 0
      %922 = vmatprep.subr.bf16.mxu0 0
      %923 = vmatpush1.bf16.msra.mxu0 0
      %924 = vmatprep.subr.bf16.mxu0 0
      %925 = vmatpush1.bf16.msra.mxu0 0
      %926 = vmatprep.subr.bf16.mxu0 0
      %927 = vmatpush1.bf16.msra.mxu0 0
      %928 = vmatprep.subr.bf16.mxu0 0
      %929 = vmatpush1.bf16.msra.mxu0 0
      %930 = vmatprep.subr.bf16.mxu0 0
      %931 = vmatpush1.bf16.msra.mxu0 0
      %932 = vmatprep.subr.bf16.mxu0 0
      %933 = vmatpush1.bf16.msra.mxu0 0
      %934 = vmatprep.subr.bf16.mxu0 0
      %935 = vmatpush1.bf16.msra.mxu0 0
      %936 = vmatprep.subr.bf16.mxu0 0
      %937 = vmatpush1.bf16.msra.mxu0 0
      %938 = vmatprep.mubr.bf16.mxu0 0
      %939 = vmatmul.mubr.bf16.gmra.mrb[0].mxu0 %v896
      %v940 = vpop.f32.mrb[0].mxu0
      %v941 = vadd.f32 0.0, %v940
      %v942 = vpop.f32.mrb[0].mxu0
      %v943 = vpop.f32.mrb[0].mxu0
      %v944 = vadd.f32 0.0, %v943
      %v945 = vpop.f32.mrb[0].mxu0
      %946 = vmatprep.mubr.bf16.mxu0 0
      %947 = vmatmul.mubr.bf16.gmra.mrb[0].mxu0 %v899
      %v948 = vpop.f32.mrb[0].mxu0
      %v949 = vadd.f32 0.0, %v948
      %v950 = vpop.f32.mrb[0].mxu0
      %v951 = vpop.f32.mrb[0].mxu0
      %v952 = vpop.f32.mrb[0].mxu0
      %953 = vdwg.mxu0
      %v954 = vrcp.pop %v886
      %v955 = vrcp.pop %v889
      %v956 = vrcp.pop %v892
      %v957 = vmul.f32 %v941, %v954
      %v958 = vmul.f32 %v944, %v955
      %v959 = vmul.f32 %v949, %v956
      %v960 = vpack.c.bf16 %v958, %v957
      %v961 = vpack.c.bf16 %v959, %v959
      %v962 = vld [vmem:[%s5] sm:$0xf]
      %v963 = vld [vmem:[%s5 + $0x4] sm:$0xf]
      %v964 = vld [vmem:[%s5 + $0x8] sm:$0xf]
      %v965 = vld [vmem:[%s5 + $0xc] sm:$0xf]
      %968 = vrot.lane.b32.xlu0 %v794, 96
      %v969 = vpop.permute.xlu0 %968
      %970 = vrot.lane.b32.xlu0 %v795, 96
      %v971 = vpop.permute.xlu0 %970
      %974 = vrot.lane.b32.xlu0 %v796, 96
      %v975 = vpop.permute.xlu0 %974
      %976 = vrot.lane.b32.xlu0 %v797, 96
      %v977 = vpop.permute.xlu0 %976
      %v979 = vsel %vm800, %v969, 0
      %v982 = vsel %vm800, %v971, 0
      %v985 = vsel %vm800, %v975, 0
      %v988 = vsel %vm800, %v977, 0
      %990 = vmatprep.subr.bf16.mxu0 0
      %991 = vmatpush1.bf16.xpose.msra.mxu0 %v985
      %992 = vmatprep.subr.bf16.mxu0 0
      %993 = vmatpush1.bf16.xpose.msra.mxu0 %v988
      %994 = vmatprep.subr.bf16.mxu0 0
      %995 = vmatpush1.bf16.xpose.msra.mxu0 0
      %996 = vmatprep.subr.bf16.mxu0 0
      %997 = vmatpush1.bf16.xpose.msra.mxu0 0
      %998 = vmatprep.subr.bf16.mxu0 0
      %999 = vmatpush1.bf16.xpose.msra.mxu0 0
      %1000 = vmatprep.subr.bf16.mxu0 0
      %1001 = vmatpush1.bf16.xpose.msra.mxu0 0
      %1002 = vmatprep.subr.bf16.mxu0 0
      %1003 = vmatpush1.bf16.xpose.msra.mxu0 0
      %1004 = vmatprep.subr.bf16.mxu0 0
      %1005 = vmatpush1.bf16.xpose.msra.mxu0 0
      %1006 = vmatprep.subr.bf16.mxu0 0
      %1007 = vmatpush1.bf16.xpose.msra.mxu0 0
      %1008 = vmatprep.subr.bf16.mxu0 0
      %1009 = vmatpush1.bf16.xpose.msra.mxu0 0
      %1010 = vmatprep.subr.bf16.mxu0 0
      %1011 = vmatpush1.bf16.xpose.msra.mxu0 0
      %1012 = vmatprep.subr.bf16.mxu0 0
      %1013 = vmatpush1.bf16.xpose.msra.mxu0 0
      %1014 = vmatprep.subr.bf16.mxu0 0
      %1015 = vmatpush1.bf16.xpose.msra.mxu0 0
      %1016 = vmatprep.subr.bf16.mxu0 0
      %1017 = vmatpush1.bf16.xpose.msra.mxu0 0
      %1018 = vmatprep.subr.bf16.mxu0 0
      %1019 = vmatpush1.bf16.xpose.msra.mxu0 0
      %1020 = vmatprep.subr.bf16.mxu0 0
      %1021 = vmatpush1.bf16.xpose.msra.mxu0 0
      %1022 = vmatprep.mubr.bf16.mxu0 0
      %1023 = vmatmul.mubr.bf16.gmra.mrb[0].mxu0 %v979
      %v1024 = vpop.f32.mrb[0].mxu0
      %v1025 = vadd.f32 0.0, %v1024
      %v1026 = vpop.f32.mrb[0].mxu0
      %v1027 = vpop.f32.mrb[0].mxu0
      %v1028 = vadd.f32 0.0, %v1027
      %v1029 = vpop.f32.mrb[0].mxu0
      %1030 = vmatprep.mubr.bf16.mxu0 0
      %1031 = vmatmul.mubr.bf16.gmra.mrb[0].mxu0 %v982
      %v1032 = vpop.f32.mrb[0].mxu0
      %v1033 = vadd.f32 0.0, %v1032
      %v1034 = vpop.f32.mrb[0].mxu0
      %v1035 = vpop.f32.mrb[0].mxu0
      %v1036 = vpop.f32.mrb[0].mxu0
      %1037 = vdwg.mxu0
      %v1038 = vmul.f32 %v1025, 0.17677669
      %v1039 = vmul.f32 %v1028, 0.17677669
      %v1040 = vmul.f32 %v1033, 0.17677669
      %v1041 = vsel %vm864, %v1038, -inf
      %1042 = vmax.xlane.f32.xlu0 %v1041
      %v1043 = vpop.xlane.xlu0 %1042
      %v1044 = vsel %vm864, %v1039, -inf
      %1045 = vmax.xlane.f32.xlu0 %v1044
      %v1046 = vpop.xlane.xlu0 %1045
      %v1047 = vsel %vm871, %v1040, -inf
      %1048 = vmax.xlane.f32.xlu0 %v1047
      %v1049 = vpop.xlane.xlu0 %1048
      %v1050 = vsub.f32 %v1038, %v1043
      %v1051 = vsub.f32 %v1039, %v1046
      %v1052 = vsub.f32 %v1040, %v1049
      %v1053 = vmul.f32 %v1050, 1.442695
      %v1054 = vpow.pop %v1053
      %v1055 = vmul.f32 %v1051, 1.442695
      %v1056 = vpow.pop %v1055
      %v1057 = vmul.f32 %v1052, 1.442695
      %v1058 = vpow.pop %v1057
      %v1059 = vsel %vm864, %v1054, 0.0
      %1060 = vadd.xlane.f32.xlu0 %v1059
      %v1061 = vpop.xlane.xlu0 %1060
      %v1062 = vsel %vm864, %v1056, 0.0
      %1063 = vadd.xlane.f32.xlu0 %v1062
      %v1064 = vpop.xlane.xlu0 %1063
      %v1065 = vsel %vm871, %v1058, 0.0
      %1066 = vadd.xlane.f32.xlu0 %v1065
      %v1067 = vpop.xlane.xlu0 %1066
      %v1068 = vpack.c.bf16 %v1056, %v1054
      %v1069 = vpack.c.bf16 %v1058, %v1058
      %1072 = vrot.lane.b32.xlu0 %v798, 96
      %v1073 = vpop.permute.xlu0 %1072
      %1074 = vrot.lane.b32.xlu0 %v799, 96
      %v1075 = vpop.permute.xlu0 %1074
      %v1078 = vsel %vm864, %v1068, 0
      %v1081 = vsel %vm864, %v1069, 0
      %v1084 = vand.u32 %v1075, %v902
      %1086 = vmatprep.subr.bf16.mxu0 0
      %1087 = vmatpush1.bf16.msra.mxu0 %v1073
      %1088 = vmatprep.subr.bf16.mxu0 0
      %1089 = vmatpush1.bf16.msra.mxu0 %v1084
      %1090 = vmatprep.subr.bf16.mxu0 0
      %1091 = vmatpush1.bf16.msra.mxu0 0
      %1092 = vmatprep.subr.bf16.mxu0 0
      %1093 = vmatpush1.bf16.msra.mxu0 0
      %1094 = vmatprep.subr.bf16.mxu0 0
      %1095 = vmatpush1.bf16.msra.mxu0 0
      %1096 = vmatprep.subr.bf16.mxu0 0
      %1097 = vmatpush1.bf16.msra.mxu0 0
      %1098 = vmatprep.subr.bf16.mxu0 0
      %1099 = vmatpush1.bf16.msra.mxu0 0
      %1100 = vmatprep.subr.bf16.mxu0 0
      %1101 = vmatpush1.bf16.msra.mxu0 0
      %1102 = vmatprep.subr.bf16.mxu0 0
      %1103 = vmatpush1.bf16.msra.mxu0 0
      %1104 = vmatprep.subr.bf16.mxu0 0
      %1105 = vmatpush1.bf16.msra.mxu0 0
      %1106 = vmatprep.subr.bf16.mxu0 0
      %1107 = vmatpush1.bf16.msra.mxu0 0
      %1108 = vmatprep.subr.bf16.mxu0 0
      %1109 = vmatpush1.bf16.msra.mxu0 0
      %1110 = vmatprep.subr.bf16.mxu0 0
      %1111 = vmatpush1.bf16.msra.mxu0 0
      %1112 = vmatprep.subr.bf16.mxu0 0
      %1113 = vmatpush1.bf16.msra.mxu0 0
      %1114 = vmatprep.subr.bf16.mxu0 0
      %1115 = vmatpush1.bf16.msra.mxu0 0
      %1116 = vmatprep.subr.bf16.mxu0 0
      %1117 = vmatpush1.bf16.msra.mxu0 0
      %1118 = vmatprep.mubr.bf16.mxu0 0
      %1119 = vmatmul.mubr.bf16.gmra.mrb[0].mxu0 %v1078
      %v1120 = vpop.f32.mrb[0].mxu0
      %v1121 = vadd.f32 0.0, %v1120
      %v1122 = vpop.f32.mrb[0].mxu0
      %v1123 = vpop.f32.mrb[0].mxu0
      %v1124 = vadd.f32 0.0, %v1123
      %v1125 = vpop.f32.mrb[0].mxu0
      %1126 = vmatprep.mubr.bf16.mxu0 0
      %1127 = vmatmul.mubr.bf16.gmra.mrb[0].mxu0 %v1081
      %v1128 = vpop.f32.mrb[0].mxu0
      %v1129 = vadd.f32 0.0, %v1128
      %v1130 = vpop.f32.mrb[0].mxu0
      %v1131 = vpop.f32.mrb[0].mxu0
      %v1132 = vpop.f32.mrb[0].mxu0
      %1133 = vdwg.mxu0
      %v1134 = vrcp.pop %v1061
      %v1135 = vrcp.pop %v1064
      %v1136 = vrcp.pop %v1067
      %v1137 = vmul.f32 %v1121, %v1134
      %v1138 = vmul.f32 %v1124, %v1135
      %v1139 = vmul.f32 %v1129, %v1136
      %v1140 = vpack.c.bf16 %v1138, %v1137
      %v1141 = vpack.c.bf16 %v1139, %v1139
      %v1142 = vld [vmem:[%s5 + $0x10] sm:$0xf]
      %v1143 = vld [vmem:[%s5 + $0x14] sm:$0xf]
      %v1144 = vld [vmem:[%s5 + $0x18] sm:$0xf]
      %v1145 = vld [vmem:[%s5 + $0x1c] sm:$0xf]
      %v1150 = vunpack.c.l.b16 %v1142
      %v1151 = vunpack.c.l.b16 %v1143
      %v1152 = vunpack.c.l.b16 %v1144
      %v1153 = vunpack.c.l.b16 %v1145
      %v1154 = vpack.c.b16 %v1151, %v1150
      %v1155 = vpack.c.b16 %v1153, %v1152
      %v1159 = vsel %vm800, %v1140, 0
      %v1162 = vsel %vm800, %v1141, 0
      %1164 = vmatprep.subr.bf16.mxu0 0
      %1165 = vmatpush1.bf16.msra.mxu0 %v1154
      %1166 = vmatprep.subr.bf16.mxu0 0
      %1167 = vmatpush1.bf16.msra.mxu0 %v1155
      %1168 = vmatprep.subr.bf16.mxu0 0
      %1169 = vmatpush1.bf16.msra.mxu0 0
      %1170 = vmatprep.subr.bf16.mxu0 0
      %1171 = vmatpush1.bf16.msra.mxu0 0
      %1172 = vmatprep.subr.bf16.mxu0 0
      %1173 = vmatpush1.bf16.msra.mxu0 0
      %1174 = vmatprep.subr.bf16.mxu0 0
      %1175 = vmatpush1.bf16.msra.mxu0 0
      %1176 = vmatprep.subr.bf16.mxu0 0
      %1177 = vmatpush1.bf16.msra.mxu0 0
      %1178 = vmatprep.subr.bf16.mxu0 0
      %1179 = vmatpush1.bf16.msra.mxu0 0
      %1180 = vmatprep.subr.bf16.mxu0 0
      %1181 = vmatpush1.bf16.msra.mxu0 0
      %1182 = vmatprep.subr.bf16.mxu0 0
      %1183 = vmatpush1.bf16.msra.mxu0 0
      %1184 = vmatprep.subr.bf16.mxu0 0
      %1185 = vmatpush1.bf16.msra.mxu0 0
      %1186 = vmatprep.subr.bf16.mxu0 0
      %1187 = vmatpush1.bf16.msra.mxu0 0
      %1188 = vmatprep.subr.bf16.mxu0 0
      %1189 = vmatpush1.bf16.msra.mxu0 0
      %1190 = vmatprep.subr.bf16.mxu0 0
      %1191 = vmatpush1.bf16.msra.mxu0 0
      %1192 = vmatprep.subr.bf16.mxu0 0
      %1193 = vmatpush1.bf16.msra.mxu0 0
      %1194 = vmatprep.subr.bf16.mxu0 0
      %1195 = vmatpush1.bf16.msra.mxu0 0
      %1196 = vmatprep.mubr.bf16.mxu0 0
      %1197 = vmatmul.mubr.bf16.gmra.mrb[0].mxu0 %v1159
      %v1198 = vpop.f32.mrb[0].mxu0
      %v1199 = vadd.f32 0.0, %v1198
      %v1200 = vpop.f32.mrb[0].mxu0
      %v1201 = vpop.f32.mrb[0].mxu0
      %v1202 = vadd.f32 0.0, %v1201
      %v1203 = vpop.f32.mrb[0].mxu0
      %1204 = vmatprep.mubr.bf16.mxu0 0
      %1205 = vmatmul.mubr.bf16.gmra.mrb[0].mxu0 %v1162
      %v1206 = vpop.f32.mrb[0].mxu0
      %v1207 = vadd.f32 0.0, %v1206
      %v1208 = vpop.f32.mrb[0].mxu0
      %v1209 = vpop.f32.mrb[0].mxu0
      %v1210 = vpop.f32.mrb[0].mxu0
      %1211 = vdwg.mxu0
      %v1216 = vunpack.c.l.b16 %v962
      %v1217 = vunpack.c.l.b16 %v963
      %v1218 = vunpack.c.l.b16 %v964
      %v1219 = vunpack.c.l.b16 %v965
      %v1220 = vpack.c.b16 %v1217, %v1216
      %v1221 = vpack.c.b16 %v1219, %v1218
      %v1225 = vsel %vm800, %v960, 0
      %v1228 = vsel %vm800, %v961, 0
      %1230 = vmatprep.subr.bf16.mxu0 0
      %1231 = vmatpush1.bf16.msra.mxu0 %v1220
      %1232 = vmatprep.subr.bf16.mxu0 0
      %1233 = vmatpush1.bf16.msra.mxu0 %v1221
      %1234 = vmatprep.subr.bf16.mxu0 0
      %1235 = vmatpush1.bf16.msra.mxu0 0
      %1236 = vmatprep.subr.bf16.mxu0 0
      %1237 = vmatpush1.bf16.msra.mxu0 0
      %1238 = vmatprep.subr.bf16.mxu0 0
      %1239 = vmatpush1.bf16.msra.mxu0 0
      %1240 = vmatprep.subr.bf16.mxu0 0
      %1241 = vmatpush1.bf16.msra.mxu0 0
      %1242 = vmatprep.subr.bf16.mxu0 0
      %1243 = vmatpush1.bf16.msra.mxu0 0
      %1244 = vmatprep.subr.bf16.mxu0 0
      %1245 = vmatpush1.bf16.msra.mxu0 0
      %1246 = vmatprep.subr.bf16.mxu0 0
      %1247 = vmatpush1.bf16.msra.mxu0 0
      %1248 = vmatprep.subr.bf16.mxu0 0
      %1249 = vmatpush1.bf16.msra.mxu0 0
      %1250 = vmatprep.subr.bf16.mxu0 0
      %1251 = vmatpush1.bf16.msra.mxu0 0
      %1252 = vmatprep.subr.bf16.mxu0 0
      %1253 = vmatpush1.bf16.msra.mxu0 0
      %1254 = vmatprep.subr.bf16.mxu0 0
      %1255 = vmatpush1.bf16.msra.mxu0 0
      %1256 = vmatprep.subr.bf16.mxu0 0
      %1257 = vmatpush1.bf16.msra.mxu0 0
      %1258 = vmatprep.subr.bf16.mxu0 0
      %1259 = vmatpush1.bf16.msra.mxu0 0
      %1260 = vmatprep.subr.bf16.mxu0 0
      %1261 = vmatpush1.bf16.msra.mxu0 0
      %1262 = vmatprep.mubr.bf16.mxu0 0
      %1263 = vmatmul.mubr.bf16.gmra.mrb[0].mxu0 %v1225
      %v1264 = vpop.f32.mrb[0].mxu0
      %v1265 = vadd.f32 %v1199, %v1264
      %v1266 = vpop.f32.mrb[0].mxu0
      %v1267 = vpop.f32.mrb[0].mxu0
      %v1268 = vadd.f32 %v1202, %v1267
      %v1269 = vpop.f32.mrb[0].mxu0
      %1270 = vmatprep.mubr.bf16.mxu0 0
      %1271 = vmatmul.mubr.bf16.gmra.mrb[0].mxu0 %v1228
      %v1272 = vpop.f32.mrb[0].mxu0
      %v1273 = vadd.f32 %v1207, %v1272
      %v1274 = vpop.f32.mrb[0].mxu0
      %v1275 = vpop.f32.mrb[0].mxu0
      %v1276 = vpop.f32.mrb[0].mxu0
      %1277 = vdwg.mxu0
      %1278 = vrot.lane.b32.xlu0 %v794, 64
      %v1279 = vpop.permute.xlu0 %1278
      %1280 = vrot.lane.b32.xlu0 %v795, 64
      %v1281 = vpop.permute.xlu0 %1280
      %1282 = vrot.lane.b32.xlu0 %v796, 64
      %v1283 = vpop.permute.xlu0 %1282
      %1284 = vrot.lane.b32.xlu0 %v797, 64
      %v1285 = vpop.permute.xlu0 %1284
      %v1287 = vsel %vm800, %v1279, 0
      %v1290 = vsel %vm800, %v1281, 0
      %v1293 = vsel %vm800, %v1283, 0
      %v1296 = vsel %vm800, %v1285, 0
      %1298 = vmatprep.subr.bf16.mxu0 0
      %1299 = vmatpush1.bf16.xpose.msra.mxu0 %v1293
      %1300 = vmatprep.subr.bf16.mxu0 0
      %1301 = vmatpush1.bf16.xpose.msra.mxu0 %v1296
      %1302 = vmatprep.subr.bf16.mxu0 0
      %1303 = vmatpush1.bf16.xpose.msra.mxu0 0
      %1304 = vmatprep.subr.bf16.mxu0 0
      %1305 = vmatpush1.bf16.xpose.msra.mxu0 0
      %1306 = vmatprep.subr.bf16.mxu0 0
      %1307 = vmatpush1.bf16.xpose.msra.mxu0 0
      %1308 = vmatprep.subr.bf16.mxu0 0
      %1309 = vmatpush1.bf16.xpose.msra.mxu0 0
      %1310 = vmatprep.subr.bf16.mxu0 0
      %1311 = vmatpush1.bf16.xpose.msra.mxu0 0
      %1312 = vmatprep.subr.bf16.mxu0 0
      %1313 = vmatpush1.bf16.xpose.msra.mxu0 0
      %1314 = vmatprep.subr.bf16.mxu0 0
      %1315 = vmatpush1.bf16.xpose.msra.mxu0 0
      %1316 = vmatprep.subr.bf16.mxu0 0
      %1317 = vmatpush1.bf16.xpose.msra.mxu0 0
      %1318 = vmatprep.subr.bf16.mxu0 0
      %1319 = vmatpush1.bf16.xpose.msra.mxu0 0
      %1320 = vmatprep.subr.bf16.mxu0 0
      %1321 = vmatpush1.bf16.xpose.msra.mxu0 0
      %1322 = vmatprep.subr.bf16.mxu0 0
      %1323 = vmatpush1.bf16.xpose.msra.mxu0 0
      %1324 = vmatprep.subr.bf16.mxu0 0
      %1325 = vmatpush1.bf16.xpose.msra.mxu0 0
      %1326 = vmatprep.subr.bf16.mxu0 0
      %1327 = vmatpush1.bf16.xpose.msra.mxu0 0
      %1328 = vmatprep.subr.bf16.mxu0 0
      %1329 = vmatpush1.bf16.xpose.msra.mxu0 0
      %1330 = vmatprep.mubr.bf16.mxu0 0
      %1331 = vmatmul.mubr.bf16.gmra.mrb[0].mxu0 %v1287
      %v1332 = vpop.f32.mrb[0].mxu0
      %v1333 = vadd.f32 0.0, %v1332
      %v1334 = vpop.f32.mrb[0].mxu0
      %v1335 = vpop.f32.mrb[0].mxu0
      %v1336 = vadd.f32 0.0, %v1335
      %v1337 = vpop.f32.mrb[0].mxu0
      %1338 = vmatprep.mubr.bf16.mxu0 0
      %1339 = vmatmul.mubr.bf16.gmra.mrb[0].mxu0 %v1290
      %v1340 = vpop.f32.mrb[0].mxu0
      %v1341 = vadd.f32 0.0, %v1340
      %v1342 = vpop.f32.mrb[0].mxu0
      %v1343 = vpop.f32.mrb[0].mxu0
      %v1344 = vpop.f32.mrb[0].mxu0
      %1345 = vdwg.mxu0
      %v1346 = vmul.f32 %v1333, 0.17677669
      %v1347 = vmul.f32 %v1336, 0.17677669
      %v1348 = vmul.f32 %v1341, 0.17677669
      %v1349 = vsel %vm864, %v1346, -inf
      %1350 = vmax.xlane.f32.xlu0 %v1349
      %v1351 = vpop.xlane.xlu0 %1350
      %v1352 = vsel %vm864, %v1347, -inf
      %1353 = vmax.xlane.f32.xlu0 %v1352
      %v1354 = vpop.xlane.xlu0 %1353
      %v1355 = vsel %vm871, %v1348, -inf
      %1356 = vmax.xlane.f32.xlu0 %v1355
      %v1357 = vpop.xlane.xlu0 %1356
      %v1358 = vsub.f32 %v1346, %v1351
      %v1359 = vsub.f32 %v1347, %v1354
      %v1360 = vsub.f32 %v1348, %v1357
      %v1361 = vmul.f32 %v1358, 1.442695
      %v1362 = vpow.pop %v1361
      %v1363 = vmul.f32 %v1359, 1.442695
      %v1364 = vpow.pop %v1363
      %v1365 = vmul.f32 %v1360, 1.442695
      %v1366 = vpow.pop %v1365
      %v1367 = vsel %vm864, %v1362, 0.0
      %1368 = vadd.xlane.f32.xlu0 %v1367
      %v1369 = vpop.xlane.xlu0 %1368
      %v1370 = vsel %vm864, %v1364, 0.0
      %1371 = vadd.xlane.f32.xlu0 %v1370
      %v1372 = vpop.xlane.xlu0 %1371
      %v1373 = vsel %vm871, %v1366, 0.0
      %1374 = vadd.xlane.f32.xlu0 %v1373
      %v1375 = vpop.xlane.xlu0 %1374
      %v1376 = vpack.c.bf16 %v1364, %v1362
      %v1377 = vpack.c.bf16 %v1366, %v1366
      %1378 = vrot.lane.b32.xlu0 %v798, 64
      %v1379 = vpop.permute.xlu0 %1378
      %1380 = vrot.lane.b32.xlu0 %v799, 64
      %v1381 = vpop.permute.xlu0 %1380
      %v1384 = vsel %vm864, %v1376, 0
      %v1387 = vsel %vm864, %v1377, 0
      %v1390 = vand.u32 %v1381, %v902
      %1392 = vmatprep.subr.bf16.mxu0 0
      %1393 = vmatpush1.bf16.msra.mxu0 %v1379
      %1394 = vmatprep.subr.bf16.mxu0 0
      %1395 = vmatpush1.bf16.msra.mxu0 %v1390
      %1396 = vmatprep.subr.bf16.mxu0 0
      %1397 = vmatpush1.bf16.msra.mxu0 0
      %1398 = vmatprep.subr.bf16.mxu0 0
      %1399 = vmatpush1.bf16.msra.mxu0 0
      %1400 = vmatprep.subr.bf16.mxu0 0
      %1401 = vmatpush1.bf16.msra.mxu0 0
      %1402 = vmatprep.subr.bf16.mxu0 0
      %1403 = vmatpush1.bf16.msra.mxu0 0
      %1404 = vmatprep.subr.bf16.mxu0 0
      %1405 = vmatpush1.bf16.msra.mxu0 0
      %1406 = vmatprep.subr.bf16.mxu0 0
      %1407 = vmatpush1.bf16.msra.mxu0 0
      %1408 = vmatprep.subr.bf16.mxu0 0
      %1409 = vmatpush1.bf16.msra.mxu0 0
      %1410 = vmatprep.subr.bf16.mxu0 0
      %1411 = vmatpush1.bf16.msra.mxu0 0
      %1412 = vmatprep.subr.bf16.mxu0 0
      %1413 = vmatpush1.bf16.msra.mxu0 0
      %1414 = vmatprep.subr.bf16.mxu0 0
      %1415 = vmatpush1.bf16.msra.mxu0 0
      %1416 = vmatprep.subr.bf16.mxu0 0
      %1417 = vmatpush1.bf16.msra.mxu0 0
      %1418 = vmatprep.subr.bf16.mxu0 0
      %1419 = vmatpush1.bf16.msra.mxu0 0
      %1420 = vmatprep.subr.bf16.mxu0 0
      %1421 = vmatpush1.bf16.msra.mxu0 0
      %1422 = vmatprep.subr.bf16.mxu0 0
      %1423 = vmatpush1.bf16.msra.mxu0 0
      %1424 = vmatprep.mubr.bf16.mxu0 0
      %1425 = vmatmul.mubr.bf16.gmra.mrb[0].mxu0 %v1384
      %v1426 = vpop.f32.mrb[0].mxu0
      %v1427 = vadd.f32 0.0, %v1426
      %v1428 = vpop.f32.mrb[0].mxu0
      %v1429 = vpop.f32.mrb[0].mxu0
      %v1430 = vadd.f32 0.0, %v1429
      %v1431 = vpop.f32.mrb[0].mxu0
      %1432 = vmatprep.mubr.bf16.mxu0 0
      %1433 = vmatmul.mubr.bf16.gmra.mrb[0].mxu0 %v1387
      %v1434 = vpop.f32.mrb[0].mxu0
      %v1435 = vadd.f32 0.0, %v1434
      %v1436 = vpop.f32.mrb[0].mxu0
      %v1437 = vpop.f32.mrb[0].mxu0
      %v1438 = vpop.f32.mrb[0].mxu0
      %1439 = vdwg.mxu0
      %v1440 = vrcp.pop %v1369
      %v1441 = vrcp.pop %v1372
      %v1442 = vrcp.pop %v1375
      %v1443 = vmul.f32 %v1427, %v1440
      %v1444 = vmul.f32 %v1430, %v1441
      %v1445 = vmul.f32 %v1435, %v1442
      %v1446 = vpack.c.bf16 %v1444, %v1443
      %v1447 = vpack.c.bf16 %v1445, %v1445
      %v1448 = vld [vmem:[%s5 + $0x20] sm:$0xf]
      %v1449 = vld [vmem:[%s5 + $0x24] sm:$0xf]
      %v1450 = vld [vmem:[%s5 + $0x28] sm:$0xf]
      %v1451 = vld [vmem:[%s5 + $0x2c] sm:$0xf]
      %v1456 = vunpack.c.l.b16 %v1448
      %v1457 = vunpack.c.l.b16 %v1449
      %v1458 = vunpack.c.l.b16 %v1450
      %v1459 = vunpack.c.l.b16 %v1451
      %v1460 = vpack.c.b16 %v1457, %v1456
      %v1461 = vpack.c.b16 %v1459, %v1458
      %v1465 = vsel %vm800, %v1446, 0
      %v1468 = vsel %vm800, %v1447, 0
      %1470 = vmatprep.subr.bf16.mxu0 0
      %1471 = vmatpush1.bf16.msra.mxu0 %v1460
      %1472 = vmatprep.subr.bf16.mxu0 0
      %1473 = vmatpush1.bf16.msra.mxu0 %v1461
      %1474 = vmatprep.subr.bf16.mxu0 0
      %1475 = vmatpush1.bf16.msra.mxu0 0
      %1476 = vmatprep.subr.bf16.mxu0 0
      %1477 = vmatpush1.bf16.msra.mxu0 0
      %1478 = vmatprep.subr.bf16.mxu0 0
      %1479 = vmatpush1.bf16.msra.mxu0 0
      %1480 = vmatprep.subr.bf16.mxu0 0
      %1481 = vmatpush1.bf16.msra.mxu0 0
      %1482 = vmatprep.subr.bf16.mxu0 0
      %1483 = vmatpush1.bf16.msra.mxu0 0
      %1484 = vmatprep.subr.bf16.mxu0 0
      %1485 = vmatpush1.bf16.msra.mxu0 0
      %1486 = vmatprep.subr.bf16.mxu0 0
      %1487 = vmatpush1.bf16.msra.mxu0 0
      %1488 = vmatprep.subr.bf16.mxu0 0
      %1489 = vmatpush1.bf16.msra.mxu0 0
      %1490 = vmatprep.subr.bf16.mxu0 0
      %1491 = vmatpush1.bf16.msra.mxu0 0
      %1492 = vmatprep.subr.bf16.mxu0 0
      %1493 = vmatpush1.bf16.msra.mxu0 0
      %1494 = vmatprep.subr.bf16.mxu0 0
      %1495 = vmatpush1.bf16.msra.mxu0 0
      %1496 = vmatprep.subr.bf16.mxu0 0
      %1497 = vmatpush1.bf16.msra.mxu0 0
      %1498 = vmatprep.subr.bf16.mxu0 0
      %1499 = vmatpush1.bf16.msra.mxu0 0
      %1500 = vmatprep.subr.bf16.mxu0 0
      %1501 = vmatpush1.bf16.msra.mxu0 0
      %1502 = vmatprep.mubr.bf16.mxu0 0
      %1503 = vmatmul.mubr.bf16.gmra.mrb[0].mxu0 %v1465
      %v1504 = vpop.f32.mrb[0].mxu0
      %v1505 = vadd.f32 0.0, %v1504
      %v1506 = vpop.f32.mrb[0].mxu0
      %v1507 = vpop.f32.mrb[0].mxu0
      %v1508 = vadd.f32 0.0, %v1507
      %v1509 = vpop.f32.mrb[0].mxu0
      %1510 = vmatprep.mubr.bf16.mxu0 0
      %1511 = vmatmul.mubr.bf16.gmra.mrb[0].mxu0 %v1468
      %v1512 = vpop.f32.mrb[0].mxu0
      %v1513 = vadd.f32 0.0, %v1512
      %v1514 = vpop.f32.mrb[0].mxu0
      %v1515 = vpop.f32.mrb[0].mxu0
      %v1516 = vpop.f32.mrb[0].mxu0
      %1517 = vdwg.mxu0
      %v1518 = vadd.f32 %v1265, %v1505
      %v1519 = vadd.f32 %v1268, %v1508
      %v1520 = vadd.f32 %v1273, %v1513
      %1521 = vrot.lane.b32.xlu0 %v794, 32
      %v1522 = vpop.permute.xlu0 %1521
      %1523 = vrot.lane.b32.xlu0 %v795, 32
      %v1524 = vpop.permute.xlu0 %1523
      %1525 = vrot.lane.b32.xlu0 %v796, 32
      %v1526 = vpop.permute.xlu0 %1525
      %1527 = vrot.lane.b32.xlu0 %v797, 32
      %v1528 = vpop.permute.xlu0 %1527
      %v1530 = vsel %vm800, %v1522, 0
      %v1533 = vsel %vm800, %v1524, 0
      %v1536 = vsel %vm800, %v1526, 0
      %v1539 = vsel %vm800, %v1528, 0
      %1541 = vmatprep.subr.bf16.mxu0 0
      %1542 = vmatpush1.bf16.xpose.msra.mxu0 %v1536
      %1543 = vmatprep.subr.bf16.mxu0 0
      %1544 = vmatpush1.bf16.xpose.msra.mxu0 %v1539
      %1545 = vmatprep.subr.bf16.mxu0 0
      %1546 = vmatpush1.bf16.xpose.msra.mxu0 0
      %1547 = vmatprep.subr.bf16.mxu0 0
      %1548 = vmatpush1.bf16.xpose.msra.mxu0 0
      %1549 = vmatprep.subr.bf16.mxu0 0
      %1550 = vmatpush1.bf16.xpose.msra.mxu0 0
      %1551 = vmatprep.subr.bf16.mxu0 0
      %1552 = vmatpush1.bf16.xpose.msra.mxu0 0
      %1553 = vmatprep.subr.bf16.mxu0 0
      %1554 = vmatpush1.bf16.xpose.msra.mxu0 0
      %1555 = vmatprep.subr.bf16.mxu0 0
      %1556 = vmatpush1.bf16.xpose.msra.mxu0 0
      %1557 = vmatprep.subr.bf16.mxu0 0
      %1558 = vmatpush1.bf16.xpose.msra.mxu0 0
      %1559 = vmatprep.subr.bf16.mxu0 0
      %1560 = vmatpush1.bf16.xpose.msra.mxu0 0
      %1561 = vmatprep.subr.bf16.mxu0 0
      %1562 = vmatpush1.bf16.xpose.msra.mxu0 0
      %1563 = vmatprep.subr.bf16.mxu0 0
      %1564 = vmatpush1.bf16.xpose.msra.mxu0 0
      %1565 = vmatprep.subr.bf16.mxu0 0
      %1566 = vmatpush1.bf16.xpose.msra.mxu0 0
      %1567 = vmatprep.subr.bf16.mxu0 0
      %1568 = vmatpush1.bf16.xpose.msra.mxu0 0
      %1569 = vmatprep.subr.bf16.mxu0 0
      %1570 = vmatpush1.bf16.xpose.msra.mxu0 0
      %1571 = vmatprep.subr.bf16.mxu0 0
      %1572 = vmatpush1.bf16.xpose.msra.mxu0 0
      %1573 = vmatprep.mubr.bf16.mxu0 0
      %1574 = vmatmul.mubr.bf16.gmra.mrb[0].mxu0 %v1530
      %v1575 = vpop.f32.mrb[0].mxu0
      %v1576 = vadd.f32 0.0, %v1575
      %v1577 = vpop.f32.mrb[0].mxu0
      %v1578 = vpop.f32.mrb[0].mxu0
      %v1579 = vadd.f32 0.0, %v1578
      %v1580 = vpop.f32.mrb[0].mxu0
      %1581 = vmatprep.mubr.bf16.mxu0 0
      %1582 = vmatmul.mubr.bf16.gmra.mrb[0].mxu0 %v1533
      %v1583 = vpop.f32.mrb[0].mxu0
      %v1584 = vadd.f32 0.0, %v1583
      %v1585 = vpop.f32.mrb[0].mxu0
      %v1586 = vpop.f32.mrb[0].mxu0
      %v1587 = vpop.f32.mrb[0].mxu0
      %1588 = vdwg.mxu0
      %v1589 = vmul.f32 %v1576, 0.17677669
      %v1590 = vmul.f32 %v1579, 0.17677669
      %v1591 = vmul.f32 %v1584, 0.17677669
      %v1592 = vsel %vm864, %v1589, -inf
      %1593 = vmax.xlane.f32.xlu0 %v1592
      %v1594 = vpop.xlane.xlu0 %1593
      %v1595 = vsel %vm864, %v1590, -inf
      %1596 = vmax.xlane.f32.xlu0 %v1595
      %v1597 = vpop.xlane.xlu0 %1596
      %v1598 = vsel %vm871, %v1591, -inf
      %1599 = vmax.xlane.f32.xlu0 %v1598
      %v1600 = vpop.xlane.xlu0 %1599
      %v1601 = vsub.f32 %v1589, %v1594
      %v1602 = vsub.f32 %v1590, %v1597
      %v1603 = vsub.f32 %v1591, %v1600
      %v1604 = vmul.f32 %v1601, 1.442695
      %v1605 = vpow.pop %v1604
      %v1606 = vmul.f32 %v1602, 1.442695
      %v1607 = vpow.pop %v1606
      %v1608 = vmul.f32 %v1603, 1.442695
      %v1609 = vpow.pop %v1608
      %v1610 = vsel %vm864, %v1605, 0.0
      %1611 = vadd.xlane.f32.xlu0 %v1610
      %v1612 = vpop.xlane.xlu0 %1611
      %v1613 = vsel %vm864, %v1607, 0.0
      %1614 = vadd.xlane.f32.xlu0 %v1613
      %v1615 = vpop.xlane.xlu0 %1614
      %v1616 = vsel %vm871, %v1609, 0.0
      %1617 = vadd.xlane.f32.xlu0 %v1616
      %v1618 = vpop.xlane.xlu0 %1617
      %v1619 = vpack.c.bf16 %v1607, %v1605
      %v1620 = vpack.c.bf16 %v1609, %v1609
      %1621 = vrot.lane.b32.xlu0 %v798, 32
      %v1622 = vpop.permute.xlu0 %1621
      %1623 = vrot.lane.b32.xlu0 %v799, 32
      %v1624 = vpop.permute.xlu0 %1623
      %v1627 = vsel %vm864, %v1619, 0
      %v1630 = vsel %vm864, %v1620, 0
      %v1633 = vand.u32 %v1624, %v902
      %1635 = vmatprep.subr.bf16.mxu0 0
      %1636 = vmatpush1.bf16.msra.mxu0 %v1622
      %1637 = vmatprep.subr.bf16.mxu0 0
      %1638 = vmatpush1.bf16.msra.mxu0 %v1633
      %1639 = vmatprep.subr.bf16.mxu0 0
      %1640 = vmatpush1.bf16.msra.mxu0 0
      %1641 = vmatprep.subr.bf16.mxu0 0
      %1642 = vmatpush1.bf16.msra.mxu0 0
      %1643 = vmatprep.subr.bf16.mxu0 0
      %1644 = vmatpush1.bf16.msra.mxu0 0
      %1645 = vmatprep.subr.bf16.mxu0 0
      %1646 = vmatpush1.bf16.msra.mxu0 0
      %1647 = vmatprep.subr.bf16.mxu0 0
      %1648 = vmatpush1.bf16.msra.mxu0 0
      %1649 = vmatprep.subr.bf16.mxu0 0
      %1650 = vmatpush1.bf16.msra.mxu0 0
      %1651 = vmatprep.subr.bf16.mxu0 0
      %1652 = vmatpush1.bf16.msra.mxu0 0
      %1653 = vmatprep.subr.bf16.mxu0 0
      %1654 = vmatpush1.bf16.msra.mxu0 0
      %1655 = vmatprep.subr.bf16.mxu0 0
      %1656 = vmatpush1.bf16.msra.mxu0 0
      %1657 = vmatprep.subr.bf16.mxu0 0
      %1658 = vmatpush1.bf16.msra.mxu0 0
      %1659 = vmatprep.subr.bf16.mxu0 0
      %1660 = vmatpush1.bf16.msra.mxu0 0
      %1661 = vmatprep.subr.bf16.mxu0 0
      %1662 = vmatpush1.bf16.msra.mxu0 0
      %1663 = vmatprep.subr.bf16.mxu0 0
      %1664 = vmatpush1.bf16.msra.mxu0 0
      %1665 = vmatprep.subr.bf16.mxu0 0
      %1666 = vmatpush1.bf16.msra.mxu0 0
      %1667 = vmatprep.mubr.bf16.mxu0 0
      %1668 = vmatmul.mubr.bf16.gmra.mrb[0].mxu0 %v1627
      %v1669 = vpop.f32.mrb[0].mxu0
      %v1670 = vadd.f32 0.0, %v1669
      %v1671 = vpop.f32.mrb[0].mxu0
      %v1672 = vpop.f32.mrb[0].mxu0
      %v1673 = vadd.f32 0.0, %v1672
      %v1674 = vpop.f32.mrb[0].mxu0
      %1675 = vmatprep.mubr.bf16.mxu0 0
      %1676 = vmatmul.mubr.bf16.gmra.mrb[0].mxu0 %v1630
      %v1677 = vpop.f32.mrb[0].mxu0
      %v1678 = vadd.f32 0.0, %v1677
      %v1679 = vpop.f32.mrb[0].mxu0
      %v1680 = vpop.f32.mrb[0].mxu0
      %v1681 = vpop.f32.mrb[0].mxu0
      %1682 = vdwg.mxu0
      %v1683 = vrcp.pop %v1612
      %v1684 = vrcp.pop %v1615
      %v1685 = vrcp.pop %v1618
      %v1686 = vmul.f32 %v1670, %v1683
      %v1687 = vmul.f32 %v1673, %v1684
      %v1688 = vmul.f32 %v1678, %v1685
      %v1689 = vpack.c.bf16 %v1687, %v1686
      %v1690 = vpack.c.bf16 %v1688, %v1688
      %v1691 = vld [vmem:[%s5 + $0x30] sm:$0xf]
      %v1692 = vld [vmem:[%s5 + $0x34] sm:$0xf]
      %v1693 = vld [vmem:[%s5 + $0x38] sm:$0xf]
      %v1694 = vld [vmem:[%s5 + $0x3c] sm:$0xf]
      %v1699 = vunpack.c.l.b16 %v1691
      %v1700 = vunpack.c.l.b16 %v1692
      %v1701 = vunpack.c.l.b16 %v1693
      %v1702 = vunpack.c.l.b16 %v1694
      %v1703 = vpack.c.b16 %v1700, %v1699
      %v1704 = vpack.c.b16 %v1702, %v1701
      %v1708 = vsel %vm800, %v1689, 0
      %v1711 = vsel %vm800, %v1690, 0
      %1713 = vmatprep.subr.bf16.mxu0 0
      %1714 = vmatpush1.bf16.msra.mxu0 %v1703
      %1715 = vmatprep.subr.bf16.mxu0 0
      %1716 = vmatpush1.bf16.msra.mxu0 %v1704
      %1717 = vmatprep.subr.bf16.mxu0 0
      %1718 = vmatpush1.bf16.msra.mxu0 0
      %1719 = vmatprep.subr.bf16.mxu0 0
      %1720 = vmatpush1.bf16.msra.mxu0 0
      %1721 = vmatprep.subr.bf16.mxu0 0
      %1722 = vmatpush1.bf16.msra.mxu0 0
      %1723 = vmatprep.subr.bf16.mxu0 0
      %1724 = vmatpush1.bf16.msra.mxu0 0
      %1725 = vmatprep.subr.bf16.mxu0 0
      %1726 = vmatpush1.bf16.msra.mxu0 0
      %1727 = vmatprep.subr.bf16.mxu0 0
      %1728 = vmatpush1.bf16.msra.mxu0 0
      %1729 = vmatprep.subr.bf16.mxu0 0
      %1730 = vmatpush1.bf16.msra.mxu0 0
      %1731 = vmatprep.subr.bf16.mxu0 0
      %1732 = vmatpush1.bf16.msra.mxu0 0
      %1733 = vmatprep.subr.bf16.mxu0 0
      %1734 = vmatpush1.bf16.msra.mxu0 0
      %1735 = vmatprep.subr.bf16.mxu0 0
      %1736 = vmatpush1.bf16.msra.mxu0 0
      %1737 = vmatprep.subr.bf16.mxu0 0
      %1738 = vmatpush1.bf16.msra.mxu0 0
      %1739 = vmatprep.subr.bf16.mxu0 0
      %1740 = vmatpush1.bf16.msra.mxu0 0
      %1741 = vmatprep.subr.bf16.mxu0 0
      %1742 = vmatpush1.bf16.msra.mxu0 0
      %1743 = vmatprep.subr.bf16.mxu0 0
      %1744 = vmatpush1.bf16.msra.mxu0 0
      %1745 = vmatprep.mubr.bf16.mxu0 0
      %1746 = vmatmul.mubr.bf16.gmra.mrb[0].mxu0 %v1708
      %v1747 = vpop.f32.mrb[0].mxu0
      %v1748 = vadd.f32 0.0, %v1747
      %v1749 = vpop.f32.mrb[0].mxu0
      %v1750 = vpop.f32.mrb[0].mxu0
      %v1751 = vadd.f32 0.0, %v1750
      %v1752 = vpop.f32.mrb[0].mxu0
      %1753 = vmatprep.mubr.bf16.mxu0 0
      %1754 = vmatmul.mubr.bf16.gmra.mrb[0].mxu0 %v1711
      %v1755 = vpop.f32.mrb[0].mxu0
      %v1756 = vadd.f32 0.0, %v1755
      %v1757 = vpop.f32.mrb[0].mxu0
      %v1758 = vpop.f32.mrb[0].mxu0
      %v1759 = vpop.f32.mrb[0].mxu0
      %1760 = vdwg.mxu0
      %v1761 = vadd.f32 %v1518, %v1748
      %v1762 = vadd.f32 %v1519, %v1751
      %v1763 = vadd.f32 %v1520, %v1756
      %v1764 = vadd.f32 %v445, %v1761
      %v1765 = vadd.f32 %v446, %v1762
      %v1766 = vadd.f32 %v447, %v1763
      %v1767 = vld [vmem:[%s6] sm:$0x1]
      %v1768 = vunpack.c.l.bf16 %v1767
      %v1769 = vlaneseq
      %v1770 = vshrl.u32 %v1769, 7
      %v1771 = vsub.s32 0, %v1770
      %v1772 = vrot.slane %v1768, %v1771
      %v1773 = vadd.f32 %v1764, %v1772
      %v1774 = vadd.f32 %v1765, %v1772
      %v1775 = vadd.f32 %v1766, %v1772
      %1776 = vadd.xlane.f32.xlu0 %v1773
      %v1777 = vpop.xlane.xlu0 %1776
      %1778 = vadd.xlane.f32.xlu0 %v1774
      %v1779 = vpop.xlane.xlu0 %1778
      %v1780 = vsel %vm452, %v1775, 0.0
      %1781 = vadd.xlane.f32.xlu0 %v1780
      %v1782 = vpop.xlane.xlu0 %1781
      %v1783 = vmul.f32 %v1777, %v456
      %v1784 = vmul.f32 %v1779, %v456
      %v1785 = vmul.f32 %v1782, %v456
      %v1786 = vsub.f32 %v1773, %v1783
      %v1787 = vsub.f32 %v1774, %v1784
      %v1788 = vsub.f32 %v1775, %v1785
      %v1789 = vmul.f32 %v1786, %v1786
      %v1790 = vmul.f32 %v1787, %v1787
      %v1791 = vmul.f32 %v1788, %v1788
      %1792 = vadd.xlane.f32.xlu0 %v1789
      %v1793 = vpop.xlane.xlu0 %1792
      %1794 = vadd.xlane.f32.xlu0 %v1790
      %v1795 = vpop.xlane.xlu0 %1794
      %v1796 = vsel %vm452, %v1791, 0.0
      %1797 = vadd.xlane.f32.xlu0 %v1796
      %v1798 = vpop.xlane.xlu0 %1797
      %v1799 = vmul.f32 %v1793, %v456
      %v1800 = vmul.f32 %v1795, %v456
      %v1801 = vmul.f32 %v1798, %v456
      %v1802 = vadd.f32 %v1799, 1e-06
      %v1803 = vadd.f32 %v1800, 1e-06
      %v1804 = vadd.f32 %v1801, 1e-06
      %v1805 = vrsqrt.pop %v1802
      %v1806 = vrsqrt.pop %v1803
      %v1807 = vrsqrt.pop %v1804
      %v1808 = vmul.f32 %v1786, %v1805
      %v1809 = vmul.f32 %v1787, %v1806
      %v1810 = vmul.f32 %v1788, %v1807
      %v1811 = vld [vmem:[%s7] sm:$0x1]
      %v1812 = vunpack.c.l.bf16 %v1811
      %v1813 = vlaneseq
      %v1814 = vshrl.u32 %v1813, 7
      %v1815 = vsub.s32 0, %v1814
      %v1816 = vrot.slane %v1812, %v1815
      %v1817 = vmul.f32 %v1808, %v1816
      %v1818 = vmul.f32 %v1809, %v1816
      %v1819 = vmul.f32 %v1810, %v1816
      %v1820 = vld [vmem:[%s8] sm:$0x1]
      %v1821 = vunpack.c.l.bf16 %v1820
      %v1822 = vlaneseq
      %v1823 = vshrl.u32 %v1822, 7
      %v1824 = vsub.s32 0, %v1823
      %v1825 = vrot.slane %v1821, %v1824
      %v1826 = vadd.f32 %v1817, %v1825
      %v1827 = vadd.f32 %v1818, %v1825
      %v1828 = vadd.f32 %v1819, %v1825
      %v1829 = vpack.c.bf16 %v1827, %v1826
      %v1830 = vpack.c.bf16 %v1828, %v1828
      %v1831 = vld [vmem:[%s9] sm:$0xff]
      %v1832 = vld [vmem:[%s9 + $0x8] sm:$0xff]
      %v1833 = vld [vmem:[%s9 + $0x10] sm:$0xff]
      %v1834 = vld [vmem:[%s9 + $0x18] sm:$0xff]
      %v1835 = vld [vmem:[%s9 + $0x20] sm:$0xff]
      %v1836 = vld [vmem:[%s9 + $0x28] sm:$0xff]
      %v1837 = vld [vmem:[%s9 + $0x30] sm:$0xff]
      %v1838 = vld [vmem:[%s9 + $0x38] sm:$0xff]
      %v1839 = vld [vmem:[%s9 + $0x40] sm:$0xff]
      %v1840 = vld [vmem:[%s9 + $0x48] sm:$0xff]
      %v1841 = vld [vmem:[%s9 + $0x50] sm:$0xff]
      %v1842 = vld [vmem:[%s9 + $0x58] sm:$0xff]
      %v1843 = vld [vmem:[%s9 + $0x60] sm:$0xff]
      %v1844 = vld [vmem:[%s9 + $0x68] sm:$0xff]
      %v1845 = vld [vmem:[%s9 + $0x70] sm:$0xff]
      %v1846 = vld [vmem:[%s9 + $0x78] sm:$0xff]
      %v1847 = vld [vmem:[%s9 + $0x80] sm:$0xff]
      %v1848 = vld [vmem:[%s9 + $0x88] sm:$0xff]
      %v1849 = vld [vmem:[%s9 + $0x90] sm:$0xff]
      %v1850 = vld [vmem:[%s9 + $0x98] sm:$0xff]
      %v1851 = vld [vmem:[%s9 + $0xa0] sm:$0xff]
      %v1852 = vld [vmem:[%s9 + $0xa8] sm:$0xff]
      %v1853 = vld [vmem:[%s9 + $0xb0] sm:$0xff]
      %v1854 = vld [vmem:[%s9 + $0xb8] sm:$0xff]
      %v1855 = vld [vmem:[%s9 + $0xc0] sm:$0xff]
      %v1856 = vld [vmem:[%s9 + $0xc8] sm:$0xff]
      %v1857 = vld [vmem:[%s9 + $0xd0] sm:$0xff]
      %v1858 = vld [vmem:[%s9 + $0xd8] sm:$0xff]
      %v1859 = vld [vmem:[%s9 + $0xe0] sm:$0xff]
      %v1860 = vld [vmem:[%s9 + $0xe8] sm:$0xff]
      %v1861 = vld [vmem:[%s9 + $0xf0] sm:$0xff]
      %v1862 = vld [vmem:[%s9 + $0xf8] sm:$0xff]
      %v1863 = vld [vmem:[%s10] sm:$0xf]
      %v1864 = vunpack.c.l.bf16 %v1863
      %v1866 = vlaneseq
      %v1867 = vshrl.u32 %v1866, 7
      %v1868 = vsub.s32 0, %v1867
      %v1869 = vrot.slane %v1864, %v1868
      %v1870 = vlaneseq
      %v1871 = vshrl.u32 %v1870, 7
      %v1872 = vsub.s32 2, %v1871
      %v1873 = vrot.slane %v1864, %v1872
      %v1874 = vlaneseq
      %v1875 = vshrl.u32 %v1874, 7
      %v1876 = vsub.s32 4, %v1875
      %v1877 = vrot.slane %v1864, %v1876
      %v1878 = vlaneseq
      %v1879 = vshrl.u32 %v1878, 7
      %v1880 = vsub.s32 6, %v1879
      %v1881 = vrot.slane %v1864, %v1880
      %v1886 = vlaneseq
      %v1887 = vshrl.u32 %v1886, 7
      %v1888 = vsub.s32 0, %v1887
      %v1889 = vrot.slane %v1869, %v1888
      %v1890 = vlaneseq
      %v1891 = vshrl.u32 %v1890, 7
      %v1892 = vsub.s32 0, %v1891
      %v1893 = vrot.slane %v1873, %v1892
      %v1894 = vlaneseq
      %v1895 = vshrl.u32 %v1894, 7
      %v1896 = vsub.s32 0, %v1895
      %v1897 = vrot.slane %v1877, %v1896
      %v1898 = vlaneseq
      %v1899 = vshrl.u32 %v1898, 7
      %v1900 = vsub.s32 0, %v1899
      %v1901 = vrot.slane %v1881, %v1900
      %v1934 = vunpack.c.l.b16 %v1831
      %v1935 = vunpack.c.h.b16 %v1831
      %v1936 = vunpack.c.l.b16 %v1832
      %v1937 = vunpack.c.h.b16 %v1832
      %v1938 = vunpack.c.l.b16 %v1833
      %v1939 = vunpack.c.h.b16 %v1833
      %v1940 = vunpack.c.l.b16 %v1834
      %v1941 = vunpack.c.h.b16 %v1834
      %v1942 = vunpack.c.l.b16 %v1835
      %v1943 = vunpack.c.h.b16 %v1835
      %v1944 = vunpack.c.l.b16 %v1836
      %v1945 = vunpack.c.h.b16 %v1836
      %v1946 = vunpack.c.l.b16 %v1837
      %v1947 = vunpack.c.h.b16 %v1837
      %v1948 = vunpack.c.l.b16 %v1838
      %v1949 = vunpack.c.h.b16 %v1838
      %v1950 = vunpack.c.l.b16 %v1839
      %v1951 = vunpack.c.h.b16 %v1839
      %v1952 = vunpack.c.l.b16 %v1840
      %v1953 = vunpack.c.h.b16 %v1840
      %v1954 = vunpack.c.l.b16 %v1841
      %v1955 = vunpack.c.h.b16 %v1841
      %v1956 = vunpack.c.l.b16 %v1842
      %v1957 = vunpack.c.h.b16 %v1842
      %v1958 = vunpack.c.l.b16 %v1843
      %v1959 = vunpack.c.h.b16 %v1843
      %v1960 = vunpack.c.l.b16 %v1844
      %v1961 = vunpack.c.h.b16 %v1844
      %v1962 = vunpack.c.l.b16 %v1845
      %v1963 = vunpack.c.h.b16 %v1845
      %v1964 = vunpack.c.l.b16 %v1846
      %v1965 = vunpack.c.h.b16 %v1846
      %v1966 = vunpack.c.l.b16 %v1847
      %v1967 = vunpack.c.h.b16 %v1847
      %v1968 = vunpack.c.l.b16 %v1848
      %v1969 = vunpack.c.h.b16 %v1848
      %v1970 = vunpack.c.l.b16 %v1849
      %v1971 = vunpack.c.h.b16 %v1849
      %v1972 = vunpack.c.l.b16 %v1850
      %v1973 = vunpack.c.h.b16 %v1850
      %v1974 = vunpack.c.l.b16 %v1851
      %v1975 = vunpack.c.h.b16 %v1851
      %v1976 = vunpack.c.l.b16 %v1852
      %v1977 = vunpack.c.h.b16 %v1852
      %v1978 = vunpack.c.l.b16 %v1853
      %v1979 = vunpack.c.h.b16 %v1853
      %v1980 = vunpack.c.l.b16 %v1854
      %v1981 = vunpack.c.h.b16 %v1854
      %v1982 = vunpack.c.l.b16 %v1855
      %v1983 = vunpack.c.h.b16 %v1855
      %v1984 = vunpack.c.l.b16 %v1856
      %v1985 = vunpack.c.h.b16 %v1856
      %v1986 = vunpack.c.l.b16 %v1857
      %v1987 = vunpack.c.h.b16 %v1857
      %v1988 = vunpack.c.l.b16 %v1858
      %v1989 = vunpack.c.h.b16 %v1858
      %v1990 = vunpack.c.l.b16 %v1859
      %v1991 = vunpack.c.h.b16 %v1859
      %v1992 = vunpack.c.l.b16 %v1860
      %v1993 = vunpack.c.h.b16 %v1860
      %v1994 = vunpack.c.l.b16 %v1861
      %v1995 = vunpack.c.h.b16 %v1861
      %v1996 = vunpack.c.l.b16 %v1862
      %v1997 = vunpack.c.h.b16 %v1862
      %v1998 = vpack.c.b16 %v1938, %v1934
      %v1999 = vpack.c.b16 %v1939, %v1935
      %v2000 = vpack.c.b16 %v1940, %v1936
      %v2001 = vpack.c.b16 %v1941, %v1937
      %v2002 = vpack.c.b16 %v1946, %v1942
      %v2003 = vpack.c.b16 %v1947, %v1943
      %v2004 = vpack.c.b16 %v1948, %v1944
      %v2005 = vpack.c.b16 %v1949, %v1945
      %v2006 = vpack.c.b16 %v1954, %v1950
      %v2007 = vpack.c.b16 %v1955, %v1951
      %v2008 = vpack.c.b16 %v1956, %v1952
      %v2009 = vpack.c.b16 %v1957, %v1953
      %v2010 = vpack.c.b16 %v1962, %v1958
      %v2011 = vpack.c.b16 %v1963, %v1959
      %v2012 = vpack.c.b16 %v1964, %v1960
      %v2013 = vpack.c.b16 %v1965, %v1961
      %v2014 = vpack.c.b16 %v1970, %v1966
      %v2015 = vpack.c.b16 %v1971, %v1967
      %v2016 = vpack.c.b16 %v1972, %v1968
      %v2017 = vpack.c.b16 %v1973, %v1969
      %v2018 = vpack.c.b16 %v1978, %v1974
      %v2019 = vpack.c.b16 %v1979, %v1975
      %v2020 = vpack.c.b16 %v1980, %v1976
      %v2021 = vpack.c.b16 %v1981, %v1977
      %v2022 = vpack.c.b16 %v1986, %v1982
      %v2023 = vpack.c.b16 %v1987, %v1983
      %v2024 = vpack.c.b16 %v1988, %v1984
      %v2025 = vpack.c.b16 %v1989, %v1985
      %v2026 = vpack.c.b16 %v1994, %v1990
      %v2027 = vpack.c.b16 %v1995, %v1991
      %v2028 = vpack.c.b16 %v1996, %v1992
      %v2029 = vpack.c.b16 %v1997, %v1993
      %2062 = vmatprep.subr.bf16.mxu0 %v1999
      %2063 = vmatpush1.bf16.msra.mxu0 %v1998
      %2064 = vmatprep.subr.bf16.mxu0 %v2003
      %2065 = vmatpush1.bf16.msra.mxu0 %v2002
      %2066 = vmatprep.subr.bf16.mxu0 %v2007
      %2067 = vmatpush1.bf16.msra.mxu0 %v2006
      %2068 = vmatprep.subr.bf16.mxu0 %v2011
      %2069 = vmatpush1.bf16.msra.mxu0 %v2010
      %2070 = vmatprep.subr.bf16.mxu0 %v2015
      %2071 = vmatpush1.bf16.msra.mxu0 %v2014
      %2072 = vmatprep.subr.bf16.mxu0 %v2019
      %2073 = vmatpush1.bf16.msra.mxu0 %v2018
      %2074 = vmatprep.subr.bf16.mxu0 %v2023
      %2075 = vmatpush1.bf16.msra.mxu0 %v2022
      %2076 = vmatprep.subr.bf16.mxu0 %v2027
      %2077 = vmatpush1.bf16.msra.mxu0 %v2026
      %2078 = vmatprep.subr.bf16.mxu0 0
      %2079 = vmatpush1.bf16.msra.mxu0 0
      %2080 = vmatprep.subr.bf16.mxu0 0
      %2081 = vmatpush1.bf16.msra.mxu0 0
      %2082 = vmatprep.subr.bf16.mxu0 0
      %2083 = vmatpush1.bf16.msra.mxu0 0
      %2084 = vmatprep.subr.bf16.mxu0 0
      %2085 = vmatpush1.bf16.msra.mxu0 0
      %2086 = vmatprep.subr.bf16.mxu0 0
      %2087 = vmatpush1.bf16.msra.mxu0 0
      %2088 = vmatprep.subr.bf16.mxu0 0
      %2089 = vmatpush1.bf16.msra.mxu0 0
      %2090 = vmatprep.subr.bf16.mxu0 0
      %2091 = vmatpush1.bf16.msra.mxu0 0
      %2092 = vmatprep.subr.bf16.mxu0 0
      %2093 = vmatpush1.bf16.msra.mxu0 0
      %2094 = vmatprep.mubr.bf16.mxu0 0
      %2095 = vmatmul.mubr.bf16.gmra.mrb[0].mxu0 %v1829
      %v2096 = vpop.f32.mrb[0].mxu0
      %v2097 = vadd.f32 %v1889, %v2096
      %v2098 = vpop.f32.mrb[0].mxu0
      %v2099 = vadd.f32 %v1893, %v2098
      %v2100 = vpop.f32.mrb[0].mxu0
      %v2101 = vadd.f32 %v1889, %v2100
      %v2102 = vpop.f32.mrb[0].mxu0
      %v2103 = vadd.f32 %v1893, %v2102
      %2104 = vmatprep.mubr.bf16.mxu0 0
      %2105 = vmatmul.mubr.bf16.gmra.mrb[0].mxu0 %v1830
      %v2106 = vpop.f32.mrb[0].mxu0
      %v2107 = vadd.f32 %v1889, %v2106
      %v2108 = vpop.f32.mrb[0].mxu0
      %v2109 = vadd.f32 %v1893, %v2108
      %v2110 = vpop.f32.mrb[0].mxu0
      %v2111 = vpop.f32.mrb[0].mxu0
      %2112 = vdwg.mxu0
      %2113 = vmatprep.subr.bf16.mxu0 %v2001
      %2114 = vmatpush1.bf16.msra.mxu0 %v2000
      %2115 = vmatprep.subr.bf16.mxu0 %v2005
      %2116 = vmatpush1.bf16.msra.mxu0 %v2004
      %2117 = vmatprep.subr.bf16.mxu0 %v2009
      %2118 = vmatpush1.bf16.msra.mxu0 %v2008
      %2119 = vmatprep.subr.bf16.mxu0 %v2013
      %2120 = vmatpush1.bf16.msra.mxu0 %v2012
      %2121 = vmatprep.subr.bf16.mxu0 %v2017
      %2122 = vmatpush1.bf16.msra.mxu0 %v2016
      %2123 = vmatprep.subr.bf16.mxu0 %v2021
      %2124 = vmatpush1.bf16.msra.mxu0 %v2020
      %2125 = vmatprep.subr.bf16.mxu0 %v2025
      %2126 = vmatpush1.bf16.msra.mxu0 %v2024
      %2127 = vmatprep.subr.bf16.mxu0 %v2029
      %2128 = vmatpush1.bf16.msra.mxu0 %v2028
      %2129 = vmatprep.subr.bf16.mxu0 0
      %2130 = vmatpush1.bf16.msra.mxu0 0
      %2131 = vmatprep.subr.bf16.mxu0 0
      %2132 = vmatpush1.bf16.msra.mxu0 0
      %2133 = vmatprep.subr.bf16.mxu0 0
      %2134 = vmatpush1.bf16.msra.mxu0 0
      %2135 = vmatprep.subr.bf16.mxu0 0
      %2136 = vmatpush1.bf16.msra.mxu0 0
      %2137 = vmatprep.subr.bf16.mxu0 0
      %2138 = vmatpush1.bf16.msra.mxu0 0
      %2139 = vmatprep.subr.bf16.mxu0 0
      %2140 = vmatpush1.bf16.msra.mxu0 0
      %2141 = vmatprep.subr.bf16.mxu0 0
      %2142 = vmatpush1.bf16.msra.mxu0 0
      %2143 = vmatprep.subr.bf16.mxu0 0
      %2144 = vmatpush1.bf16.msra.mxu0 0
      %2145 = vmatprep.mubr.bf16.mxu0 0
      %2146 = vmatmul.mubr.bf16.gmra.mrb[0].mxu0 %v1829
      %v2147 = vpop.f32.mrb[0].mxu0
      %v2148 = vadd.f32 %v1897, %v2147
      %v2149 = vpop.f32.mrb[0].mxu0
      %v2150 = vadd.f32 %v1901, %v2149
      %v2151 = vpop.f32.mrb[0].mxu0
      %v2152 = vadd.f32 %v1897, %v2151
      %v2153 = vpop.f32.mrb[0].mxu0
      %v2154 = vadd.f32 %v1901, %v2153
      %2155 = vmatprep.mubr.bf16.mxu0 0
      %2156 = vmatmul.mubr.bf16.gmra.mrb[0].mxu0 %v1830
      %v2157 = vpop.f32.mrb[0].mxu0
      %v2158 = vadd.f32 %v1897, %v2157
      %v2159 = vpop.f32.mrb[0].mxu0
      %v2160 = vadd.f32 %v1901, %v2159
      %v2161 = vpop.f32.mrb[0].mxu0
      %v2162 = vpop.f32.mrb[0].mxu0
      %2163 = vdwg.mxu0
      %v2164 = vmul.f32 %v2097, %v2097
      %v2165 = vmul.f32 %v2099, %v2099
      %v2166 = vmul.f32 %v2148, %v2148
      %v2167 = vmul.f32 %v2150, %v2150
      %v2168 = vmul.f32 %v2101, %v2101
      %v2169 = vmul.f32 %v2103, %v2103
      %v2170 = vmul.f32 %v2152, %v2152
      %v2171 = vmul.f32 %v2154, %v2154
      %v2172 = vmul.f32 %v2107, %v2107
      %v2173 = vmul.f32 %v2109, %v2109
      %v2174 = vmul.f32 %v2158, %v2158
      %v2175 = vmul.f32 %v2160, %v2160
      %v2176 = vmul.f32 %v2097, %v2164
      %v2177 = vmul.f32 %v2099, %v2165
      %v2178 = vmul.f32 %v2148, %v2166
      %v2179 = vmul.f32 %v2150, %v2167
      %v2180 = vmul.f32 %v2101, %v2168
      %v2181 = vmul.f32 %v2103, %v2169
      %v2182 = vmul.f32 %v2152, %v2170
      %v2183 = vmul.f32 %v2154, %v2171
      %v2184 = vmul.f32 %v2107, %v2172
      %v2185 = vmul.f32 %v2109, %v2173
      %v2186 = vmul.f32 %v2158, %v2174
      %v2187 = vmul.f32 %v2160, %v2175
      %v2188 = vmul.f32 %v2176, 0.044715
      %v2189 = vmul.f32 %v2177, 0.044715
      %v2190 = vmul.f32 %v2178, 0.044715
      %v2191 = vmul.f32 %v2179, 0.044715
      %v2192 = vmul.f32 %v2180, 0.044715
      %v2193 = vmul.f32 %v2181, 0.044715
      %v2194 = vmul.f32 %v2182, 0.044715
      %v2195 = vmul.f32 %v2183, 0.044715
      %v2196 = vmul.f32 %v2184, 0.044715
      %v2197 = vmul.f32 %v2185, 0.044715
      %v2198 = vmul.f32 %v2186, 0.044715
      %v2199 = vmul.f32 %v2187, 0.044715
      %v2200 = vadd.f32 %v2097, %v2188
      %v2201 = vadd.f32 %v2099, %v2189
      %v2202 = vadd.f32 %v2148, %v2190
      %v2203 = vadd.f32 %v2150, %v2191
      %v2204 = vadd.f32 %v2101, %v2192
      %v2205 = vadd.f32 %v2103, %v2193
      %v2206 = vadd.f32 %v2152, %v2194
      %v2207 = vadd.f32 %v2154, %v2195
      %v2208 = vadd.f32 %v2107, %v2196
      %v2209 = vadd.f32 %v2109, %v2197
      %v2210 = vadd.f32 %v2158, %v2198
      %v2211 = vadd.f32 %v2160, %v2199
      %v2212 = vmul.f32 %v2200, 0.7978846
      %v2213 = vmul.f32 %v2201, 0.7978846
      %v2214 = vmul.f32 %v2202, 0.7978846
      %v2215 = vmul.f32 %v2203, 0.7978846
      %v2216 = vmul.f32 %v2204, 0.7978846
      %v2217 = vmul.f32 %v2205, 0.7978846
      %v2218 = vmul.f32 %v2206, 0.7978846
      %v2219 = vmul.f32 %v2207, 0.7978846
      %v2220 = vmul.f32 %v2208, 0.7978846
      %v2221 = vmul.f32 %v2209, 0.7978846
      %v2222 = vmul.f32 %v2210, 0.7978846
      %v2223 = vmul.f32 %v2211, 0.7978846
      %v2224 = vtanh.pop %v2212
      %v2225 = vtanh.pop %v2213
      %v2226 = vtanh.pop %v2214
      %v2227 = vtanh.pop %v2215
      %v2228 = vtanh.pop %v2216
      %v2229 = vtanh.pop %v2217
      %v2230 = vtanh.pop %v2218
      %v2231 = vtanh.pop %v2219
      %v2232 = vtanh.pop %v2220
      %v2233 = vtanh.pop %v2221
      %v2234 = vtanh.pop %v2222
      %v2235 = vtanh.pop %v2223
      %v2236 = vadd.f32 %v2224, 1.0
      %v2237 = vadd.f32 %v2225, 1.0
      %v2238 = vadd.f32 %v2226, 1.0
      %v2239 = vadd.f32 %v2227, 1.0
      %v2240 = vadd.f32 %v2228, 1.0
      %v2241 = vadd.f32 %v2229, 1.0
      %v2242 = vadd.f32 %v2230, 1.0
      %v2243 = vadd.f32 %v2231, 1.0
      %v2244 = vadd.f32 %v2232, 1.0
      %v2245 = vadd.f32 %v2233, 1.0
      %v2246 = vadd.f32 %v2234, 1.0
      %v2247 = vadd.f32 %v2235, 1.0
      %v2248 = vmul.f32 %v2236, 0.5
      %v2249 = vmul.f32 %v2237, 0.5
      %v2250 = vmul.f32 %v2238, 0.5
      %v2251 = vmul.f32 %v2239, 0.5
      %v2252 = vmul.f32 %v2240, 0.5
      %v2253 = vmul.f32 %v2241, 0.5
      %v2254 = vmul.f32 %v2242, 0.5
      %v2255 = vmul.f32 %v2243, 0.5
      %v2256 = vmul.f32 %v2244, 0.5
      %v2257 = vmul.f32 %v2245, 0.5
      %v2258 = vmul.f32 %v2246, 0.5
      %v2259 = vmul.f32 %v2247, 0.5
      %v2260 = vmul.f32 %v2097, %v2248
      %v2261 = vmul.f32 %v2099, %v2249
      %v2262 = vmul.f32 %v2148, %v2250
      %v2263 = vmul.f32 %v2150, %v2251
      %v2264 = vmul.f32 %v2101, %v2252
      %v2265 = vmul.f32 %v2103, %v2253
      %v2266 = vmul.f32 %v2152, %v2254
      %v2267 = vmul.f32 %v2154, %v2255
      %v2268 = vmul.f32 %v2107, %v2256
      %v2269 = vmul.f32 %v2109, %v2257
      %v2270 = vmul.f32 %v2158, %v2258
      %v2271 = vmul.f32 %v2160, %v2259
      %v2272 = vpack.c.bf16 %v2264, %v2260
      %v2273 = vpack.c.bf16 %v2265, %v2261
      %v2274 = vpack.c.bf16 %v2266, %v2262
      %v2275 = vpack.c.bf16 %v2267, %v2263
      %v2276 = vpack.c.bf16 %v2268, %v2268
      %v2277 = vpack.c.bf16 %v2269, %v2269
      %v2278 = vpack.c.bf16 %v2270, %v2270
      %v2279 = vpack.c.bf16 %v2271, %v2271
      %v2280 = vld [vmem:[%s11] sm:$0xf]
      %v2281 = vld [vmem:[%s11 + $0x4] sm:$0xf]
      %v2282 = vld [vmem:[%s11 + $0x8] sm:$0xf]
      %v2283 = vld [vmem:[%s11 + $0xc] sm:$0xf]
      %v2284 = vld [vmem:[%s11 + $0x10] sm:$0xf]
      %v2285 = vld [vmem:[%s11 + $0x14] sm:$0xf]
      %v2286 = vld [vmem:[%s11 + $0x18] sm:$0xf]
      %v2287 = vld [vmem:[%s11 + $0x1c] sm:$0xf]
      %v2288 = vld [vmem:[%s11 + $0x20] sm:$0xf]
      %v2289 = vld [vmem:[%s11 + $0x24] sm:$0xf]
      %v2290 = vld [vmem:[%s11 + $0x28] sm:$0xf]
      %v2291 = vld [vmem:[%s11 + $0x2c] sm:$0xf]
      %v2292 = vld [vmem:[%s11 + $0x30] sm:$0xf]
      %v2293 = vld [vmem:[%s11 + $0x34] sm:$0xf]
      %v2294 = vld [vmem:[%s11 + $0x38] sm:$0xf]
      %v2295 = vld [vmem:[%s11 + $0x3c] sm:$0xf]
      %v2296 = vld [vmem:[%s11 + $0x40] sm:$0xf]
      %v2297 = vld [vmem:[%s11 + $0x44] sm:$0xf]
      %v2298 = vld [vmem:[%s11 + $0x48] sm:$0xf]
      %v2299 = vld [vmem:[%s11 + $0x4c] sm:$0xf]
      %v2300 = vld [vmem:[%s11 + $0x50] sm:$0xf]
      %v2301 = vld [vmem:[%s11 + $0x54] sm:$0xf]
      %v2302 = vld [vmem:[%s11 + $0x58] sm:$0xf]
      %v2303 = vld [vmem:[%s11 + $0x5c] sm:$0xf]
      %v2304 = vld [vmem:[%s11 + $0x60] sm:$0xf]
      %v2305 = vld [vmem:[%s11 + $0x64] sm:$0xf]
      %v2306 = vld [vmem:[%s11 + $0x68] sm:$0xf]
      %v2307 = vld [vmem:[%s11 + $0x6c] sm:$0xf]
      %v2308 = vld [vmem:[%s11 + $0x70] sm:$0xf]
      %v2309 = vld [vmem:[%s11 + $0x74] sm:$0xf]
      %v2310 = vld [vmem:[%s11 + $0x78] sm:$0xf]
      %v2311 = vld [vmem:[%s11 + $0x7c] sm:$0xf]
      %v2312 = vld [vmem:[%s11 + $0x80] sm:$0xf]
      %v2313 = vld [vmem:[%s11 + $0x84] sm:$0xf]
      %v2314 = vld [vmem:[%s11 + $0x88] sm:$0xf]
      %v2315 = vld [vmem:[%s11 + $0x8c] sm:$0xf]
      %v2316 = vld [vmem:[%s11 + $0x90] sm:$0xf]
      %v2317 = vld [vmem:[%s11 + $0x94] sm:$0xf]
      %v2318 = vld [vmem:[%s11 + $0x98] sm:$0xf]
      %v2319 = vld [vmem:[%s11 + $0x9c] sm:$0xf]
      %v2320 = vld [vmem:[%s11 + $0xa0] sm:$0xf]
      %v2321 = vld [vmem:[%s11 + $0xa4] sm:$0xf]
      %v2322 = vld [vmem:[%s11 + $0xa8] sm:$0xf]
      %v2323 = vld [vmem:[%s11 + $0xac] sm:$0xf]
      %v2324 = vld [vmem:[%s11 + $0xb0] sm:$0xf]
      %v2325 = vld [vmem:[%s11 + $0xb4] sm:$0xf]
      %v2326 = vld [vmem:[%s11 + $0xb8] sm:$0xf]
      %v2327 = vld [vmem:[%s11 + $0xbc] sm:$0xf]
      %v2328 = vld [vmem:[%s11 + $0xc0] sm:$0xf]
      %v2329 = vld [vmem:[%s11 + $0xc4] sm:$0xf]
      %v2330 = vld [vmem:[%s11 + $0xc8] sm:$0xf]
      %v2331 = vld [vmem:[%s11 + $0xcc] sm:$0xf]
      %v2332 = vld [vmem:[%s11 + $0xd0] sm:$0xf]
      %v2333 = vld [vmem:[%s11 + $0xd4] sm:$0xf]
      %v2334 = vld [vmem:[%s11 + $0xd8] sm:$0xf]
      %v2335 = vld [vmem:[%s11 + $0xdc] sm:$0xf]
      %v2336 = vld [vmem:[%s11 + $0xe0] sm:$0xf]
      %v2337 = vld [vmem:[%s11 + $0xe4] sm:$0xf]
      %v2338 = vld [vmem:[%s11 + $0xe8] sm:$0xf]
      %v2339 = vld [vmem:[%s11 + $0xec] sm:$0xf]
      %v2340 = vld [vmem:[%s11 + $0xf0] sm:$0xf]
      %v2341 = vld [vmem:[%s11 + $0xf4] sm:$0xf]
      %v2342 = vld [vmem:[%s11 + $0xf8] sm:$0xf]
      %v2343 = vld [vmem:[%s11 + $0xfc] sm:$0xf]
      %v2344 = vld [vmem:[%s12] sm:$0x1]
      %v2345 = vunpack.c.l.bf16 %v2344
      %v2346 = vlaneseq
      %v2347 = vshrl.u32 %v2346, 7
      %v2348 = vsub.s32 0, %v2347
      %v2349 = vrot.slane %v2345, %v2348
      %v2414 = vunpack.c.l.b16 %v2280
      %v2415 = vunpack.c.l.b16 %v2281
      %v2416 = vunpack.c.l.b16 %v2282
      %v2417 = vunpack.c.l.b16 %v2283
      %v2418 = vunpack.c.l.b16 %v2284
      %v2419 = vunpack.c.l.b16 %v2285
      %v2420 = vunpack.c.l.b16 %v2286
      %v2421 = vunpack.c.l.b16 %v2287
      %v2422 = vunpack.c.l.b16 %v2288
      %v2423 = vunpack.c.l.b16 %v2289
      %v2424 = vunpack.c.l.b16 %v2290
      %v2425 = vunpack.c.l.b16 %v2291
      %v2426 = vunpack.c.l.b16 %v2292
      %v2427 = vunpack.c.l.b16 %v2293
      %v2428 = vunpack.c.l.b16 %v2294
      %v2429 = vunpack.c.l.b16 %v2295
      %v2430 = vunpack.c.l.b16 %v2296
      %v2431 = vunpack.c.l.b16 %v2297
      %v2432 = vunpack.c.l.b16 %v2298
      %v2433 = vunpack.c.l.b16 %v2299
      %v2434 = vunpack.c.l.b16 %v2300
      %v2435 = vunpack.c.l.b16 %v2301
      %v2436 = vunpack.c.l.b16 %v2302
      %v2437 = vunpack.c.l.b16 %v2303
      %v2438 = vunpack.c.l.b16 %v2304
      %v2439 = vunpack.c.l.b16 %v2305
      %v2440 = vunpack.c.l.b16 %v2306
      %v2441 = vunpack.c.l.b16 %v2307
      %v2442 = vunpack.c.l.b16 %v2308
      %v2443 = vunpack.c.l.b16 %v2309
      %v2444 = vunpack.c.l.b16 %v2310
      %v2445 = vunpack.c.l.b16 %v2311
      %v2446 = vunpack.c.l.b16 %v2312
      %v2447 = vunpack.c.l.b16 %v2313
      %v2448 = vunpack.c.l.b16 %v2314
      %v2449 = vunpack.c.l.b16 %v2315
      %v2450 = vunpack.c.l.b16 %v2316
      %v2451 = vunpack.c.l.b16 %v2317
      %v2452 = vunpack.c.l.b16 %v2318
      %v2453 = vunpack.c.l.b16 %v2319
      %v2454 = vunpack.c.l.b16 %v2320
      %v2455 = vunpack.c.l.b16 %v2321
      %v2456 = vunpack.c.l.b16 %v2322
      %v2457 = vunpack.c.l.b16 %v2323
      %v2458 = vunpack.c.l.b16 %v2324
      %v2459 = vunpack.c.l.b16 %v2325
      %v2460 = vunpack.c.l.b16 %v2326
      %v2461 = vunpack.c.l.b16 %v2327
      %v2462 = vunpack.c.l.b16 %v2328
      %v2463 = vunpack.c.l.b16 %v2329
      %v2464 = vunpack.c.l.b16 %v2330
      %v2465 = vunpack.c.l.b16 %v2331
      %v2466 = vunpack.c.l.b16 %v2332
      %v2467 = vunpack.c.l.b16 %v2333
      %v2468 = vunpack.c.l.b16 %v2334
      %v2469 = vunpack.c.l.b16 %v2335
      %v2470 = vunpack.c.l.b16 %v2336
      %v2471 = vunpack.c.l.b16 %v2337
      %v2472 = vunpack.c.l.b16 %v2338
      %v2473 = vunpack.c.l.b16 %v2339
      %v2474 = vunpack.c.l.b16 %v2340
      %v2475 = vunpack.c.l.b16 %v2341
      %v2476 = vunpack.c.l.b16 %v2342
      %v2477 = vunpack.c.l.b16 %v2343
      %v2478 = vpack.c.b16 %v2415, %v2414
      %v2479 = vpack.c.b16 %v2417, %v2416
      %v2480 = vpack.c.b16 %v2419, %v2418
      %v2481 = vpack.c.b16 %v2421, %v2420
      %v2482 = vpack.c.b16 %v2423, %v2422
      %v2483 = vpack.c.b16 %v2425, %v2424
      %v2484 = vpack.c.b16 %v2427, %v2426
      %v2485 = vpack.c.b16 %v2429, %v2428
      %v2486 = vpack.c.b16 %v2431, %v2430
      %v2487 = vpack.c.b16 %v2433, %v2432
      %v2488 = vpack.c.b16 %v2435, %v2434
      %v2489 = vpack.c.b16 %v2437, %v2436
      %v2490 = vpack.c.b16 %v2439, %v2438
      %v2491 = vpack.c.b16 %v2441, %v2440
      %v2492 = vpack.c.b16 %v2443, %v2442
      %v2493 = vpack.c.b16 %v2445, %v2444
      %v2494 = vpack.c.b16 %v2447, %v2446
      %v2495 = vpack.c.b16 %v2449, %v2448
      %v2496 = vpack.c.b16 %v2451, %v2450
      %v2497 = vpack.c.b16 %v2453, %v2452
      %v2498 = vpack.c.b16 %v2455, %v2454
      %v2499 = vpack.c.b16 %v2457, %v2456
      %v2500 = vpack.c.b16 %v2459, %v2458
      %v2501 = vpack.c.b16 %v2461, %v2460
      %v2502 = vpack.c.b16 %v2463, %v2462
      %v2503 = vpack.c.b16 %v2465, %v2464
      %v2504 = vpack.c.b16 %v2467, %v2466
      %v2505 = vpack.c.b16 %v2469, %v2468
      %v2506 = vpack.c.b16 %v2471, %v2470
      %v2507 = vpack.c.b16 %v2473, %v2472
      %v2508 = vpack.c.b16 %v2475, %v2474
      %v2509 = vpack.c.b16 %v2477, %v2476
      %2542 = vmatprep.subr.bf16.mxu0 0
      %2543 = vmatpush1.bf16.msra.mxu0 %v2478
      %2544 = vmatprep.subr.bf16.mxu0 0
      %2545 = vmatpush1.bf16.msra.mxu0 %v2479
      %2546 = vmatprep.subr.bf16.mxu0 0
      %2547 = vmatpush1.bf16.msra.mxu0 %v2480
      %2548 = vmatprep.subr.bf16.mxu0 0
      %2549 = vmatpush1.bf16.msra.mxu0 %v2481
      %2550 = vmatprep.subr.bf16.mxu0 0
      %2551 = vmatpush1.bf16.msra.mxu0 %v2482
      %2552 = vmatprep.subr.bf16.mxu0 0
      %2553 = vmatpush1.bf16.msra.mxu0 %v2483
      %2554 = vmatprep.subr.bf16.mxu0 0
      %2555 = vmatpush1.bf16.msra.mxu0 %v2484
      %2556 = vmatprep.subr.bf16.mxu0 0
      %2557 = vmatpush1.bf16.msra.mxu0 %v2485
      %2558 = vmatprep.subr.bf16.mxu0 0
      %2559 = vmatpush1.bf16.msra.mxu0 %v2486
      %2560 = vmatprep.subr.bf16.mxu0 0
      %2561 = vmatpush1.bf16.msra.mxu0 %v2487
      %2562 = vmatprep.subr.bf16.mxu0 0
      %2563 = vmatpush1.bf16.msra.mxu0 %v2488
      %2564 = vmatprep.subr.bf16.mxu0 0
      %2565 = vmatpush1.bf16.msra.mxu0 %v2489
      %2566 = vmatprep.subr.bf16.mxu0 0
      %2567 = vmatpush1.bf16.msra.mxu0 %v2490
      %2568 = vmatprep.subr.bf16.mxu0 0
      %2569 = vmatpush1.bf16.msra.mxu0 %v2491
      %2570 = vmatprep.subr.bf16.mxu0 0
      %2571 = vmatpush1.bf16.msra.mxu0 %v2492
      %2572 = vmatprep.subr.bf16.mxu0 0
      %2573 = vmatpush1.bf16.msra.mxu0 %v2493
      %2574 = vmatprep.mubr.bf16.mxu0 %v2273
      %2575 = vmatmul.mubr.bf16.gmra.mrb[0].mxu0 %v2272
      %v2576 = vpop.f32.mrb[0].mxu0
      %v2577 = vadd.f32 %v2349, %v2576
      %v2578 = vpop.f32.mrb[0].mxu0
      %v2579 = vpop.f32.mrb[0].mxu0
      %v2580 = vadd.f32 %v2349, %v2579
      %v2581 = vpop.f32.mrb[0].mxu0
      %2582 = vmatprep.mubr.bf16.mxu0 %v2277
      %2583 = vmatmul.mubr.bf16.gmra.mrb[0].mxu0 %v2276
      %v2584 = vpop.f32.mrb[0].mxu0
      %v2585 = vadd.f32 %v2349, %v2584
      %v2586 = vpop.f32.mrb[0].mxu0
      %v2587 = vpop.f32.mrb[0].mxu0
      %v2588 = vpop.f32.mrb[0].mxu0
      %2589 = vdwg.mxu0
      %2590 = vmatprep.subr.bf16.mxu0 0
      %2591 = vmatpush1.bf16.msra.mxu0 %v2494
      %2592 = vmatprep.subr.bf16.mxu0 0
      %2593 = vmatpush1.bf16.msra.mxu0 %v2495
      %2594 = vmatprep.subr.bf16.mxu0 0
      %2595 = vmatpush1.bf16.msra.mxu0 %v2496
      %2596 = vmatprep.subr.bf16.mxu0 0
      %2597 = vmatpush1.bf16.msra.mxu0 %v2497
      %2598 = vmatprep.subr.bf16.mxu0 0
      %2599 = vmatpush1.bf16.msra.mxu0 %v2498
      %2600 = vmatprep.subr.bf16.mxu0 0
      %2601 = vmatpush1.bf16.msra.mxu0 %v2499
      %2602 = vmatprep.subr.bf16.mxu0 0
      %2603 = vmatpush1.bf16.msra.mxu0 %v2500
      %2604 = vmatprep.subr.bf16.mxu0 0
      %2605 = vmatpush1.bf16.msra.mxu0 %v2501
      %2606 = vmatprep.subr.bf16.mxu0 0
      %2607 = vmatpush1.bf16.msra.mxu0 %v2502
      %2608 = vmatprep.subr.bf16.mxu0 0
      %2609 = vmatpush1.bf16.msra.mxu0 %v2503
      %2610 = vmatprep.subr.bf16.mxu0 0
      %2611 = vmatpush1.bf16.msra.mxu0 %v2504
      %2612 = vmatprep.subr.bf16.mxu0 0
      %2613 = vmatpush1.bf16.msra.mxu0 %v2505
      %2614 = vmatprep.subr.bf16.mxu0 0
      %2615 = vmatpush1.bf16.msra.mxu0 %v2506
      %2616 = vmatprep.subr.bf16.mxu0 0
      %2617 = vmatpush1.bf16.msra.mxu0 %v2507
      %2618 = vmatprep.subr.bf16.mxu0 0
      %2619 = vmatpush1.bf16.msra.mxu0 %v2508
      %2620 = vmatprep.subr.bf16.mxu0 0
      %2621 = vmatpush1.bf16.msra.mxu0 %v2509
      %2622 = vmatprep.mubr.bf16.mxu0 %v2275
      %2623 = vmatmul.mubr.bf16.gmra.mrb[0].mxu0 %v2274
      %v2624 = vpop.f32.mrb[0].mxu0
      %v2625 = vadd.f32 %v2577, %v2624
      %v2626 = vpop.f32.mrb[0].mxu0
      %v2627 = vpop.f32.mrb[0].mxu0
      %v2628 = vadd.f32 %v2580, %v2627
      %v2629 = vpop.f32.mrb[0].mxu0
      %2630 = vmatprep.mubr.bf16.mxu0 %v2279
      %2631 = vmatmul.mubr.bf16.gmra.mrb[0].mxu0 %v2278
      %v2632 = vpop.f32.mrb[0].mxu0
      %v2633 = vadd.f32 %v2585, %v2632
      %v2634 = vpop.f32.mrb[0].mxu0
      %v2635 = vpop.f32.mrb[0].mxu0
      %v2636 = vpop.f32.mrb[0].mxu0
      %2637 = vdwg.mxu0
      %v2638 = vadd.f32 %v1773, %v2625
      %v2639 = vadd.f32 %v1774, %v2628
      %v2640 = vadd.f32 %v1775, %v2633
      %v2641 = vpack.c.bf16 %v2639, %v2638
      %v2642 = vpack.c.bf16 %v2640, %v2640
      %v2645 = vunpack.c.l.b16 %v2641
      %v2646 = vunpack.c.h.b16 %v2641
      %v2647 = vunpack.c.l.b16 %v2642
      %v2648 = vpack.c.b16 %v2645, %v2645
      %v2649 = vpack.c.b16 %v2646, %v2646
      %v2650 = vpack.c.b16 %v2647, %v2647
      %2654 = vst [vmem:[%s440] sm:$0xf] %v2648
      %2655 = vst [vmem:[%s440 + $0x4] sm:$0xf] %v2649
      %vm2656 = vcmask 1040384
      %vm2657 = vsmask.f32 256
      %vm2658 = vmand %vm2656, %vm2657
      %v2659 = vld [vmem:[%s440 + $0x8] sm:$0x1]
      %v2660 = vsel %vm2658, %v2650, %v2659
      %2661 = vst [vmem:[%s440 + $0x8] sm:$0x1] %v2660
      %p2662 = scmp.lt.s32.totalorder %s24, 1
      %s2663 = scalar_select %p2662, %s24, 1
      %s2664 = smul.addr %s2663, 3
      %s2665 = smul.addr %s2664, 4
      %s2666 = scalar_lea.vmem %s13, %s2665
      // Predicated region
      $region73: #{dino_projector_forward.5} parent=71 // pred_check
        %p2667 = pneg %p320
      $region74: #{dino_projector_forward.5} parent=71 // pred_check_branch
        %2669 = sbr.rel (%p2667) target = $region76
      $region75: #{dino_projector_forward.5} parent=71 // pred_region
        _
      $region76: #{dino_projector_forward.5} parent=71 // pred_fallthru
        _
    $region72: #{dino_projector_forward.5} parent=5 // pred_fallthru
      _
    %p2670 = scmp.le.s32.totalorder 2, %s19
    // Predicated region
    $region77: #{dino_projector_forward.5} parent=5 // pred_check
      %p2671 = pneg %p2670
    $region78: #{dino_projector_forward.5} parent=5 // pred_check_branch
      %2673 = sbr.rel (%p2671) target = $region80
    $region79: #{dino_projector_forward.5} parent=5 // pred_region
      %s2674 = ssub.s32 %s19, 2
      // Predicated region
      $region81: #{dino_projector_forward.5} parent=79 // pred_check
        %p2675 = pneg %p326
      $region82: #{dino_projector_forward.5} parent=79 // pred_check_branch
        %2677 = sbr.rel (%p2675) target = $region84
      $region83: #{dino_projector_forward.5} parent=79 // pred_region
        %p2678 = scmp.lt.s32.totalorder %s25, 1
        %s2679 = scalar_select %p2678, %s25, 1
        %s2680 = smul.addr %s2679, 3
        %s2681 = smul.addr %s2680, 4
        %s2682 = scalar_lea.vmem %s13, %s2681
      $region84: #{dino_projector_forward.5} parent=79 // pred_fallthru
        _
    $region80: #{dino_projector_forward.5} parent=5 // pred_fallthru
      _
  $region6: #{dino_projector_forward.5} parent=0 // loop_footer
    %s23 = sadd.s32 1, %s19
  $region7: #{dino_projector_forward.5} parent=0 // loop_footer_branch
    %18 = sbr.rel target = $region3
  $region8: #{dino_projector_forward.5} parent=0 // loop_exit
    _

</llo_original>
